<compile_context>
chip_gen: v7x
topology: tpu7x:2x2x1
jax: 0.10.0
libtpu: 0.0.40
codegen_flags: <defaults>
</compile_context>

<pallas_src>
import math

import jax
import jax.numpy as jnp
from jax import lax
from jax.experimental import pallas as pl
from jax.experimental.pallas import tpu as pltpu


# ----------------------------------------------------------------------------
# Static LeNet-5 geometry (28x28 inputs)
# ----------------------------------------------------------------------------
KH = KW = 5
W1P = 32                 # conv1 padded image row stride (28 + 2*2)
L1 = 33 * W1P            # flat padded image length (+1 slack row): 1056 >= 896+132
LEN1 = 28 * W1P          # conv1 flat output length (28 rows x stride 32) = 896
C1 = 6                   # conv1 out channels
K1 = 32                  # conv1 im2col K, padded 25 -> 32 for aligned transpose

W2P = 16                 # conv2 input row stride (14 real cols + 2 zero cols)
L2 = 15 * W2P            # conv2 input scratch rows (14 real + 1 slack): 240 >= 160+68
LEN2 = 10 * W2P          # conv2 flat output length = 160
C2 = 16                  # conv2 out channels
K2 = KH * KW * C1        # conv2 im2col K = 150


# ----------------------------------------------------------------------------
# Kernel A: conv1 + tanh + pool + conv2 + tanh + pool   (one image per step)
# ----------------------------------------------------------------------------
def _conv_stack_kernel(x_ref, w1_ref, b1_ref, w2_ref, b2_ref, o_ref,
                       y1_ref, x2_ref, y2_ref):
    # ---- conv1: build (K1, LEN1) patch matrix from 25 contiguous flat slices
    rows = [x_ref[0, :, d:d + LEN1]                       # each (1, LEN1)
            for d in (i * W1P + j for i in range(KH) for j in range(KW))]
    rows.append(jnp.zeros((K1 - KH * KW, LEN1), jnp.float32))   # pad K to 32
    p1t = jnp.concatenate(rows, axis=0)                   # (32, LEN1)
    y1 = jnp.dot(p1t.T, w1_ref[...], preferred_element_type=jnp.float32)
    y1 = jnp.tanh(y1 + b1_ref[...])                       # (LEN1, 6)
    y1_ref[...] = y1

    # ---- maxpool 2x2 (14x14 out) -> write rows of the conv2 input scratch
    #      laid out flat with row stride W2P (padded cols / rows stay zero)
    x2_ref[...] = jnp.zeros_like(x2_ref)
    for ph in range(14):
        blks = [y1_ref[pl.ds((2 * ph + dh) * W1P + dw, 14, stride=2), :]
                for dh in (0, 1) for dw in (0, 1)]        # each (14, 6)
        x2_ref[ph * W2P:ph * W2P + 14, :] = jnp.maximum(
            jnp.maximum(blks[0], blks[1]), jnp.maximum(blks[2], blks[3]))

    # ---- conv2: lane-concat 25 shifted (LEN2, 6) slices -> one MXU matmul
    cols = [x2_ref[d:d + LEN2, :]
            for d in (i * W2P + j for i in range(KH) for j in range(KW))]
    p2 = jnp.concatenate(cols, axis=1)                    # (160, 150)
    y2 = jnp.dot(p2, w2_ref[...], preferred_element_type=jnp.float32)
    y2 = jnp.tanh(y2 + b2_ref[...])                       # (160, 16)
    y2_ref[...] = y2

    # ---- maxpool 2x2 (5x5 out) -> write (ph, pw, co)-ordered feature tile
    for ph in range(5):
        blks = [y2_ref[pl.ds((2 * ph + dh) * W2P + dw, 5, stride=2), :]
                for dh in (0, 1) for dw in (0, 1)]        # each (5, 16)
        o_ref[0, ph * 5:ph * 5 + 5, :] = jnp.maximum(
            jnp.maximum(blks[0], blks[1]), jnp.maximum(blks[2], blks[3]))


def conv_features(xflat, w1, b1, w2, b2):
    """xflat: (N, 1, L1) padded flat images -> (N, 25, 16) pooled conv2 features."""
    N = xflat.shape[0]
    return pl.pallas_call(
        _conv_stack_kernel,
        out_shape=jax.ShapeDtypeStruct((N, 25, C2), jnp.float32),
        grid_spec=pltpu.PrefetchScalarGridSpec(
            num_scalar_prefetch=0,
            grid=(N,),
            in_specs=[
                pl.BlockSpec((1, 1, L1), lambda n: (n, 0, 0)),
                pl.BlockSpec((K1, C1), lambda n: (0, 0)),
                pl.BlockSpec((1, C1), lambda n: (0, 0)),
                pl.BlockSpec((K2, C2), lambda n: (0, 0)),
                pl.BlockSpec((1, C2), lambda n: (0, 0)),
            ],
            out_specs=pl.BlockSpec((1, 25, C2), lambda n: (n, 0, 0)),
            scratch_shapes=[
                pltpu.VMEM((LEN1, C1), jnp.float32),   # conv1 pre-pool
                pltpu.VMEM((L2, C1), jnp.float32),     # conv2 input (pooled conv1)
                pltpu.VMEM((LEN2, C2), jnp.float32),   # conv2 pre-pool
            ],
        ),
        compiler_params=pltpu.CompilerParams(
            dimension_semantics=("parallel",)),
    )(xflat, w1, b1, w2, b2)


# ----------------------------------------------------------------------------
# Kernel B: fc1 + tanh + fc2 + tanh + fc3  (whole batch, weights VMEM-resident)
# ----------------------------------------------------------------------------
def _fc_stack_kernel(x_ref, w1_ref, b1_ref, w2_ref, b2_ref, w3_ref, b3_ref,
                     o_ref):
    h = jnp.dot(x_ref[...], w1_ref[...], preferred_element_type=jnp.float32)
    h = jnp.tanh(h + b1_ref[...])
    h = jnp.dot(h, w2_ref[...], preferred_element_type=jnp.float32)
    h = jnp.tanh(h + b2_ref[...])
    h = jnp.dot(h, w3_ref[...], preferred_element_type=jnp.float32)
    o_ref[...] = h + b3_ref[...]


def fc_head(feats, w1, b1, w2, b2, w3, b3):
    N = feats.shape[0]
    vmem = pl.BlockSpec(memory_space=pltpu.MemorySpace.VMEM)
    return pl.pallas_call(
        _fc_stack_kernel,
        out_shape=jax.ShapeDtypeStruct((N, 10), jnp.float32),
        in_specs=[vmem] * 7,
        out_specs=vmem,
    )(feats, w1, b1, w2, b2, w3, b3)


# ----------------------------------------------------------------------------
# LeNet-5 forward (inference)
# ----------------------------------------------------------------------------
def lenet5_forward(prep, x):
    # x: (N, 1, 28, 28) f32
    N = x.shape[0]
    xp = jnp.pad(x, ((0, 0), (0, 0), (2, 2), (2, 2)))      # (N,1,32,32)
    xf = jnp.pad(xp.reshape(N, 1, W1P * W1P),
                 ((0, 0), (0, 0), (0, L1 - W1P * W1P)))    # (N,1,L1)
    feats = conv_features(xf, prep["w1"], prep["b1"],
                          prep["w2"], prep["b2"])          # (N,25,16)
    feats = feats.reshape(N, 25 * C2)                      # (N,400) (ph,pw,co) order
    return fc_head(feats, prep["f1"], prep["fb1"],
                   prep["f2"], prep["fb2"], prep["f3"], prep["fb3"])


# ----------------------------------------------------------------------------
# One-time weight re-layout (PyTorch formats -> kernel formats)
# ----------------------------------------------------------------------------
def prepare_params(params):
    w1 = params["conv1_w"].reshape(C1, KH * KW).T                     # (25, 6)
    w1 = jnp.concatenate([w1, jnp.zeros((K1 - KH * KW, C1), jnp.float32)], 0)
    w2 = params["conv2_w"].transpose(2, 3, 1, 0).reshape(K2, C2)      # rows (i,j,c)
    # fc1 columns permuted from PyTorch (co, ph, pw) flatten to our (ph, pw, co)
    f1 = params["fc1_w"].reshape(120, C2, 5, 5).transpose(0, 2, 3, 1)
    f1 = f1.reshape(120, 400).T                                       # (400, 120)
    return {
        "w1": w1, "b1": params["conv1_b"].reshape(1, C1),
        "w2": w2, "b2": params["conv2_b"].reshape(1, C2),
        "f1": f1, "fb1": params["fc1_b"].reshape(1, 120),
        "f2": params["fc2_w"].T, "fb2": params["fc2_b"].reshape(1, 84),
        "f3": params["fc3_w"].T, "fb3": params["fc3_b"].reshape(1, 10),
    }


# ----------------------------------------------------------------------------
# Pure-JAX reference (correctness check, uses original PyTorch-format params)
# ----------------------------------------------------------------------------
def reference_forward(params, x):
    dn = ("NCHW", "OIHW", "NCHW")
    y = lax.conv_general_dilated(x, params["conv1_w"], (1, 1),
                                 [(2, 2), (2, 2)], dimension_numbers=dn)
    y = jnp.tanh(y + params["conv1_b"][None, :, None, None])
    y = lax.reduce_window(y, -jnp.inf, lax.max, (1, 1, 2, 2), (1, 1, 2, 2), "VALID")
    y = lax.conv_general_dilated(y, params["conv2_w"], (1, 1),
                                 "VALID", dimension_numbers=dn)
    y = jnp.tanh(y + params["conv2_b"][None, :, None, None])
    y = lax.reduce_window(y, -jnp.inf, lax.max, (1, 1, 2, 2), (1, 1, 2, 2), "VALID")
    flat = y.reshape(y.shape[0], -1)
    h1 = jnp.tanh(flat @ params["fc1_w"].T + params["fc1_b"])
    h2 = jnp.tanh(h1 @ params["fc2_w"].T + params["fc2_b"])
    return h2 @ params["fc3_w"].T + params["fc3_b"]


# ----------------------------------------------------------------------------
# Deterministic parameter init (PyTorch-default-style uniform bounds)
# ----------------------------------------------------------------------------
def _init_conv(key, cout, cin, kh, kw):
    k1, k2 = jax.random.split(key)
    bound = 1.0 / math.sqrt(cin * kh * kw)
    w = jax.random.uniform(k1, (cout, cin, kh, kw), jnp.float32, -bound, bound)
    b = jax.random.uniform(k2, (cout,), jnp.float32, -bound, bound)
    return w, b


def _init_linear(key, fan_out, fan_in):
    k1, k2 = jax.random.split(key)
    bound = 1.0 / math.sqrt(fan_in)
    w = jax.random.uniform(k1, (fan_out, fan_in), jnp.float32, -bound, bound)
    b = jax.random.uniform(k2, (fan_out,), jnp.float32, -bound, bound)
    return w, b


def make_params(key):
    ks = jax.random.split(key, 5)
    p = {}
    p["conv1_w"], p["conv1_b"] = _init_conv(ks[0], 6, 1, 5, 5)
    p["conv2_w"], p["conv2_b"] = _init_conv(ks[1], 16, 6, 5, 5)
    p["fc1_w"], p["fc1_b"] = _init_linear(ks[2], 120, 16 * 5 * 5)
    p["fc2_w"], p["fc2_b"] = _init_linear(ks[3], 84, 120)
    p["fc3_w"], p["fc3_b"] = _init_linear(ks[4], 10, 84)
    return p


if __name__ == "__main__":
    root = jax.random.PRNGKey(0)
    k_params, k_x = jax.random.split(root)
    params = make_params(k_params)
    prep = prepare_params(params)   # one-time re-layout, outside the forward

    # LeNet-5 requires 28x28 inputs for the 16*5*5 flatten to hold; batch=2.
    x = jax.random.normal(k_x, (2, 1, 28, 28), jnp.float32)

    out = jax.block_until_ready(jax.jit(lenet5_forward)(prep, x))
    ref = jax.block_until_ready(jax.jit(reference_forward)(params, x))

    assert out.shape == (2, 10), out.shape
    assert bool(jnp.all(jnp.isfinite(out)))
    assert bool(jnp.allclose(out, ref, atol=2e-2, rtol=2e-2)), \
        float(jnp.max(jnp.abs(out - ref)))

    print("KERNEL_OK")
</pallas_src>

<mosaic_0001>
module attributes {stable_mosaic.version = 11 : i64} {
  func.func @_conv_stack_kernel(%arg0: i32, %arg1: memref<1x1x1056xf32, #tpu.memory_space<vmem>>, %arg2: memref<32x6xf32, #tpu.memory_space<vmem>>, %arg3: memref<1x6xf32, #tpu.memory_space<vmem>>, %arg4: memref<150x16xf32, #tpu.memory_space<vmem>>, %arg5: memref<1x16xf32, #tpu.memory_space<vmem>>, %arg6: memref<1x25x16xf32, #tpu.memory_space<vmem>>, %arg7: memref<896x6xf32, #tpu.memory_space<vmem>>, %arg8: memref<240x6xf32, #tpu.memory_space<vmem>>, %arg9: memref<160x16xf32, #tpu.memory_space<vmem>>) attributes {dimension_semantics = [#tpu.dimension_semantics<parallel>], iteration_bounds = array<i64: 2>, scalar_prefetch = 0 : i64, scratch_operands = 3 : i64, tpu.core_type = #tpu.core_type<tc>, window_params = [{transform_indices = @transform_0, window_bounds = array<i64: 1, 1, 1056>}, {pipeline_mode = #tpu.pipeline_mode<synchronous>, transform_indices = @transform_1, window_bounds = array<i64: 32, 6>}, {pipeline_mode = #tpu.pipeline_mode<synchronous>, transform_indices = @transform_2, window_bounds = array<i64: 1, 6>}, {pipeline_mode = #tpu.pipeline_mode<synchronous>, transform_indices = @transform_3, window_bounds = array<i64: 150, 16>}, {pipeline_mode = #tpu.pipeline_mode<synchronous>, transform_indices = @transform_4, window_bounds = array<i64: 1, 16>}, {transform_indices = @transform_5, window_bounds = array<i64: 1, 25, 16>}]} {
    %c0 = arith.constant 0 : index
    %c0_0 = arith.constant 0 : index
    %c0_1 = arith.constant 0 : index
    %0 = vector.load %arg1[%c0, %c0_0, %c0_1] : memref<1x1x1056xf32, #tpu.memory_space<vmem>>, vector<1x1x896xf32>
    %1 = vector.shape_cast %0 : vector<1x1x896xf32> to vector<1x896xf32>
    %c0_2 = arith.constant 0 : index
    %c0_3 = arith.constant 0 : index
    %c1 = arith.constant 1 : index
    %2 = vector.load %arg1[%c0_2, %c0_3, %c1] : memref<1x1x1056xf32, #tpu.memory_space<vmem>>, vector<1x1x896xf32>
    %3 = vector.shape_cast %2 : vector<1x1x896xf32> to vector<1x896xf32>
    %c0_4 = arith.constant 0 : index
    %c0_5 = arith.constant 0 : index
    %c2 = arith.constant 2 : index
    %4 = vector.load %arg1[%c0_4, %c0_5, %c2] : memref<1x1x1056xf32, #tpu.memory_space<vmem>>, vector<1x1x896xf32>
    %5 = vector.shape_cast %4 : vector<1x1x896xf32> to vector<1x896xf32>
    %c0_6 = arith.constant 0 : index
    %c0_7 = arith.constant 0 : index
    %c3 = arith.constant 3 : index
    %6 = vector.load %arg1[%c0_6, %c0_7, %c3] : memref<1x1x1056xf32, #tpu.memory_space<vmem>>, vector<1x1x896xf32>
    %7 = vector.shape_cast %6 : vector<1x1x896xf32> to vector<1x896xf32>
    %c0_8 = arith.constant 0 : index
    %c0_9 = arith.constant 0 : index
    %c4 = arith.constant 4 : index
    %8 = vector.load %arg1[%c0_8, %c0_9, %c4] : memref<1x1x1056xf32, #tpu.memory_space<vmem>>, vector<1x1x896xf32>
    %9 = vector.shape_cast %8 : vector<1x1x896xf32> to vector<1x896xf32>
    %c0_10 = arith.constant 0 : index
    %c0_11 = arith.constant 0 : index
    %c32 = arith.constant 32 : index
    %10 = vector.load %arg1[%c0_10, %c0_11, %c32] : memref<1x1x1056xf32, #tpu.memory_space<vmem>>, vector<1x1x896xf32>
    %11 = vector.shape_cast %10 : vector<1x1x896xf32> to vector<1x896xf32>
    %c0_12 = arith.constant 0 : index
    %c0_13 = arith.constant 0 : index
    %c33 = arith.constant 33 : index
    %12 = vector.load %arg1[%c0_12, %c0_13, %c33] : memref<1x1x1056xf32, #tpu.memory_space<vmem>>, vector<1x1x896xf32>
    %13 = vector.shape_cast %12 : vector<1x1x896xf32> to vector<1x896xf32>
    %c0_14 = arith.constant 0 : index
    %c0_15 = arith.constant 0 : index
    %c34 = arith.constant 34 : index
    %14 = vector.load %arg1[%c0_14, %c0_15, %c34] : memref<1x1x1056xf32, #tpu.memory_space<vmem>>, vector<1x1x896xf32>
    %15 = vector.shape_cast %14 : vector<1x1x896xf32> to vector<1x896xf32>
    %c0_16 = arith.constant 0 : index
    %c0_17 = arith.constant 0 : index
    %c35 = arith.constant 35 : index
    %16 = vector.load %arg1[%c0_16, %c0_17, %c35] : memref<1x1x1056xf32, #tpu.memory_space<vmem>>, vector<1x1x896xf32>
    %17 = vector.shape_cast %16 : vector<1x1x896xf32> to vector<1x896xf32>
    %c0_18 = arith.constant 0 : index
    %c0_19 = arith.constant 0 : index
    %c36 = arith.constant 36 : index
    %18 = vector.load %arg1[%c0_18, %c0_19, %c36] : memref<1x1x1056xf32, #tpu.memory_space<vmem>>, vector<1x1x896xf32>
    %19 = vector.shape_cast %18 : vector<1x1x896xf32> to vector<1x896xf32>
    %c0_20 = arith.constant 0 : index
    %c0_21 = arith.constant 0 : index
    %c64 = arith.constant 64 : index
    %20 = vector.load %arg1[%c0_20, %c0_21, %c64] : memref<1x1x1056xf32, #tpu.memory_space<vmem>>, vector<1x1x896xf32>
    %21 = vector.shape_cast %20 : vector<1x1x896xf32> to vector<1x896xf32>
    %c0_22 = arith.constant 0 : index
    %c0_23 = arith.constant 0 : index
    %c65 = arith.constant 65 : index
    %22 = vector.load %arg1[%c0_22, %c0_23, %c65] : memref<1x1x1056xf32, #tpu.memory_space<vmem>>, vector<1x1x896xf32>
    %23 = vector.shape_cast %22 : vector<1x1x896xf32> to vector<1x896xf32>
    %c0_24 = arith.constant 0 : index
    %c0_25 = arith.constant 0 : index
    %c66 = arith.constant 66 : index
    %24 = vector.load %arg1[%c0_24, %c0_25, %c66] : memref<1x1x1056xf32, #tpu.memory_space<vmem>>, vector<1x1x896xf32>
    %25 = vector.shape_cast %24 : vector<1x1x896xf32> to vector<1x896xf32>
    %c0_26 = arith.constant 0 : index
    %c0_27 = arith.constant 0 : index
    %c67 = arith.constant 67 : index
    %26 = vector.load %arg1[%c0_26, %c0_27, %c67] : memref<1x1x1056xf32, #tpu.memory_space<vmem>>, vector<1x1x896xf32>
    %27 = vector.shape_cast %26 : vector<1x1x896xf32> to vector<1x896xf32>
    %c0_28 = arith.constant 0 : index
    %c0_29 = arith.constant 0 : index
    %c68 = arith.constant 68 : index
    %28 = vector.load %arg1[%c0_28, %c0_29, %c68] : memref<1x1x1056xf32, #tpu.memory_space<vmem>>, vector<1x1x896xf32>
    %29 = vector.shape_cast %28 : vector<1x1x896xf32> to vector<1x896xf32>
    %c0_30 = arith.constant 0 : index
    %c0_31 = arith.constant 0 : index
    %c96 = arith.constant 96 : index
    %30 = vector.load %arg1[%c0_30, %c0_31, %c96] : memref<1x1x1056xf32, #tpu.memory_space<vmem>>, vector<1x1x896xf32>
    %31 = vector.shape_cast %30 : vector<1x1x896xf32> to vector<1x896xf32>
    %c0_32 = arith.constant 0 : index
    %c0_33 = arith.constant 0 : index
    %c97 = arith.constant 97 : index
    %32 = vector.load %arg1[%c0_32, %c0_33, %c97] : memref<1x1x1056xf32, #tpu.memory_space<vmem>>, vector<1x1x896xf32>
    %33 = vector.shape_cast %32 : vector<1x1x896xf32> to vector<1x896xf32>
    %c0_34 = arith.constant 0 : index
    %c0_35 = arith.constant 0 : index
    %c98 = arith.constant 98 : index
    %34 = vector.load %arg1[%c0_34, %c0_35, %c98] : memref<1x1x1056xf32, #tpu.memory_space<vmem>>, vector<1x1x896xf32>
    %35 = vector.shape_cast %34 : vector<1x1x896xf32> to vector<1x896xf32>
    %c0_36 = arith.constant 0 : index
    %c0_37 = arith.constant 0 : index
    %c99 = arith.constant 99 : index
    %36 = vector.load %arg1[%c0_36, %c0_37, %c99] : memref<1x1x1056xf32, #tpu.memory_space<vmem>>, vector<1x1x896xf32>
    %37 = vector.shape_cast %36 : vector<1x1x896xf32> to vector<1x896xf32>
    %c0_38 = arith.constant 0 : index
    %c0_39 = arith.constant 0 : index
    %c100 = arith.constant 100 : index
    %38 = vector.load %arg1[%c0_38, %c0_39, %c100] : memref<1x1x1056xf32, #tpu.memory_space<vmem>>, vector<1x1x896xf32>
    %39 = vector.shape_cast %38 : vector<1x1x896xf32> to vector<1x896xf32>
    %c0_40 = arith.constant 0 : index
    %c0_41 = arith.constant 0 : index
    %c128 = arith.constant 128 : index
    %40 = vector.load %arg1[%c0_40, %c0_41, %c128] : memref<1x1x1056xf32, #tpu.memory_space<vmem>>, vector<1x1x896xf32>
    %41 = vector.shape_cast %40 : vector<1x1x896xf32> to vector<1x896xf32>
    %c0_42 = arith.constant 0 : index
    %c0_43 = arith.constant 0 : index
    %c129 = arith.constant 129 : index
    %42 = vector.load %arg1[%c0_42, %c0_43, %c129] : memref<1x1x1056xf32, #tpu.memory_space<vmem>>, vector<1x1x896xf32>
    %43 = vector.shape_cast %42 : vector<1x1x896xf32> to vector<1x896xf32>
    %c0_44 = arith.constant 0 : index
    %c0_45 = arith.constant 0 : index
    %c130 = arith.constant 130 : index
    %44 = vector.load %arg1[%c0_44, %c0_45, %c130] : memref<1x1x1056xf32, #tpu.memory_space<vmem>>, vector<1x1x896xf32>
    %45 = vector.shape_cast %44 : vector<1x1x896xf32> to vector<1x896xf32>
    %c0_46 = arith.constant 0 : index
    %c0_47 = arith.constant 0 : index
    %c131 = arith.constant 131 : index
    %46 = vector.load %arg1[%c0_46, %c0_47, %c131] : memref<1x1x1056xf32, #tpu.memory_space<vmem>>, vector<1x1x896xf32>
    %47 = vector.shape_cast %46 : vector<1x1x896xf32> to vector<1x896xf32>
    %c0_48 = arith.constant 0 : index
    %c0_49 = arith.constant 0 : index
    %c132 = arith.constant 132 : index
    %48 = vector.load %arg1[%c0_48, %c0_49, %c132] : memref<1x1x1056xf32, #tpu.memory_space<vmem>>, vector<1x1x896xf32>
    %49 = vector.shape_cast %48 : vector<1x1x896xf32> to vector<1x896xf32>
    %cst = arith.constant 0.000000e+00 : f32
    %50 = vector.broadcast %cst : f32 to vector<7x896xf32>
    %51 = tpu.concatenate %1, %3, %5, %7, %9, %11, %13, %15, %17, %19, %21, %23, %25, %27, %29, %31 in 0 : vector<1x896xf32>, vector<1x896xf32>, vector<1x896xf32>, vector<1x896xf32>, vector<1x896xf32>, vector<1x896xf32>, vector<1x896xf32>, vector<1x896xf32>, vector<1x896xf32>, vector<1x896xf32>, vector<1x896xf32>, vector<1x896xf32>, vector<1x896xf32>, vector<1x896xf32>, vector<1x896xf32>, vector<1x896xf32> -> vector<16x896xf32>
    %52 = tpu.concatenate %33, %35, %37, %39, %41, %43, %45, %47, %49, %50 in 0 : vector<1x896xf32>, vector<1x896xf32>, vector<1x896xf32>, vector<1x896xf32>, vector<1x896xf32>, vector<1x896xf32>, vector<1x896xf32>, vector<1x896xf32>, vector<1x896xf32>, vector<7x896xf32> -> vector<16x896xf32>
    %53 = tpu.concatenate %51, %52 in 0 : vector<16x896xf32>, vector<16x896xf32> -> vector<32x896xf32>
    %54 = tpu.transpose %53, [1, 0] : vector<32x896xf32> -> vector<896x32xf32>
    %c0_50 = arith.constant 0 : index
    %c0_51 = arith.constant 0 : index
    %55 = vector.load %arg2[%c0_50, %c0_51] : memref<32x6xf32, #tpu.memory_space<vmem>>, vector<32x6xf32>
    %cst_52 = arith.constant dense<0.000000e+00> : vector<896x6xf32>
    %56 = tpu.matmul %54, %55, %cst_52 {dimension_numbers = #tpu.dot_dimension_numbers<[1], [0], [0], [1], [0, 0, 1, 1], [], []>} : vector<896x32xf32>, vector<32x6xf32>, vector<896x6xf32> -> vector<896x6xf32>
    %c0_53 = arith.constant 0 : index
    %c0_54 = arith.constant 0 : index
    %57 = vector.load %arg3[%c0_53, %c0_54] : memref<1x6xf32, #tpu.memory_space<vmem>>, vector<1x6xf32>
    %58 = vector.broadcast %57 : vector<1x6xf32> to vector<896x6xf32>
    %59 = arith.addf %56, %58 : vector<896x6xf32>
    %60 = math.tanh %59 : vector<896x6xf32>
    %c0_55 = arith.constant 0 : index
    %c0_56 = arith.constant 0 : index
    %61 = vector.load %arg7[%c0_55, %c0_56] : memref<896x6xf32, #tpu.memory_space<vmem>>, vector<896x6xf32>
    tpu.vector_store %arg7[%c0_55, %c0_56], %60 {strides = array<i32>} : memref<896x6xf32, #tpu.memory_space<vmem>>, vector<896x6xf32>,
    %cst_57 = arith.constant 0.000000e+00 : f32
    %62 = vector.broadcast %cst_57 : f32 to vector<240x6xf32>
    %c0_58 = arith.constant 0 : index
    %c0_59 = arith.constant 0 : index
    %63 = vector.load %arg8[%c0_58, %c0_59] : memref<240x6xf32, #tpu.memory_space<vmem>>, vector<240x6xf32>
    tpu.vector_store %arg8[%c0_58, %c0_59], %62 {strides = array<i32>} : memref<240x6xf32, #tpu.memory_space<vmem>>, vector<240x6xf32>,
    %c0_60 = arith.constant 0 : index
    %c0_61 = arith.constant 0 : index
    %64 = tpu.strided_load %arg7[%c0_60, %c0_61] {strides = array<i32: 2, 1>} : memref<896x6xf32, #tpu.memory_space<vmem>>, vector<14x6xf32>
    %c1_62 = arith.constant 1 : index
    %c0_63 = arith.constant 0 : index
    %65 = tpu.strided_load %arg7[%c1_62, %c0_63] {strides = array<i32: 2, 1>} : memref<896x6xf32, #tpu.memory_space<vmem>>, vector<14x6xf32>
    %c32_64 = arith.constant 32 : index
    %c0_65 = arith.constant 0 : index
    %66 = tpu.strided_load %arg7[%c32_64, %c0_65] {strides = array<i32: 2, 1>} : memref<896x6xf32, #tpu.memory_space<vmem>>, vector<14x6xf32>
    %c33_66 = arith.constant 33 : index
    %c0_67 = arith.constant 0 : index
    %67 = tpu.strided_load %arg7[%c33_66, %c0_67] {strides = array<i32: 2, 1>} : memref<896x6xf32, #tpu.memory_space<vmem>>, vector<14x6xf32>
    %68 = arith.maximumf %64, %65 : vector<14x6xf32>
    %69 = arith.maximumf %66, %67 : vector<14x6xf32>
    %70 = arith.maximumf %68, %69 : vector<14x6xf32>
    %c0_68 = arith.constant 0 : index
    %c0_69 = arith.constant 0 : index
    %71 = vector.load %arg8[%c0_68, %c0_69] : memref<240x6xf32, #tpu.memory_space<vmem>>, vector<14x6xf32>
    tpu.vector_store %arg8[%c0_68, %c0_69], %70 {strides = array<i32>} : memref<240x6xf32, #tpu.memory_space<vmem>>, vector<14x6xf32>,
    %c64_70 = arith.constant 64 : index
    %c0_71 = arith.constant 0 : index
    %72 = tpu.strided_load %arg7[%c64_70, %c0_71] {strides = array<i32: 2, 1>} : memref<896x6xf32, #tpu.memory_space<vmem>>, vector<14x6xf32>
    %c65_72 = arith.constant 65 : index
    %c0_73 = arith.constant 0 : index
    %73 = tpu.strided_load %arg7[%c65_72, %c0_73] {strides = array<i32: 2, 1>} : memref<896x6xf32, #tpu.memory_space<vmem>>, vector<14x6xf32>
    %c96_74 = arith.constant 96 : index
    %c0_75 = arith.constant 0 : index
    %74 = tpu.strided_load %arg7[%c96_74, %c0_75] {strides = array<i32: 2, 1>} : memref<896x6xf32, #tpu.memory_space<vmem>>, vector<14x6xf32>
    %c97_76 = arith.constant 97 : index
    %c0_77 = arith.constant 0 : index
    %75 = tpu.strided_load %arg7[%c97_76, %c0_77] {strides = array<i32: 2, 1>} : memref<896x6xf32, #tpu.memory_space<vmem>>, vector<14x6xf32>
    %76 = arith.maximumf %72, %73 : vector<14x6xf32>
    %77 = arith.maximumf %74, %75 : vector<14x6xf32>
    %78 = arith.maximumf %76, %77 : vector<14x6xf32>
    %c16 = arith.constant 16 : index
    %c0_78 = arith.constant 0 : index
    %79 = vector.load %arg8[%c16, %c0_78] : memref<240x6xf32, #tpu.memory_space<vmem>>, vector<14x6xf32>
    tpu.vector_store %arg8[%c16, %c0_78], %78 {strides = array<i32>} : memref<240x6xf32, #tpu.memory_space<vmem>>, vector<14x6xf32>,
    %c128_79 = arith.constant 128 : index
    %c0_80 = arith.constant 0 : index
    %80 = tpu.strided_load %arg7[%c128_79, %c0_80] {strides = array<i32: 2, 1>} : memref<896x6xf32, #tpu.memory_space<vmem>>, vector<14x6xf32>
    %c129_81 = arith.constant 129 : index
    %c0_82 = arith.constant 0 : index
    %81 = tpu.strided_load %arg7[%c129_81, %c0_82] {strides = array<i32: 2, 1>} : memref<896x6xf32, #tpu.memory_space<vmem>>, vector<14x6xf32>
    %c160 = arith.constant 160 : index
    %c0_83 = arith.constant 0 : index
    %82 = tpu.strided_load %arg7[%c160, %c0_83] {strides = array<i32: 2, 1>} : memref<896x6xf32, #tpu.memory_space<vmem>>, vector<14x6xf32>
    %c161 = arith.constant 161 : index
    %c0_84 = arith.constant 0 : index
    %83 = tpu.strided_load %arg7[%c161, %c0_84] {strides = array<i32: 2, 1>} : memref<896x6xf32, #tpu.memory_space<vmem>>, vector<14x6xf32>
    %84 = arith.maximumf %80, %81 : vector<14x6xf32>
    %85 = arith.maximumf %82, %83 : vector<14x6xf32>
    %86 = arith.maximumf %84, %85 : vector<14x6xf32>
    %c32_85 = arith.constant 32 : index
    %c0_86 = arith.constant 0 : index
    %87 = vector.load %arg8[%c32_85, %c0_86] : memref<240x6xf32, #tpu.memory_space<vmem>>, vector<14x6xf32>
    tpu.vector_store %arg8[%c32_85, %c0_86], %86 {strides = array<i32>} : memref<240x6xf32, #tpu.memory_space<vmem>>, vector<14x6xf32>,
    %c192 = arith.constant 192 : index
    %c0_87 = arith.constant 0 : index
    %88 = tpu.strided_load %arg7[%c192, %c0_87] {strides = array<i32: 2, 1>} : memref<896x6xf32, #tpu.memory_space<vmem>>, vector<14x6xf32>
    %c193 = arith.constant 193 : index
    %c0_88 = arith.constant 0 : index
    %89 = tpu.strided_load %arg7[%c193, %c0_88] {strides = array<i32: 2, 1>} : memref<896x6xf32, #tpu.memory_space<vmem>>, vector<14x6xf32>
    %c224 = arith.constant 224 : index
    %c0_89 = arith.constant 0 : index
    %90 = tpu.strided_load %arg7[%c224, %c0_89] {strides = array<i32: 2, 1>} : memref<896x6xf32, #tpu.memory_space<vmem>>, vector<14x6xf32>
    %c225 = arith.constant 225 : index
    %c0_90 = arith.constant 0 : index
    %91 = tpu.strided_load %arg7[%c225, %c0_90] {strides = array<i32: 2, 1>} : memref<896x6xf32, #tpu.memory_space<vmem>>, vector<14x6xf32>
    %92 = arith.maximumf %88, %89 : vector<14x6xf32>
    %93 = arith.maximumf %90, %91 : vector<14x6xf32>
    %94 = arith.maximumf %92, %93 : vector<14x6xf32>
    %c48 = arith.constant 48 : index
    %c0_91 = arith.constant 0 : index
    %95 = vector.load %arg8[%c48, %c0_91] : memref<240x6xf32, #tpu.memory_space<vmem>>, vector<14x6xf32>
    tpu.vector_store %arg8[%c48, %c0_91], %94 {strides = array<i32>} : memref<240x6xf32, #tpu.memory_space<vmem>>, vector<14x6xf32>,
    %c256 = arith.constant 256 : index
    %c0_92 = arith.constant 0 : index
    %96 = tpu.strided_load %arg7[%c256, %c0_92] {strides = array<i32: 2, 1>} : memref<896x6xf32, #tpu.memory_space<vmem>>, vector<14x6xf32>
    %c257 = arith.constant 257 : index
    %c0_93 = arith.constant 0 : index
    %97 = tpu.strided_load %arg7[%c257, %c0_93] {strides = array<i32: 2, 1>} : memref<896x6xf32, #tpu.memory_space<vmem>>, vector<14x6xf32>
    %c288 = arith.constant 288 : index
    %c0_94 = arith.constant 0 : index
    %98 = tpu.strided_load %arg7[%c288, %c0_94] {strides = array<i32: 2, 1>} : memref<896x6xf32, #tpu.memory_space<vmem>>, vector<14x6xf32>
    %c289 = arith.constant 289 : index
    %c0_95 = arith.constant 0 : index
    %99 = tpu.strided_load %arg7[%c289, %c0_95] {strides = array<i32: 2, 1>} : memref<896x6xf32, #tpu.memory_space<vmem>>, vector<14x6xf32>
    %100 = arith.maximumf %96, %97 : vector<14x6xf32>
    %101 = arith.maximumf %98, %99 : vector<14x6xf32>
    %102 = arith.maximumf %100, %101 : vector<14x6xf32>
    %c64_96 = arith.constant 64 : index
    %c0_97 = arith.constant 0 : index
    %103 = vector.load %arg8[%c64_96, %c0_97] : memref<240x6xf32, #tpu.memory_space<vmem>>, vector<14x6xf32>
    tpu.vector_store %arg8[%c64_96, %c0_97], %102 {strides = array<i32>} : memref<240x6xf32, #tpu.memory_space<vmem>>, vector<14x6xf32>,
    %c320 = arith.constant 320 : index
    %c0_98 = arith.constant 0 : index
    %104 = tpu.strided_load %arg7[%c320, %c0_98] {strides = array<i32: 2, 1>} : memref<896x6xf32, #tpu.memory_space<vmem>>, vector<14x6xf32>
    %c321 = arith.constant 321 : index
    %c0_99 = arith.constant 0 : index
    %105 = tpu.strided_load %arg7[%c321, %c0_99] {strides = array<i32: 2, 1>} : memref<896x6xf32, #tpu.memory_space<vmem>>, vector<14x6xf32>
    %c352 = arith.constant 352 : index
    %c0_100 = arith.constant 0 : index
    %106 = tpu.strided_load %arg7[%c352, %c0_100] {strides = array<i32: 2, 1>} : memref<896x6xf32, #tpu.memory_space<vmem>>, vector<14x6xf32>
    %c353 = arith.constant 353 : index
    %c0_101 = arith.constant 0 : index
    %107 = tpu.strided_load %arg7[%c353, %c0_101] {strides = array<i32: 2, 1>} : memref<896x6xf32, #tpu.memory_space<vmem>>, vector<14x6xf32>
    %108 = arith.maximumf %104, %105 : vector<14x6xf32>
    %109 = arith.maximumf %106, %107 : vector<14x6xf32>
    %110 = arith.maximumf %108, %109 : vector<14x6xf32>
    %c80 = arith.constant 80 : index
    %c0_102 = arith.constant 0 : index
    %111 = vector.load %arg8[%c80, %c0_102] : memref<240x6xf32, #tpu.memory_space<vmem>>, vector<14x6xf32>
    tpu.vector_store %arg8[%c80, %c0_102], %110 {strides = array<i32>} : memref<240x6xf32, #tpu.memory_space<vmem>>, vector<14x6xf32>,
    %c384 = arith.constant 384 : index
    %c0_103 = arith.constant 0 : index
    %112 = tpu.strided_load %arg7[%c384, %c0_103] {strides = array<i32: 2, 1>} : memref<896x6xf32, #tpu.memory_space<vmem>>, vector<14x6xf32>
    %c385 = arith.constant 385 : index
    %c0_104 = arith.constant 0 : index
    %113 = tpu.strided_load %arg7[%c385, %c0_104] {strides = array<i32: 2, 1>} : memref<896x6xf32, #tpu.memory_space<vmem>>, vector<14x6xf32>
    %c416 = arith.constant 416 : index
    %c0_105 = arith.constant 0 : index
    %114 = tpu.strided_load %arg7[%c416, %c0_105] {strides = array<i32: 2, 1>} : memref<896x6xf32, #tpu.memory_space<vmem>>, vector<14x6xf32>
    %c417 = arith.constant 417 : index
    %c0_106 = arith.constant 0 : index
    %115 = tpu.strided_load %arg7[%c417, %c0_106] {strides = array<i32: 2, 1>} : memref<896x6xf32, #tpu.memory_space<vmem>>, vector<14x6xf32>
    %116 = arith.maximumf %112, %113 : vector<14x6xf32>
    %117 = arith.maximumf %114, %115 : vector<14x6xf32>
    %118 = arith.maximumf %116, %117 : vector<14x6xf32>
    %c96_107 = arith.constant 96 : index
    %c0_108 = arith.constant 0 : index
    %119 = vector.load %arg8[%c96_107, %c0_108] : memref<240x6xf32, #tpu.memory_space<vmem>>, vector<14x6xf32>
    tpu.vector_store %arg8[%c96_107, %c0_108], %118 {strides = array<i32>} : memref<240x6xf32, #tpu.memory_space<vmem>>, vector<14x6xf32>,
    %c448 = arith.constant 448 : index
    %c0_109 = arith.constant 0 : index
    %120 = tpu.strided_load %arg7[%c448, %c0_109] {strides = array<i32: 2, 1>} : memref<896x6xf32, #tpu.memory_space<vmem>>, vector<14x6xf32>
    %c449 = arith.constant 449 : index
    %c0_110 = arith.constant 0 : index
    %121 = tpu.strided_load %arg7[%c449, %c0_110] {strides = array<i32: 2, 1>} : memref<896x6xf32, #tpu.memory_space<vmem>>, vector<14x6xf32>
    %c480 = arith.constant 480 : index
    %c0_111 = arith.constant 0 : index
    %122 = tpu.strided_load %arg7[%c480, %c0_111] {strides = array<i32: 2, 1>} : memref<896x6xf32, #tpu.memory_space<vmem>>, vector<14x6xf32>
    %c481 = arith.constant 481 : index
    %c0_112 = arith.constant 0 : index
    %123 = tpu.strided_load %arg7[%c481, %c0_112] {strides = array<i32: 2, 1>} : memref<896x6xf32, #tpu.memory_space<vmem>>, vector<14x6xf32>
    %124 = arith.maximumf %120, %121 : vector<14x6xf32>
    %125 = arith.maximumf %122, %123 : vector<14x6xf32>
    %126 = arith.maximumf %124, %125 : vector<14x6xf32>
    %c112 = arith.constant 112 : index
    %c0_113 = arith.constant 0 : index
    %127 = vector.load %arg8[%c112, %c0_113] : memref<240x6xf32, #tpu.memory_space<vmem>>, vector<14x6xf32>
    tpu.vector_store %arg8[%c112, %c0_113], %126 {strides = array<i32>} : memref<240x6xf32, #tpu.memory_space<vmem>>, vector<14x6xf32>,
    %c512 = arith.constant 512 : index
    %c0_114 = arith.constant 0 : index
    %128 = tpu.strided_load %arg7[%c512, %c0_114] {strides = array<i32: 2, 1>} : memref<896x6xf32, #tpu.memory_space<vmem>>, vector<14x6xf32>
    %c513 = arith.constant 513 : index
    %c0_115 = arith.constant 0 : index
    %129 = tpu.strided_load %arg7[%c513, %c0_115] {strides = array<i32: 2, 1>} : memref<896x6xf32, #tpu.memory_space<vmem>>, vector<14x6xf32>
    %c544 = arith.constant 544 : index
    %c0_116 = arith.constant 0 : index
    %130 = tpu.strided_load %arg7[%c544, %c0_116] {strides = array<i32: 2, 1>} : memref<896x6xf32, #tpu.memory_space<vmem>>, vector<14x6xf32>
    %c545 = arith.constant 545 : index
    %c0_117 = arith.constant 0 : index
    %131 = tpu.strided_load %arg7[%c545, %c0_117] {strides = array<i32: 2, 1>} : memref<896x6xf32, #tpu.memory_space<vmem>>, vector<14x6xf32>
    %132 = arith.maximumf %128, %129 : vector<14x6xf32>
    %133 = arith.maximumf %130, %131 : vector<14x6xf32>
    %134 = arith.maximumf %132, %133 : vector<14x6xf32>
    %c128_118 = arith.constant 128 : index
    %c0_119 = arith.constant 0 : index
    %135 = vector.load %arg8[%c128_118, %c0_119] : memref<240x6xf32, #tpu.memory_space<vmem>>, vector<14x6xf32>
    tpu.vector_store %arg8[%c128_118, %c0_119], %134 {strides = array<i32>} : memref<240x6xf32, #tpu.memory_space<vmem>>, vector<14x6xf32>,
    %c576 = arith.constant 576 : index
    %c0_120 = arith.constant 0 : index
    %136 = tpu.strided_load %arg7[%c576, %c0_120] {strides = array<i32: 2, 1>} : memref<896x6xf32, #tpu.memory_space<vmem>>, vector<14x6xf32>
    %c577 = arith.constant 577 : index
    %c0_121 = arith.constant 0 : index
    %137 = tpu.strided_load %arg7[%c577, %c0_121] {strides = array<i32: 2, 1>} : memref<896x6xf32, #tpu.memory_space<vmem>>, vector<14x6xf32>
    %c608 = arith.constant 608 : index
    %c0_122 = arith.constant 0 : index
    %138 = tpu.strided_load %arg7[%c608, %c0_122] {strides = array<i32: 2, 1>} : memref<896x6xf32, #tpu.memory_space<vmem>>, vector<14x6xf32>
    %c609 = arith.constant 609 : index
    %c0_123 = arith.constant 0 : index
    %139 = tpu.strided_load %arg7[%c609, %c0_123] {strides = array<i32: 2, 1>} : memref<896x6xf32, #tpu.memory_space<vmem>>, vector<14x6xf32>
    %140 = arith.maximumf %136, %137 : vector<14x6xf32>
    %141 = arith.maximumf %138, %139 : vector<14x6xf32>
    %142 = arith.maximumf %140, %141 : vector<14x6xf32>
    %c144 = arith.constant 144 : index
    %c0_124 = arith.constant 0 : index
    %143 = vector.load %arg8[%c144, %c0_124] : memref<240x6xf32, #tpu.memory_space<vmem>>, vector<14x6xf32>
    tpu.vector_store %arg8[%c144, %c0_124], %142 {strides = array<i32>} : memref<240x6xf32, #tpu.memory_space<vmem>>, vector<14x6xf32>,
    %c640 = arith.constant 640 : index
    %c0_125 = arith.constant 0 : index
    %144 = tpu.strided_load %arg7[%c640, %c0_125] {strides = array<i32: 2, 1>} : memref<896x6xf32, #tpu.memory_space<vmem>>, vector<14x6xf32>
    %c641 = arith.constant 641 : index
    %c0_126 = arith.constant 0 : index
    %145 = tpu.strided_load %arg7[%c641, %c0_126] {strides = array<i32: 2, 1>} : memref<896x6xf32, #tpu.memory_space<vmem>>, vector<14x6xf32>
    %c672 = arith.constant 672 : index
    %c0_127 = arith.constant 0 : index
    %146 = tpu.strided_load %arg7[%c672, %c0_127] {strides = array<i32: 2, 1>} : memref<896x6xf32, #tpu.memory_space<vmem>>, vector<14x6xf32>
    %c673 = arith.constant 673 : index
    %c0_128 = arith.constant 0 : index
    %147 = tpu.strided_load %arg7[%c673, %c0_128] {strides = array<i32: 2, 1>} : memref<896x6xf32, #tpu.memory_space<vmem>>, vector<14x6xf32>
    %148 = arith.maximumf %144, %145 : vector<14x6xf32>
    %149 = arith.maximumf %146, %147 : vector<14x6xf32>
    %150 = arith.maximumf %148, %149 : vector<14x6xf32>
    %c160_129 = arith.constant 160 : index
    %c0_130 = arith.constant 0 : index
    %151 = vector.load %arg8[%c160_129, %c0_130] : memref<240x6xf32, #tpu.memory_space<vmem>>, vector<14x6xf32>
    tpu.vector_store %arg8[%c160_129, %c0_130], %150 {strides = array<i32>} : memref<240x6xf32, #tpu.memory_space<vmem>>, vector<14x6xf32>,
    %c704 = arith.constant 704 : index
    %c0_131 = arith.constant 0 : index
    %152 = tpu.strided_load %arg7[%c704, %c0_131] {strides = array<i32: 2, 1>} : memref<896x6xf32, #tpu.memory_space<vmem>>, vector<14x6xf32>
    %c705 = arith.constant 705 : index
    %c0_132 = arith.constant 0 : index
    %153 = tpu.strided_load %arg7[%c705, %c0_132] {strides = array<i32: 2, 1>} : memref<896x6xf32, #tpu.memory_space<vmem>>, vector<14x6xf32>
    %c736 = arith.constant 736 : index
    %c0_133 = arith.constant 0 : index
    %154 = tpu.strided_load %arg7[%c736, %c0_133] {strides = array<i32: 2, 1>} : memref<896x6xf32, #tpu.memory_space<vmem>>, vector<14x6xf32>
    %c737 = arith.constant 737 : index
    %c0_134 = arith.constant 0 : index
    %155 = tpu.strided_load %arg7[%c737, %c0_134] {strides = array<i32: 2, 1>} : memref<896x6xf32, #tpu.memory_space<vmem>>, vector<14x6xf32>
    %156 = arith.maximumf %152, %153 : vector<14x6xf32>
    %157 = arith.maximumf %154, %155 : vector<14x6xf32>
    %158 = arith.maximumf %156, %157 : vector<14x6xf32>
    %c176 = arith.constant 176 : index
    %c0_135 = arith.constant 0 : index
    %159 = vector.load %arg8[%c176, %c0_135] : memref<240x6xf32, #tpu.memory_space<vmem>>, vector<14x6xf32>
    tpu.vector_store %arg8[%c176, %c0_135], %158 {strides = array<i32>} : memref<240x6xf32, #tpu.memory_space<vmem>>, vector<14x6xf32>,
    %c768 = arith.constant 768 : index
    %c0_136 = arith.constant 0 : index
    %160 = tpu.strided_load %arg7[%c768, %c0_136] {strides = array<i32: 2, 1>} : memref<896x6xf32, #tpu.memory_space<vmem>>, vector<14x6xf32>
    %c769 = arith.constant 769 : index
    %c0_137 = arith.constant 0 : index
    %161 = tpu.strided_load %arg7[%c769, %c0_137] {strides = array<i32: 2, 1>} : memref<896x6xf32, #tpu.memory_space<vmem>>, vector<14x6xf32>
    %c800 = arith.constant 800 : index
    %c0_138 = arith.constant 0 : index
    %162 = tpu.strided_load %arg7[%c800, %c0_138] {strides = array<i32: 2, 1>} : memref<896x6xf32, #tpu.memory_space<vmem>>, vector<14x6xf32>
    %c801 = arith.constant 801 : index
    %c0_139 = arith.constant 0 : index
    %163 = tpu.strided_load %arg7[%c801, %c0_139] {strides = array<i32: 2, 1>} : memref<896x6xf32, #tpu.memory_space<vmem>>, vector<14x6xf32>
    %164 = arith.maximumf %160, %161 : vector<14x6xf32>
    %165 = arith.maximumf %162, %163 : vector<14x6xf32>
    %166 = arith.maximumf %164, %165 : vector<14x6xf32>
    %c192_140 = arith.constant 192 : index
    %c0_141 = arith.constant 0 : index
    %167 = vector.load %arg8[%c192_140, %c0_141] : memref<240x6xf32, #tpu.memory_space<vmem>>, vector<14x6xf32>
    tpu.vector_store %arg8[%c192_140, %c0_141], %166 {strides = array<i32>} : memref<240x6xf32, #tpu.memory_space<vmem>>, vector<14x6xf32>,
    %c832 = arith.constant 832 : index
    %c0_142 = arith.constant 0 : index
    %168 = tpu.strided_load %arg7[%c832, %c0_142] {strides = array<i32: 2, 1>} : memref<896x6xf32, #tpu.memory_space<vmem>>, vector<14x6xf32>
    %c833 = arith.constant 833 : index
    %c0_143 = arith.constant 0 : index
    %169 = tpu.strided_load %arg7[%c833, %c0_143] {strides = array<i32: 2, 1>} : memref<896x6xf32, #tpu.memory_space<vmem>>, vector<14x6xf32>
    %c864 = arith.constant 864 : index
    %c0_144 = arith.constant 0 : index
    %170 = tpu.strided_load %arg7[%c864, %c0_144] {strides = array<i32: 2, 1>} : memref<896x6xf32, #tpu.memory_space<vmem>>, vector<14x6xf32>
    %c865 = arith.constant 865 : index
    %c0_145 = arith.constant 0 : index
    %171 = tpu.strided_load %arg7[%c865, %c0_145] {strides = array<i32: 2, 1>} : memref<896x6xf32, #tpu.memory_space<vmem>>, vector<14x6xf32>
    %172 = arith.maximumf %168, %169 : vector<14x6xf32>
    %173 = arith.maximumf %170, %171 : vector<14x6xf32>
    %174 = arith.maximumf %172, %173 : vector<14x6xf32>
    %c208 = arith.constant 208 : index
    %c0_146 = arith.constant 0 : index
    %175 = vector.load %arg8[%c208, %c0_146] : memref<240x6xf32, #tpu.memory_space<vmem>>, vector<14x6xf32>
    tpu.vector_store %arg8[%c208, %c0_146], %174 {strides = array<i32>} : memref<240x6xf32, #tpu.memory_space<vmem>>, vector<14x6xf32>,
    %c0_147 = arith.constant 0 : index
    %c0_148 = arith.constant 0 : index
    %176 = vector.load %arg8[%c0_147, %c0_148] : memref<240x6xf32, #tpu.memory_space<vmem>>, vector<160x6xf32>
    %c1_149 = arith.constant 1 : index
    %c0_150 = arith.constant 0 : index
    %177 = vector.load %arg8[%c1_149, %c0_150] : memref<240x6xf32, #tpu.memory_space<vmem>>, vector<160x6xf32>
    %c2_151 = arith.constant 2 : index
    %c0_152 = arith.constant 0 : index
    %178 = vector.load %arg8[%c2_151, %c0_152] : memref<240x6xf32, #tpu.memory_space<vmem>>, vector<160x6xf32>
    %c3_153 = arith.constant 3 : index
    %c0_154 = arith.constant 0 : index
    %179 = vector.load %arg8[%c3_153, %c0_154] : memref<240x6xf32, #tpu.memory_space<vmem>>, vector<160x6xf32>
    %c4_155 = arith.constant 4 : index
    %c0_156 = arith.constant 0 : index
    %180 = vector.load %arg8[%c4_155, %c0_156] : memref<240x6xf32, #tpu.memory_space<vmem>>, vector<160x6xf32>
    %c16_157 = arith.constant 16 : index
    %c0_158 = arith.constant 0 : index
    %181 = vector.load %arg8[%c16_157, %c0_158] : memref<240x6xf32, #tpu.memory_space<vmem>>, vector<160x6xf32>
    %c17 = arith.constant 17 : index
    %c0_159 = arith.constant 0 : index
    %182 = vector.load %arg8[%c17, %c0_159] : memref<240x6xf32, #tpu.memory_space<vmem>>, vector<160x6xf32>
    %c18 = arith.constant 18 : index
    %c0_160 = arith.constant 0 : index
    %183 = vector.load %arg8[%c18, %c0_160] : memref<240x6xf32, #tpu.memory_space<vmem>>, vector<160x6xf32>
    %c19 = arith.constant 19 : index
    %c0_161 = arith.constant 0 : index
    %184 = vector.load %arg8[%c19, %c0_161] : memref<240x6xf32, #tpu.memory_space<vmem>>, vector<160x6xf32>
    %c20 = arith.constant 20 : index
    %c0_162 = arith.constant 0 : index
    %185 = vector.load %arg8[%c20, %c0_162] : memref<240x6xf32, #tpu.memory_space<vmem>>, vector<160x6xf32>
    %c32_163 = arith.constant 32 : index
    %c0_164 = arith.constant 0 : index
    %186 = vector.load %arg8[%c32_163, %c0_164] : memref<240x6xf32, #tpu.memory_space<vmem>>, vector<160x6xf32>
    %c33_165 = arith.constant 33 : index
    %c0_166 = arith.constant 0 : index
    %187 = vector.load %arg8[%c33_165, %c0_166] : memref<240x6xf32, #tpu.memory_space<vmem>>, vector<160x6xf32>
    %c34_167 = arith.constant 34 : index
    %c0_168 = arith.constant 0 : index
    %188 = vector.load %arg8[%c34_167, %c0_168] : memref<240x6xf32, #tpu.memory_space<vmem>>, vector<160x6xf32>
    %c35_169 = arith.constant 35 : index
    %c0_170 = arith.constant 0 : index
    %189 = vector.load %arg8[%c35_169, %c0_170] : memref<240x6xf32, #tpu.memory_space<vmem>>, vector<160x6xf32>
    %c36_171 = arith.constant 36 : index
    %c0_172 = arith.constant 0 : index
    %190 = vector.load %arg8[%c36_171, %c0_172] : memref<240x6xf32, #tpu.memory_space<vmem>>, vector<160x6xf32>
    %c48_173 = arith.constant 48 : index
    %c0_174 = arith.constant 0 : index
    %191 = vector.load %arg8[%c48_173, %c0_174] : memref<240x6xf32, #tpu.memory_space<vmem>>, vector<160x6xf32>
    %c49 = arith.constant 49 : index
    %c0_175 = arith.constant 0 : index
    %192 = vector.load %arg8[%c49, %c0_175] : memref<240x6xf32, #tpu.memory_space<vmem>>, vector<160x6xf32>
    %c50 = arith.constant 50 : index
    %c0_176 = arith.constant 0 : index
    %193 = vector.load %arg8[%c50, %c0_176] : memref<240x6xf32, #tpu.memory_space<vmem>>, vector<160x6xf32>
    %c51 = arith.constant 51 : index
    %c0_177 = arith.constant 0 : index
    %194 = vector.load %arg8[%c51, %c0_177] : memref<240x6xf32, #tpu.memory_space<vmem>>, vector<160x6xf32>
    %c52 = arith.constant 52 : index
    %c0_178 = arith.constant 0 : index
    %195 = vector.load %arg8[%c52, %c0_178] : memref<240x6xf32, #tpu.memory_space<vmem>>, vector<160x6xf32>
    %c64_179 = arith.constant 64 : index
    %c0_180 = arith.constant 0 : index
    %196 = vector.load %arg8[%c64_179, %c0_180] : memref<240x6xf32, #tpu.memory_space<vmem>>, vector<160x6xf32>
    %c65_181 = arith.constant 65 : index
    %c0_182 = arith.constant 0 : index
    %197 = vector.load %arg8[%c65_181, %c0_182] : memref<240x6xf32, #tpu.memory_space<vmem>>, vector<160x6xf32>
    %c66_183 = arith.constant 66 : index
    %c0_184 = arith.constant 0 : index
    %198 = vector.load %arg8[%c66_183, %c0_184] : memref<240x6xf32, #tpu.memory_space<vmem>>, vector<160x6xf32>
    %c67_185 = arith.constant 67 : index
    %c0_186 = arith.constant 0 : index
    %199 = vector.load %arg8[%c67_185, %c0_186] : memref<240x6xf32, #tpu.memory_space<vmem>>, vector<160x6xf32>
    %c68_187 = arith.constant 68 : index
    %c0_188 = arith.constant 0 : index
    %200 = vector.load %arg8[%c68_187, %c0_188] : memref<240x6xf32, #tpu.memory_space<vmem>>, vector<160x6xf32>
    %201 = tpu.concatenate %176, %177, %178, %179, %180, %181, %182, %183, %184, %185, %186, %187, %188, %189, %190, %191 in 1 : vector<160x6xf32>, vector<160x6xf32>, vector<160x6xf32>, vector<160x6xf32>, vector<160x6xf32>, vector<160x6xf32>, vector<160x6xf32>, vector<160x6xf32>, vector<160x6xf32>, vector<160x6xf32>, vector<160x6xf32>, vector<160x6xf32>, vector<160x6xf32>, vector<160x6xf32>, vector<160x6xf32>, vector<160x6xf32> -> vector<160x96xf32>
    %202 = tpu.concatenate %192, %193, %194, %195, %196, %197, %198, %199, %200 in 1 : vector<160x6xf32>, vector<160x6xf32>, vector<160x6xf32>, vector<160x6xf32>, vector<160x6xf32>, vector<160x6xf32>, vector<160x6xf32>, vector<160x6xf32>, vector<160x6xf32> -> vector<160x54xf32>
    %203 = tpu.concatenate %201, %202 in 1 : vector<160x96xf32>, vector<160x54xf32> -> vector<160x150xf32>
    %c0_189 = arith.constant 0 : index
    %c0_190 = arith.constant 0 : index
    %204 = vector.load %arg4[%c0_189, %c0_190] : memref<150x16xf32, #tpu.memory_space<vmem>>, vector<150x16xf32>
    %cst_191 = arith.constant dense<0.000000e+00> : vector<160x16xf32>
    %205 = tpu.matmul %203, %204, %cst_191 {dimension_numbers = #tpu.dot_dimension_numbers<[1], [0], [0], [1], [0, 0, 1, 1], [], []>} : vector<160x150xf32>, vector<150x16xf32>, vector<160x16xf32> -> vector<160x16xf32>
    %c0_192 = arith.constant 0 : index
    %c0_193 = arith.constant 0 : index
    %206 = vector.load %arg5[%c0_192, %c0_193] : memref<1x16xf32, #tpu.memory_space<vmem>>, vector<1x16xf32>
    %207 = vector.broadcast %206 : vector<1x16xf32> to vector<160x16xf32>
    %208 = arith.addf %205, %207 : vector<160x16xf32>
    %209 = math.tanh %208 : vector<160x16xf32>
    %c0_194 = arith.constant 0 : index
    %c0_195 = arith.constant 0 : index
    %210 = vector.load %arg9[%c0_194, %c0_195] : memref<160x16xf32, #tpu.memory_space<vmem>>, vector<160x16xf32>
    tpu.vector_store %arg9[%c0_194, %c0_195], %209 {strides = array<i32>} : memref<160x16xf32, #tpu.memory_space<vmem>>, vector<160x16xf32>,
    %c0_196 = arith.constant 0 : index
    %c0_197 = arith.constant 0 : index
    %211 = tpu.strided_load %arg9[%c0_196, %c0_197] {strides = array<i32: 2, 1>} : memref<160x16xf32, #tpu.memory_space<vmem>>, vector<5x16xf32>
    %c1_198 = arith.constant 1 : index
    %c0_199 = arith.constant 0 : index
    %212 = tpu.strided_load %arg9[%c1_198, %c0_199] {strides = array<i32: 2, 1>} : memref<160x16xf32, #tpu.memory_space<vmem>>, vector<5x16xf32>
    %c16_200 = arith.constant 16 : index
    %c0_201 = arith.constant 0 : index
    %213 = tpu.strided_load %arg9[%c16_200, %c0_201] {strides = array<i32: 2, 1>} : memref<160x16xf32, #tpu.memory_space<vmem>>, vector<5x16xf32>
    %c17_202 = arith.constant 17 : index
    %c0_203 = arith.constant 0 : index
    %214 = tpu.strided_load %arg9[%c17_202, %c0_203] {strides = array<i32: 2, 1>} : memref<160x16xf32, #tpu.memory_space<vmem>>, vector<5x16xf32>
    %215 = arith.maximumf %211, %212 : vector<5x16xf32>
    %216 = arith.maximumf %213, %214 : vector<5x16xf32>
    %217 = arith.maximumf %215, %216 : vector<5x16xf32>
    %c0_204 = arith.constant 0 : index
    %c0_205 = arith.constant 0 : index
    %c0_206 = arith.constant 0 : index
    %218 = vector.load %arg6[%c0_204, %c0_205, %c0_206] : memref<1x25x16xf32, #tpu.memory_space<vmem>>, vector<1x5x16xf32>
    %219 = vector.shape_cast %218 : vector<1x5x16xf32> to vector<5x16xf32>
    %220 = vector.shape_cast %217 : vector<5x16xf32> to vector<1x5x16xf32>
    tpu.vector_store %arg6[%c0_204, %c0_205, %c0_206], %220 {strides = array<i32>} : memref<1x25x16xf32, #tpu.memory_space<vmem>>, vector<1x5x16xf32>,
    %c32_207 = arith.constant 32 : index
    %c0_208 = arith.constant 0 : index
    %221 = tpu.strided_load %arg9[%c32_207, %c0_208] {strides = array<i32: 2, 1>} : memref<160x16xf32, #tpu.memory_space<vmem>>, vector<5x16xf32>
    %c33_209 = arith.constant 33 : index
    %c0_210 = arith.constant 0 : index
    %222 = tpu.strided_load %arg9[%c33_209, %c0_210] {strides = array<i32: 2, 1>} : memref<160x16xf32, #tpu.memory_space<vmem>>, vector<5x16xf32>
    %c48_211 = arith.constant 48 : index
    %c0_212 = arith.constant 0 : index
    %223 = tpu.strided_load %arg9[%c48_211, %c0_212] {strides = array<i32: 2, 1>} : memref<160x16xf32, #tpu.memory_space<vmem>>, vector<5x16xf32>
    %c49_213 = arith.constant 49 : index
    %c0_214 = arith.constant 0 : index
    %224 = tpu.strided_load %arg9[%c49_213, %c0_214] {strides = array<i32: 2, 1>} : memref<160x16xf32, #tpu.memory_space<vmem>>, vector<5x16xf32>
    %225 = arith.maximumf %221, %222 : vector<5x16xf32>
    %226 = arith.maximumf %223, %224 : vector<5x16xf32>
    %227 = arith.maximumf %225, %226 : vector<5x16xf32>
    %c0_215 = arith.constant 0 : index
    %c5 = arith.constant 5 : index
    %c0_216 = arith.constant 0 : index
    %228 = vector.load %arg6[%c0_215, %c5, %c0_216] : memref<1x25x16xf32, #tpu.memory_space<vmem>>, vector<1x5x16xf32>
    %229 = vector.shape_cast %228 : vector<1x5x16xf32> to vector<5x16xf32>
    %230 = vector.shape_cast %227 : vector<5x16xf32> to vector<1x5x16xf32>
    tpu.vector_store %arg6[%c0_215, %c5, %c0_216], %230 {strides = array<i32>} : memref<1x25x16xf32, #tpu.memory_space<vmem>>, vector<1x5x16xf32>,
    %c64_217 = arith.constant 64 : index
    %c0_218 = arith.constant 0 : index
    %231 = tpu.strided_load %arg9[%c64_217, %c0_218] {strides = array<i32: 2, 1>} : memref<160x16xf32, #tpu.memory_space<vmem>>, vector<5x16xf32>
    %c65_219 = arith.constant 65 : index
    %c0_220 = arith.constant 0 : index
    %232 = tpu.strided_load %arg9[%c65_219, %c0_220] {strides = array<i32: 2, 1>} : memref<160x16xf32, #tpu.memory_space<vmem>>, vector<5x16xf32>
    %c80_221 = arith.constant 80 : index
    %c0_222 = arith.constant 0 : index
    %233 = tpu.strided_load %arg9[%c80_221, %c0_222] {strides = array<i32: 2, 1>} : memref<160x16xf32, #tpu.memory_space<vmem>>, vector<5x16xf32>
    %c81 = arith.constant 81 : index
    %c0_223 = arith.constant 0 : index
    %234 = tpu.strided_load %arg9[%c81, %c0_223] {strides = array<i32: 2, 1>} : memref<160x16xf32, #tpu.memory_space<vmem>>, vector<5x16xf32>
    %235 = arith.maximumf %231, %232 : vector<5x16xf32>
    %236 = arith.maximumf %233, %234 : vector<5x16xf32>
    %237 = arith.maximumf %235, %236 : vector<5x16xf32>
    %c0_224 = arith.constant 0 : index
    %c10 = arith.constant 10 : index
    %c0_225 = arith.constant 0 : index
    %238 = vector.load %arg6[%c0_224, %c10, %c0_225] : memref<1x25x16xf32, #tpu.memory_space<vmem>>, vector<1x5x16xf32>
    %239 = vector.shape_cast %238 : vector<1x5x16xf32> to vector<5x16xf32>
    %240 = vector.shape_cast %237 : vector<5x16xf32> to vector<1x5x16xf32>
    tpu.vector_store %arg6[%c0_224, %c10, %c0_225], %240 {strides = array<i32>} : memref<1x25x16xf32, #tpu.memory_space<vmem>>, vector<1x5x16xf32>,
    %c96_226 = arith.constant 96 : index
    %c0_227 = arith.constant 0 : index
    %241 = tpu.strided_load %arg9[%c96_226, %c0_227] {strides = array<i32: 2, 1>} : memref<160x16xf32, #tpu.memory_space<vmem>>, vector<5x16xf32>
    %c97_228 = arith.constant 97 : index
    %c0_229 = arith.constant 0 : index
    %242 = tpu.strided_load %arg9[%c97_228, %c0_229] {strides = array<i32: 2, 1>} : memref<160x16xf32, #tpu.memory_space<vmem>>, vector<5x16xf32>
    %c112_230 = arith.constant 112 : index
    %c0_231 = arith.constant 0 : index
    %243 = tpu.strided_load %arg9[%c112_230, %c0_231] {strides = array<i32: 2, 1>} : memref<160x16xf32, #tpu.memory_space<vmem>>, vector<5x16xf32>
    %c113 = arith.constant 113 : index
    %c0_232 = arith.constant 0 : index
    %244 = tpu.strided_load %arg9[%c113, %c0_232] {strides = array<i32: 2, 1>} : memref<160x16xf32, #tpu.memory_space<vmem>>, vector<5x16xf32>
    %245 = arith.maximumf %241, %242 : vector<5x16xf32>
    %246 = arith.maximumf %243, %244 : vector<5x16xf32>
    %247 = arith.maximumf %245, %246 : vector<5x16xf32>
    %c0_233 = arith.constant 0 : index
    %c15 = arith.constant 15 : index
    %c0_234 = arith.constant 0 : index
    %248 = vector.load %arg6[%c0_233, %c15, %c0_234] : memref<1x25x16xf32, #tpu.memory_space<vmem>>, vector<1x5x16xf32>
    %249 = vector.shape_cast %248 : vector<1x5x16xf32> to vector<5x16xf32>
    %250 = vector.shape_cast %247 : vector<5x16xf32> to vector<1x5x16xf32>
    tpu.vector_store %arg6[%c0_233, %c15, %c0_234], %250 {strides = array<i32>} : memref<1x25x16xf32, #tpu.memory_space<vmem>>, vector<1x5x16xf32>,
    %c128_235 = arith.constant 128 : index
    %c0_236 = arith.constant 0 : index
    %251 = tpu.strided_load %arg9[%c128_235, %c0_236] {strides = array<i32: 2, 1>} : memref<160x16xf32, #tpu.memory_space<vmem>>, vector<5x16xf32>
    %c129_237 = arith.constant 129 : index
    %c0_238 = arith.constant 0 : index
    %252 = tpu.strided_load %arg9[%c129_237, %c0_238] {strides = array<i32: 2, 1>} : memref<160x16xf32, #tpu.memory_space<vmem>>, vector<5x16xf32>
    %c144_239 = arith.constant 144 : index
    %c0_240 = arith.constant 0 : index
    %253 = tpu.strided_load %arg9[%c144_239, %c0_240] {strides = array<i32: 2, 1>} : memref<160x16xf32, #tpu.memory_space<vmem>>, vector<5x16xf32>
    %c145 = arith.constant 145 : index
    %c0_241 = arith.constant 0 : index
    %254 = tpu.strided_load %arg9[%c145, %c0_241] {strides = array<i32: 2, 1>} : memref<160x16xf32, #tpu.memory_space<vmem>>, vector<5x16xf32>
    %255 = arith.maximumf %251, %252 : vector<5x16xf32>
    %256 = arith.maximumf %253, %254 : vector<5x16xf32>
    %257 = arith.maximumf %255, %256 : vector<5x16xf32>
    %c0_242 = arith.constant 0 : index
    %c20_243 = arith.constant 20 : index
    %c0_244 = arith.constant 0 : index
    %258 = vector.load %arg6[%c0_242, %c20_243, %c0_244] : memref<1x25x16xf32, #tpu.memory_space<vmem>>, vector<1x5x16xf32>
    %259 = vector.shape_cast %258 : vector<1x5x16xf32> to vector<5x16xf32>
    %260 = vector.shape_cast %257 : vector<5x16xf32> to vector<1x5x16xf32>
    tpu.vector_store %arg6[%c0_242, %c20_243, %c0_244], %260 {strides = array<i32>} : memref<1x25x16xf32, #tpu.memory_space<vmem>>, vector<1x5x16xf32>,
    return
  }
  func.func @transform_0(%arg0: i32) -> (i32, i32, i32) {
    %c0_i32 = arith.constant 0 : i32
    %c0_i32_0 = arith.constant 0 : i32
    %c0_i32_1 = arith.constant 0 : i32
    return %arg0, %c0_i32, %c0_i32_0 : i32, i32, i32
  }
  func.func @transform_1(%arg0: i32) -> (i32, i32) {
    %c0_i32 = arith.constant 0 : i32
    %c0_i32_0 = arith.constant 0 : i32
    %c0_i32_1 = arith.constant 0 : i32
    return %c0_i32, %c0_i32_0 : i32, i32
  }
  func.func @transform_2(%arg0: i32) -> (i32, i32) {
    %c0_i32 = arith.constant 0 : i32
    %c0_i32_0 = arith.constant 0 : i32
    %c0_i32_1 = arith.constant 0 : i32
    return %c0_i32, %c0_i32_0 : i32, i32
  }
  func.func @transform_3(%arg0: i32) -> (i32, i32) {
    %c0_i32 = arith.constant 0 : i32
    %c0_i32_0 = arith.constant 0 : i32
    %c0_i32_1 = arith.constant 0 : i32
    return %c0_i32, %c0_i32_0 : i32, i32
  }
  func.func @transform_4(%arg0: i32) -> (i32, i32) {
    %c0_i32 = arith.constant 0 : i32
    %c0_i32_0 = arith.constant 0 : i32
    %c0_i32_1 = arith.constant 0 : i32
    return %c0_i32, %c0_i32_0 : i32, i32
  }
  func.func @transform_5(%arg0: i32) -> (i32, i32, i32) {
    %c0_i32 = arith.constant 0 : i32
    %c0_i32_0 = arith.constant 0 : i32
    %c0_i32_1 = arith.constant 0 : i32
    return %arg0, %c0_i32, %c0_i32_0 : i32, i32, i32
  }
}

module attributes {stable_mosaic.version = 11 : i64} {
  func.func @_fc_stack_kernel(%arg0: memref<2x400xf32, #tpu.memory_space<vmem>>, %arg1: memref<400x120xf32, #tpu.memory_space<vmem>>, %arg2: memref<1x120xf32, #tpu.memory_space<vmem>>, %arg3: memref<120x84xf32, #tpu.memory_space<vmem>>, %arg4: memref<1x84xf32, #tpu.memory_space<vmem>>, %arg5: memref<84x10xf32, #tpu.memory_space<vmem>>, %arg6: memref<1x10xf32, #tpu.memory_space<vmem>>, %arg7: memref<2x10xf32, #tpu.memory_space<vmem>>) attributes {dimension_semantics = [], scalar_prefetch = 0 : i64, scratch_operands = 0 : i64, tpu.core_type = #tpu.core_type<tc>} {
    %c0 = arith.constant 0 : index
    %c0_0 = arith.constant 0 : index
    %0 = vector.load %arg0[%c0, %c0_0] : memref<2x400xf32, #tpu.memory_space<vmem>>, vector<2x400xf32>
    %c0_1 = arith.constant 0 : index
    %c0_2 = arith.constant 0 : index
    %1 = vector.load %arg1[%c0_1, %c0_2] : memref<400x120xf32, #tpu.memory_space<vmem>>, vector<400x120xf32>
    %cst = arith.constant dense<0.000000e+00> : vector<2x120xf32>
    %2 = tpu.matmul %0, %1, %cst {dimension_numbers = #tpu.dot_dimension_numbers<[1], [0], [0], [1], [0, 0, 1, 1], [], []>} : vector<2x400xf32>, vector<400x120xf32>, vector<2x120xf32> -> vector<2x120xf32>
    %c0_3 = arith.constant 0 : index
    %c0_4 = arith.constant 0 : index
    %3 = vector.load %arg2[%c0_3, %c0_4] : memref<1x120xf32, #tpu.memory_space<vmem>>, vector<1x120xf32>
    %4 = vector.broadcast %3 : vector<1x120xf32> to vector<2x120xf32>
    %5 = arith.addf %2, %4 : vector<2x120xf32>
    %6 = math.tanh %5 : vector<2x120xf32>
    %c0_5 = arith.constant 0 : index
    %c0_6 = arith.constant 0 : index
    %7 = vector.load %arg3[%c0_5, %c0_6] : memref<120x84xf32, #tpu.memory_space<vmem>>, vector<120x84xf32>
    %cst_7 = arith.constant dense<0.000000e+00> : vector<2x84xf32>
    %8 = tpu.matmul %6, %7, %cst_7 {dimension_numbers = #tpu.dot_dimension_numbers<[1], [0], [0], [1], [0, 0, 1, 1], [], []>} : vector<2x120xf32>, vector<120x84xf32>, vector<2x84xf32> -> vector<2x84xf32>
    %c0_8 = arith.constant 0 : index
    %c0_9 = arith.constant 0 : index
    %9 = vector.load %arg4[%c0_8, %c0_9] : memref<1x84xf32, #tpu.memory_space<vmem>>, vector<1x84xf32>
    %10 = vector.broadcast %9 : vector<1x84xf32> to vector<2x84xf32>
    %11 = arith.addf %8, %10 : vector<2x84xf32>
    %12 = math.tanh %11 : vector<2x84xf32>
    %c0_10 = arith.constant 0 : index
    %c0_11 = arith.constant 0 : index
    %13 = vector.load %arg5[%c0_10, %c0_11] : memref<84x10xf32, #tpu.memory_space<vmem>>, vector<84x10xf32>
    %cst_12 = arith.constant dense<0.000000e+00> : vector<2x10xf32>
    %14 = tpu.matmul %12, %13, %cst_12 {dimension_numbers = #tpu.dot_dimension_numbers<[1], [0], [0], [1], [0, 0, 1, 1], [], []>} : vector<2x84xf32>, vector<84x10xf32>, vector<2x10xf32> -> vector<2x10xf32>
    %c0_13 = arith.constant 0 : index
    %c0_14 = arith.constant 0 : index
    %15 = vector.load %arg6[%c0_13, %c0_14] : memref<1x10xf32, #tpu.memory_space<vmem>>, vector<1x10xf32>
    %16 = vector.broadcast %15 : vector<1x10xf32> to vector<2x10xf32>
    %17 = arith.addf %14, %16 : vector<2x10xf32>
    %c0_15 = arith.constant 0 : index
    %c0_16 = arith.constant 0 : index
    %18 = vector.load %arg7[%c0_15, %c0_16] : memref<2x10xf32, #tpu.memory_space<vmem>>, vector<2x10xf32>
    tpu.vector_store %arg7[%c0_15, %c0_16], %17 {strides = array<i32>} : memref<2x10xf32, #tpu.memory_space<vmem>>, vector<2x10xf32>,
    return
  }
}

</mosaic_0001>

<llo_original>
// kernel: lenet5_forward.3
$region0: #{lenet5_forward.3}
  #allocation0 [shape = 'u32[]', space=smem, size = 0x4, offset = 0x4, fixed_abs, tag = 'smem constant byte address 0x4 - core index']
  #allocation1 [shape = 'u32[144,128]{1,0:T(1,128)}', space=vmem, size = 0x12000, scoped, tag = 'internal scratch']
  %s0 = inlined_call_operand.vmem [shape: f32[2,400], index: 0, kind: input, shape index: {}]
  %s1 = inlined_call_operand.vmem [shape: f32[400,120], index: 1, kind: input, shape index: {}]
  %s2 = inlined_call_operand.vmem [shape: f32[1,120], index: 2, kind: input, shape index: {}]
  %s3 = inlined_call_operand.vmem [shape: f32[120,84], index: 3, kind: input, shape index: {}]
  %s4 = inlined_call_operand.vmem [shape: f32[1,84], index: 4, kind: input, shape index: {}]
  %s5 = inlined_call_operand.vmem [shape: f32[84,10], index: 5, kind: input, shape index: {}]
  %s6 = inlined_call_operand.vmem [shape: f32[1,10], index: 6, kind: input, shape index: {}]
  %s7 = inlined_call_operand.hbm [shape: f32[2,10], index: 7, kind: output, shape index: {}]
  %s8 = sld [smem:[#allocation0]]
  $region38: #{lenet5_forward.3} parent=0
    _
  %s10 = ssub.s32 1, %s8
  %s11 = scalar_select 0, %s10, %s8
  $region1: #{lenet5_forward.3} parent=0
    #allocation2 [shape = 'u8[1024]{0}', space=vmem, size = 0x400, scoped, tag = 'output window, operand 0, single buffered']
    #allocation3 [shape = 's32[1]{0}', space=sflag, size = 0x4, scoped, tag = 'scoped memory for lenet5_forward.3']
    %12 = vsyncpa [#allocation3], 0
    // Predicated region
    $region2: #{lenet5_forward.3} parent=1 // pred_check
      _
    $region3: #{lenet5_forward.3} parent=1 // pred_check_branch
      %14 = sbr.rel (0) target = $region5
    $region4: #{lenet5_forward.3} parent=1 // pred_region
      _
    $region5: #{lenet5_forward.3} parent=1 // pred_fallthru
      _
    // Predicated region
    $region6: #{lenet5_forward.3} parent=1 // pred_check
      _
    $region7: #{lenet5_forward.3} parent=1 // pred_check_branch
      %16 = sbr.rel (0) target = $region9
    $region8: #{lenet5_forward.3} parent=1 // pred_region
      _
    $region9: #{lenet5_forward.3} parent=1 // pred_fallthru
      _
    // Predicated region
    $region10: #{lenet5_forward.3} parent=1 // pred_check
      _
    $region11: #{lenet5_forward.3} parent=1 // pred_check_branch
      %18 = sbr.rel (0) target = $region13
    $region12: #{lenet5_forward.3} parent=1 // pred_region
      _
    $region13: #{lenet5_forward.3} parent=1 // pred_fallthru
      _
    // Predicated region
    $region14: #{lenet5_forward.3} parent=1 // pred_check
      _
    $region15: #{lenet5_forward.3} parent=1 // pred_check_branch
      %20 = sbr.rel (0) target = $region17
    $region16: #{lenet5_forward.3} parent=1 // pred_region
      _
    $region17: #{lenet5_forward.3} parent=1 // pred_fallthru
      _
    // Predicated region
    $region18: #{lenet5_forward.3} parent=1 // pred_check
      _
    $region19: #{lenet5_forward.3} parent=1 // pred_check_branch
      %22 = sbr.rel (0) target = $region21
    $region20: #{lenet5_forward.3} parent=1 // pred_region
      _
    $region21: #{lenet5_forward.3} parent=1 // pred_fallthru
      _
    // Predicated region
    $region22: #{lenet5_forward.3} parent=1 // pred_check
      _
    $region23: #{lenet5_forward.3} parent=1 // pred_check_branch
      %24 = sbr.rel (0) target = $region25
    $region24: #{lenet5_forward.3} parent=1 // pred_region
      _
    $region25: #{lenet5_forward.3} parent=1 // pred_fallthru
      _
    // Predicated region
    $region26: #{lenet5_forward.3} parent=1 // pred_check
      _
    $region27: #{lenet5_forward.3} parent=1 // pred_check_branch
      %26 = sbr.rel (0) target = $region29
    $region28: #{lenet5_forward.3} parent=1 // pred_region
      _
    $region29: #{lenet5_forward.3} parent=1 // pred_fallthru
      _
    %v27 = vld [vmem:[%s0] sm:$0xff]
    %v28 = vld [vmem:[%s1] sm:$0xff]
    %v29 = vld [vmem:[%s1 + $0x8] sm:$0xff]
    %v30 = vld [vmem:[%s1 + $0x10] sm:$0xff]
    %v31 = vld [vmem:[%s1 + $0x18] sm:$0xff]
    %v32 = vld [vmem:[%s1 + $0x20] sm:$0xff]
    %v33 = vld [vmem:[%s1 + $0x28] sm:$0xff]
    %v34 = vld [vmem:[%s1 + $0x30] sm:$0xff]
    %v35 = vld [vmem:[%s1 + $0x38] sm:$0xff]
    %v36 = vld [vmem:[%s1 + $0x40] sm:$0xff]
    %v37 = vld [vmem:[%s1 + $0x48] sm:$0xff]
    %v38 = vld [vmem:[%s1 + $0x50] sm:$0xff]
    %v39 = vld [vmem:[%s1 + $0x58] sm:$0xff]
    %v40 = vld [vmem:[%s1 + $0x60] sm:$0xff]
    %v41 = vld [vmem:[%s1 + $0x68] sm:$0xff]
    %v42 = vld [vmem:[%s1 + $0x70] sm:$0xff]
    %v43 = vld [vmem:[%s1 + $0x78] sm:$0xff]
    %v44 = vld [vmem:[%s1 + $0x80] sm:$0xff]
    %v45 = vld [vmem:[%s1 + $0x88] sm:$0xff]
    %v46 = vld [vmem:[%s1 + $0x90] sm:$0xff]
    %v47 = vld [vmem:[%s1 + $0x98] sm:$0xff]
    %v48 = vld [vmem:[%s1 + $0xa0] sm:$0xff]
    %v49 = vld [vmem:[%s1 + $0xa8] sm:$0xff]
    %v50 = vld [vmem:[%s1 + $0xb0] sm:$0xff]
    %v51 = vld [vmem:[%s1 + $0xb8] sm:$0xff]
    %v52 = vld [vmem:[%s1 + $0xc0] sm:$0xff]
    %v53 = vld [vmem:[%s1 + $0xc8] sm:$0xff]
    %v54 = vld [vmem:[%s1 + $0xd0] sm:$0xff]
    %v55 = vld [vmem:[%s1 + $0xd8] sm:$0xff]
    %v56 = vld [vmem:[%s1 + $0xe0] sm:$0xff]
    %v57 = vld [vmem:[%s1 + $0xe8] sm:$0xff]
    %v58 = vld [vmem:[%s1 + $0xf0] sm:$0xff]
    %v59 = vld [vmem:[%s1 + $0xf8] sm:$0xff]
    %v60 = vld [vmem:[%s1 + $0x100] sm:$0xff]
    %v61 = vld [vmem:[%s1 + $0x108] sm:$0xff]
    %v62 = vld [vmem:[%s1 + $0x110] sm:$0xff]
    %v63 = vld [vmem:[%s1 + $0x118] sm:$0xff]
    %v64 = vld [vmem:[%s1 + $0x120] sm:$0xff]
    %v65 = vld [vmem:[%s1 + $0x128] sm:$0xff]
    %v66 = vld [vmem:[%s1 + $0x130] sm:$0xff]
    %v67 = vld [vmem:[%s1 + $0x138] sm:$0xff]
    %v68 = vld [vmem:[%s1 + $0x140] sm:$0xff]
    %v69 = vld [vmem:[%s1 + $0x148] sm:$0xff]
    %v70 = vld [vmem:[%s1 + $0x150] sm:$0xff]
    %v71 = vld [vmem:[%s1 + $0x158] sm:$0xff]
    %v72 = vld [vmem:[%s1 + $0x160] sm:$0xff]
    %v73 = vld [vmem:[%s1 + $0x168] sm:$0xff]
    %v74 = vld [vmem:[%s1 + $0x170] sm:$0xff]
    %v75 = vld [vmem:[%s1 + $0x178] sm:$0xff]
    %v76 = vld [vmem:[%s1 + $0x180] sm:$0xff]
    %v77 = vld [vmem:[%s1 + $0x188] sm:$0xff]
    %v78 = vld [vmem:[%s2] sm:$0x1]
    %v80 = vlaneseq
    %v81 = vshrl.u32 %v80, 7
    %v82 = vsub.s32 0, %v81
    %v83 = vrot.slane %v78, %v82
    %v86 = vcombine.high %v27, %v27
    %v88 = vunpack.c.l.s4 1983009808
    %v89 = vunpack.c.0.s8 %v88
    %v90 = vlaneseq
    %v91 = vshrl.u32 %v90, 7
    %v92 = vsub.s32 %v89, %v91
    %v93 = vrot.slane %v27, %v92
    %v95 = vunpack.c.l.s4 1983009808
    %v96 = vunpack.c.0.s8 %v95
    %v97 = vlaneseq
    %v98 = vshrl.u32 %v97, 7
    %v99 = vsub.s32 %v96, %v98
    %v100 = vrot.slane %v86, %v99
    %v101 = vcombine.high %v93, %v93
    %v102 = vcombine.high %v100, %v100
    %vm106 = vcmask 130048
    %v107 = vsel %vm106, %v102, 0
    %109 = vmatprep.subr.mxu0 0.0
    %110 = vmatpush1.msra.mxu0 %v28
    %111 = vmatprep.subr.mxu0 0.0
    %112 = vmatpush1.msra.mxu0 %v29
    %113 = vmatprep.subr.mxu0 0.0
    %114 = vmatpush1.msra.mxu0 %v30
    %115 = vmatprep.subr.mxu0 0.0
    %116 = vmatpush1.msra.mxu0 %v31
    %117 = vmatprep.subr.mxu0 0.0
    %118 = vmatpush1.msra.mxu0 %v32
    %119 = vmatprep.subr.mxu0 0.0
    %120 = vmatpush1.msra.mxu0 %v33
    %121 = vmatprep.subr.mxu0 0.0
    %122 = vmatpush1.msra.mxu0 %v34
    %123 = vmatprep.subr.mxu0 0.0
    %124 = vmatpush1.msra.mxu0 %v35
    %125 = vmatprep.subr.mxu0 0.0
    %126 = vmatpush1.msra.mxu0 %v36
    %127 = vmatprep.subr.mxu0 0.0
    %128 = vmatpush1.msra.mxu0 %v37
    %129 = vmatprep.subr.mxu0 0.0
    %130 = vmatpush1.msra.mxu0 %v38
    %131 = vmatprep.subr.mxu0 0.0
    %132 = vmatpush1.msra.mxu0 %v39
    %133 = vmatprep.subr.mxu0 0.0
    %134 = vmatpush1.msra.mxu0 %v40
    %135 = vmatprep.subr.mxu0 0.0
    %136 = vmatpush1.msra.mxu0 %v41
    %137 = vmatprep.subr.mxu0 0.0
    %138 = vmatpush1.msra.mxu0 %v42
    %139 = vmatprep.subr.mxu0 0.0
    %140 = vmatpush1.msra.mxu0 %v43
    %141 = vmatprep.subr.mxu0 0.0
    %142 = vmatpush1.msra.mxu0 %v44
    %143 = vmatprep.subr.mxu0 0.0
    %144 = vmatpush1.msra.mxu0 %v45
    %145 = vmatprep.subr.mxu0 0.0
    %146 = vmatpush1.msra.mxu0 %v46
    %147 = vmatprep.subr.mxu0 0.0
    %148 = vmatpush1.msra.mxu0 %v47
    %149 = vmatprep.subr.mxu0 0.0
    %150 = vmatpush1.msra.mxu0 %v48
    %151 = vmatprep.subr.mxu0 0.0
    %152 = vmatpush1.msra.mxu0 %v49
    %153 = vmatprep.subr.mxu0 0.0
    %154 = vmatpush1.msra.mxu0 %v50
    %155 = vmatprep.subr.mxu0 0.0
    %156 = vmatpush1.msra.mxu0 %v51
    %157 = vmatprep.subr.mxu0 0.0
    %158 = vmatpush1.msra.mxu0 %v52
    %159 = vmatprep.subr.mxu0 0.0
    %160 = vmatpush1.msra.mxu0 %v53
    %161 = vmatprep.subr.mxu0 0.0
    %162 = vmatpush1.msra.mxu0 %v54
    %163 = vmatprep.subr.mxu0 0.0
    %164 = vmatpush1.msra.mxu0 %v55
    %165 = vmatprep.subr.mxu0 0.0
    %166 = vmatpush1.msra.mxu0 %v56
    %167 = vmatprep.subr.mxu0 0.0
    %168 = vmatpush1.msra.mxu0 %v57
    %169 = vmatprep.subr.mxu0 0.0
    %170 = vmatpush1.msra.mxu0 %v58
    %171 = vmatprep.subr.mxu0 0.0
    %172 = vmatpush1.msra.mxu0 %v59
    %173 = vmatprep.mubr.f32.mxu0 %v101
    %174 = vmatmul.mubr.f32.gmra.mrb[0].mxu0 %v93
    %v175 = vpop.f32.mrb[0].mxu0
    %v176 = vadd.f32 %v83, %v175
    %v177 = vpop.f32.mrb[0].mxu0
    %178 = vdwg.mxu0
    %179 = vmatprep.subr.mxu0 0.0
    %180 = vmatpush1.msra.mxu0 %v60
    %181 = vmatprep.subr.mxu0 0.0
    %182 = vmatpush1.msra.mxu0 %v61
    %183 = vmatprep.subr.mxu0 0.0
    %184 = vmatpush1.msra.mxu0 %v62
    %185 = vmatprep.subr.mxu0 0.0
    %186 = vmatpush1.msra.mxu0 %v63
    %187 = vmatprep.subr.mxu0 0.0
    %188 = vmatpush1.msra.mxu0 %v64
    %189 = vmatprep.subr.mxu0 0.0
    %190 = vmatpush1.msra.mxu0 %v65
    %191 = vmatprep.subr.mxu0 0.0
    %192 = vmatpush1.msra.mxu0 %v66
    %193 = vmatprep.subr.mxu0 0.0
    %194 = vmatpush1.msra.mxu0 %v67
    %195 = vmatprep.subr.mxu0 0.0
    %196 = vmatpush1.msra.mxu0 %v68
    %197 = vmatprep.subr.mxu0 0.0
    %198 = vmatpush1.msra.mxu0 %v69
    %199 = vmatprep.subr.mxu0 0.0
    %200 = vmatpush1.msra.mxu0 %v70
    %201 = vmatprep.subr.mxu0 0.0
    %202 = vmatpush1.msra.mxu0 %v71
    %203 = vmatprep.subr.mxu0 0.0
    %204 = vmatpush1.msra.mxu0 %v72
    %205 = vmatprep.subr.mxu0 0.0
    %206 = vmatpush1.msra.mxu0 %v73
    %207 = vmatprep.subr.mxu0 0.0
    %208 = vmatpush1.msra.mxu0 %v74
    %209 = vmatprep.subr.mxu0 0.0
    %210 = vmatpush1.msra.mxu0 %v75
    %211 = vmatprep.subr.mxu0 0.0
    %212 = vmatpush1.msra.mxu0 %v76
    %213 = vmatprep.subr.mxu0 0.0
    %214 = vmatpush1.msra.mxu0 %v77
    %215 = vmatprep.subr.mxu0 0.0
    %216 = vmatpush1.msra.mxu0 0.0
    %217 = vmatprep.subr.mxu0 0.0
    %218 = vmatpush1.msra.mxu0 0.0
    %219 = vmatprep.subr.mxu0 0.0
    %220 = vmatpush1.msra.mxu0 0.0
    %221 = vmatprep.subr.mxu0 0.0
    %222 = vmatpush1.msra.mxu0 0.0
    %223 = vmatprep.subr.mxu0 0.0
    %224 = vmatpush1.msra.mxu0 0.0
    %225 = vmatprep.subr.mxu0 0.0
    %226 = vmatpush1.msra.mxu0 0.0
    %227 = vmatprep.subr.mxu0 0.0
    %228 = vmatpush1.msra.mxu0 0.0
    %229 = vmatprep.subr.mxu0 0.0
    %230 = vmatpush1.msra.mxu0 0.0
    %231 = vmatprep.subr.mxu0 0.0
    %232 = vmatpush1.msra.mxu0 0.0
    %233 = vmatprep.subr.mxu0 0.0
    %234 = vmatpush1.msra.mxu0 0.0
    %235 = vmatprep.subr.mxu0 0.0
    %236 = vmatpush1.msra.mxu0 0.0
    %237 = vmatprep.subr.mxu0 0.0
    %238 = vmatpush1.msra.mxu0 0.0
    %239 = vmatprep.subr.mxu0 0.0
    %240 = vmatpush1.msra.mxu0 0.0
    %241 = vmatprep.subr.mxu0 0.0
    %242 = vmatpush1.msra.mxu0 0.0
    %243 = vmatprep.mubr.f32.mxu0 %v107
    %244 = vmatmul.mubr.f32.gmra.mrb[0].mxu0 %v100
    %v245 = vpop.f32.mrb[0].mxu0
    %v246 = vadd.f32 %v176, %v245
    %v247 = vpop.f32.mrb[0].mxu0
    %248 = vdwg.mxu0
    %v249 = vtanh.pop %v246
    %v250 = vld [vmem:[%s3] sm:$0xff]
    %v251 = vld [vmem:[%s3 + $0x8] sm:$0xff]
    %v252 = vld [vmem:[%s3 + $0x10] sm:$0xff]
    %v253 = vld [vmem:[%s3 + $0x18] sm:$0xff]
    %v254 = vld [vmem:[%s3 + $0x20] sm:$0xff]
    %v255 = vld [vmem:[%s3 + $0x28] sm:$0xff]
    %v256 = vld [vmem:[%s3 + $0x30] sm:$0xff]
    %v257 = vld [vmem:[%s3 + $0x38] sm:$0xff]
    %v258 = vld [vmem:[%s3 + $0x40] sm:$0xff]
    %v259 = vld [vmem:[%s3 + $0x48] sm:$0xff]
    %v260 = vld [vmem:[%s3 + $0x50] sm:$0xff]
    %v261 = vld [vmem:[%s3 + $0x58] sm:$0xff]
    %v262 = vld [vmem:[%s3 + $0x60] sm:$0xff]
    %v263 = vld [vmem:[%s3 + $0x68] sm:$0xff]
    %v264 = vld [vmem:[%s3 + $0x70] sm:$0xff]
    %v265 = vld [vmem:[%s4] sm:$0x1]
    %v267 = vlaneseq
    %v268 = vshrl.u32 %v267, 7
    %v269 = vsub.s32 0, %v268
    %v270 = vrot.slane %v265, %v269
    %vm272 = vcmask 982016
    %v274 = vsel %vm272, %v249, 0
    %276 = vmatprep.subr.mxu0 0.0
    %277 = vmatpush1.msra.mxu0 %v250
    %278 = vmatprep.subr.mxu0 0.0
    %279 = vmatpush1.msra.mxu0 %v251
    %280 = vmatprep.subr.mxu0 0.0
    %281 = vmatpush1.msra.mxu0 %v252
    %282 = vmatprep.subr.mxu0 0.0
    %283 = vmatpush1.msra.mxu0 %v253
    %284 = vmatprep.subr.mxu0 0.0
    %285 = vmatpush1.msra.mxu0 %v254
    %286 = vmatprep.subr.mxu0 0.0
    %287 = vmatpush1.msra.mxu0 %v255
    %288 = vmatprep.subr.mxu0 0.0
    %289 = vmatpush1.msra.mxu0 %v256
    %290 = vmatprep.subr.mxu0 0.0
    %291 = vmatpush1.msra.mxu0 %v257
    %292 = vmatprep.subr.mxu0 0.0
    %293 = vmatpush1.msra.mxu0 %v258
    %294 = vmatprep.subr.mxu0 0.0
    %295 = vmatpush1.msra.mxu0 %v259
    %296 = vmatprep.subr.mxu0 0.0
    %297 = vmatpush1.msra.mxu0 %v260
    %298 = vmatprep.subr.mxu0 0.0
    %299 = vmatpush1.msra.mxu0 %v261
    %300 = vmatprep.subr.mxu0 0.0
    %301 = vmatpush1.msra.mxu0 %v262
    %302 = vmatprep.subr.mxu0 0.0
    %303 = vmatpush1.msra.mxu0 %v263
    %304 = vmatprep.subr.mxu0 0.0
    %305 = vmatpush1.msra.mxu0 %v264
    %306 = vmatprep.subr.mxu0 0.0
    %307 = vmatpush1.msra.mxu0 0.0
    %308 = vmatprep.subr.mxu0 0.0
    %309 = vmatpush1.msra.mxu0 0.0
    %310 = vmatprep.subr.mxu0 0.0
    %311 = vmatpush1.msra.mxu0 0.0
    %312 = vmatprep.subr.mxu0 0.0
    %313 = vmatpush1.msra.mxu0 0.0
    %314 = vmatprep.subr.mxu0 0.0
    %315 = vmatpush1.msra.mxu0 0.0
    %316 = vmatprep.subr.mxu0 0.0
    %317 = vmatpush1.msra.mxu0 0.0
    %318 = vmatprep.subr.mxu0 0.0
    %319 = vmatpush1.msra.mxu0 0.0
    %320 = vmatprep.subr.mxu0 0.0
    %321 = vmatpush1.msra.mxu0 0.0
    %322 = vmatprep.subr.mxu0 0.0
    %323 = vmatpush1.msra.mxu0 0.0
    %324 = vmatprep.subr.mxu0 0.0
    %325 = vmatpush1.msra.mxu0 0.0
    %326 = vmatprep.subr.mxu0 0.0
    %327 = vmatpush1.msra.mxu0 0.0
    %328 = vmatprep.subr.mxu0 0.0
    %329 = vmatpush1.msra.mxu0 0.0
    %330 = vmatprep.subr.mxu0 0.0
    %331 = vmatpush1.msra.mxu0 0.0
    %332 = vmatprep.subr.mxu0 0.0
    %333 = vmatpush1.msra.mxu0 0.0
    %334 = vmatprep.subr.mxu0 0.0
    %335 = vmatpush1.msra.mxu0 0.0
    %336 = vmatprep.subr.mxu0 0.0
    %337 = vmatpush1.msra.mxu0 0.0
    %338 = vmatprep.subr.mxu0 0.0
    %339 = vmatpush1.msra.mxu0 0.0
    %340 = vmatprep.mubr.f32.mxu0 0.0
    %341 = vmatmul.mubr.f32.gmra.mrb[0].mxu0 %v274
    %v342 = vpop.f32.mrb[0].mxu0
    %v343 = vadd.f32 %v270, %v342
    %v344 = vpop.f32.mrb[0].mxu0
    %345 = vdwg.mxu0
    %v346 = vtanh.pop %v343
    %v347 = vld [vmem:[%s5] sm:$0xff]
    %v348 = vld [vmem:[%s5 + $0x8] sm:$0xff]
    %v349 = vld [vmem:[%s5 + $0x10] sm:$0xff]
    %v350 = vld [vmem:[%s5 + $0x18] sm:$0xff]
    %v351 = vld [vmem:[%s5 + $0x20] sm:$0xff]
    %v352 = vld [vmem:[%s5 + $0x28] sm:$0xff]
    %v353 = vld [vmem:[%s5 + $0x30] sm:$0xff]
    %v354 = vld [vmem:[%s5 + $0x38] sm:$0xff]
    %v355 = vld [vmem:[%s5 + $0x40] sm:$0xff]
    %v356 = vld [vmem:[%s5 + $0x48] sm:$0xff]
    %v357 = vld [vmem:[%s5 + $0x50] sm:$0xf]
    %v358 = vld [vmem:[%s6] sm:$0x1]
    %v360 = vlaneseq
    %v361 = vshrl.u32 %v360, 7
    %v362 = vsub.s32 0, %v361
    %v363 = vrot.slane %v358, %v362
    %vm365 = vcmask 687104
    %v367 = vsel %vm365, %v346, 0
    %vm369 = vcmask 1043456
    %v371 = vsel %vm369, %v357, 0
    %373 = vmatprep.subr.mxu0 0.0
    %374 = vmatpush1.msra.mxu0 %v347
    %375 = vmatprep.subr.mxu0 0.0
    %376 = vmatpush1.msra.mxu0 %v348
    %377 = vmatprep.subr.mxu0 0.0
    %378 = vmatpush1.msra.mxu0 %v349
    %379 = vmatprep.subr.mxu0 0.0
    %380 = vmatpush1.msra.mxu0 %v350
    %381 = vmatprep.subr.mxu0 0.0
    %382 = vmatpush1.msra.mxu0 %v351
    %383 = vmatprep.subr.mxu0 0.0
    %384 = vmatpush1.msra.mxu0 %v352
    %385 = vmatprep.subr.mxu0 0.0
    %386 = vmatpush1.msra.mxu0 %v353
    %387 = vmatprep.subr.mxu0 0.0
    %388 = vmatpush1.msra.mxu0 %v354
    %389 = vmatprep.subr.mxu0 0.0
    %390 = vmatpush1.msra.mxu0 %v355
    %391 = vmatprep.subr.mxu0 0.0
    %392 = vmatpush1.msra.mxu0 %v356
    %393 = vmatprep.subr.mxu0 0.0
    %394 = vmatpush1.msra.mxu0 %v371
    %395 = vmatprep.subr.mxu0 0.0
    %396 = vmatpush1.msra.mxu0 0.0
    %397 = vmatprep.subr.mxu0 0.0
    %398 = vmatpush1.msra.mxu0 0.0
    %399 = vmatprep.subr.mxu0 0.0
    %400 = vmatpush1.msra.mxu0 0.0
    %401 = vmatprep.subr.mxu0 0.0
    %402 = vmatpush1.msra.mxu0 0.0
    %403 = vmatprep.subr.mxu0 0.0
    %404 = vmatpush1.msra.mxu0 0.0
    %405 = vmatprep.subr.mxu0 0.0
    %406 = vmatpush1.msra.mxu0 0.0
    %407 = vmatprep.subr.mxu0 0.0
    %408 = vmatpush1.msra.mxu0 0.0
    %409 = vmatprep.subr.mxu0 0.0
    %410 = vmatpush1.msra.mxu0 0.0
    %411 = vmatprep.subr.mxu0 0.0
    %412 = vmatpush1.msra.mxu0 0.0
    %413 = vmatprep.subr.mxu0 0.0
    %414 = vmatpush1.msra.mxu0 0.0
    %415 = vmatprep.subr.mxu0 0.0
    %416 = vmatpush1.msra.mxu0 0.0
    %417 = vmatprep.subr.mxu0 0.0
    %418 = vmatpush1.msra.mxu0 0.0
    %419 = vmatprep.subr.mxu0 0.0
    %420 = vmatpush1.msra.mxu0 0.0
    %421 = vmatprep.subr.mxu0 0.0
    %422 = vmatpush1.msra.mxu0 0.0
    %423 = vmatprep.subr.mxu0 0.0
    %424 = vmatpush1.msra.mxu0 0.0
    %425 = vmatprep.subr.mxu0 0.0
    %426 = vmatpush1.msra.mxu0 0.0
    %427 = vmatprep.subr.mxu0 0.0
    %428 = vmatpush1.msra.mxu0 0.0
    %429 = vmatprep.subr.mxu0 0.0
    %430 = vmatpush1.msra.mxu0 0.0
    %431 = vmatprep.subr.mxu0 0.0
    %432 = vmatpush1.msra.mxu0 0.0
    %433 = vmatprep.subr.mxu0 0.0
    %434 = vmatpush1.msra.mxu0 0.0
    %435 = vmatprep.subr.mxu0 0.0
    %436 = vmatpush1.msra.mxu0 0.0
    %437 = vmatprep.mubr.f32.mxu0 0.0
    %438 = vmatmul.mubr.f32.gmra.mrb[0].mxu0 %v367
    %v439 = vpop.f32.mrb[0].mxu0
    %v440 = vadd.f32 %v363, %v439
    %v441 = vpop.f32.mrb[0].mxu0
    %442 = vdwg.mxu0
    %vm443 = vcmask 74752
    %444 = vst.msk [vmem:[#allocation2] sm:$0x3] %vm443, %v440
    // Predicated region
    $region30: #{lenet5_forward.3} parent=1 // pred_check
      _
    $region31: #{lenet5_forward.3} parent=1 // pred_check_branch
      %446 = sbr.rel (0) target = $region33
    $region32: #{lenet5_forward.3} parent=1 // pred_region
      %s448 = ssub.s32 32, 32
      %449 = vsyncadd [#allocation3], %s448
      %s451 = sshll.u32 [#allocation2], 4
      %s452 = int_to_ptr.vmem [resolvable:$true] %s451
      %454 = dma.vmem_to_hbm [thread:$0]  %s452, 32, %s7, [#allocation3]
    $region33: #{lenet5_forward.3} parent=1 // pred_fallthru
      _
    // Predicated region
    $region34: #{lenet5_forward.3} parent=1 // pred_check
      _
    $region35: #{lenet5_forward.3} parent=1 // pred_check_branch
      %456 = sbr.rel (0) target = $region37
    $region36: #{lenet5_forward.3} parent=1 // pred_region
      %457 = dma.done [#allocation3], 32
    $region37: #{lenet5_forward.3} parent=1 // pred_fallthru
      _
    %458 = vsyncpa [#allocation3], 1

// kernel: lenet5_forward.2
$region0: #{lenet5_forward.2}
  #allocation0 [shape = 'u32[]', space=smem, size = 0x4, offset = 0x4, fixed_abs, tag = 'smem constant byte address 0x4 - core index']
  #allocation1 [shape = 'u32[144,128]{1,0:T(1,128)}', space=vmem, size = 0x12000, scoped, tag = 'internal scratch']
  #allocation2 [shape = 'f32[896,6]{1,0:T(8,128)}', space=vmem, size = 0x70000, scoped, tag = 'scratch operand']
  #allocation3 [shape = 'f32[240,6]{1,0:T(8,128)}', space=vmem, size = 0x1e000, scoped, tag = 'scratch operand']
  #allocation4 [shape = 'f32[160,16]{1,0:T(8,128)}', space=vmem, size = 0x14000, scoped, tag = 'scratch operand']
  %s0 = inlined_call_operand.vmem [shape: f32[2,1,1056], index: 0, kind: input, shape index: {}]
  %s1 = inlined_call_operand.vmem [shape: f32[32,6], index: 1, kind: input, shape index: {}]
  %s2 = inlined_call_operand.vmem [shape: f32[1,6], index: 2, kind: input, shape index: {}]
  %s3 = inlined_call_operand.vmem [shape: f32[150,16], index: 3, kind: input, shape index: {}]
  %s4 = inlined_call_operand.vmem [shape: f32[1,16], index: 4, kind: input, shape index: {}]
  %s5 = inlined_call_operand.vmem [shape: f32[2,25,16], index: 5, kind: output, shape index: {}]
  %s6 = sld [smem:[#allocation0]]
  $region53: #{lenet5_forward.2} parent=0
    _
  %s8 = ssub.s32 1, %s6
  %s9 = scalar_select 0, %s8, %s6
  loop: start=0, step=1, limit=4
  $region2: #{lenet5_forward.2} parent=0 // loop_pre_header
    _
  $region3: #{lenet5_forward.2} parent=0 // loop_header
    %s11 = sphi 0, %s15
    %p12 = scmp.ge.s32.totalorder %s11, 4
    %s21 = sphi 0, %s23
    %s24 = sphi 0, %s21
    %s25 = sphi 0, %s24
    %s41 = sphi 0, %s25
    %s45 = sphi 0, %s45
    %s47 = sphi 0, %s45
    %s48 = sphi 0, %s47
    %s62 = sphi 0, %s48
    %s66 = sphi 0, %s66
    %s68 = sphi 0, %s66
    %s69 = sphi 0, %s68
    %s83 = sphi 0, %s69
    %s87 = sphi 0, %s87
    %s89 = sphi 0, %s87
    %s90 = sphi 0, %s89
    %s104 = sphi 0, %s90
    %s108 = sphi 0, %s108
    %s110 = sphi 0, %s108
    %s111 = sphi 0, %s110
    %s125 = sphi 0, %s111
    %s131 = sphi 0, %s133
    %s134 = sphi 0, %s131
    %s135 = sphi 0, %s134
    %s151 = sphi 0, %s135
  $region4: #{lenet5_forward.2} parent=0 // loop_header_branch
    %14 = sbr.rel (%p12) target = $region8
  $region5: #{lenet5_forward.2} parent=0 // loop_body
    %s16 = ssub.s32 %s11, 1
    %s17 = ssub.s32 %s11, 2
    %s18 = sadd.s32 %s11, 1
    %s19 = ssub.s32 %s11, %s18
    %p20 = scmp.eq.s32.totalorder %s19, 0
    %s22 = sadd.s32 %s21, 1
    %s23 = scalar_select %p20, %s21, %s22
    %p26 = pneg %p20
    %p27 = scmp.eq.s32.totalorder %s11, 1
    %p28 = por %p26, %p27
    %p29 = scmp.ne.s32.totalorder %s21, %s24
    %p30 = scmp.eq.s32.totalorder %s11, 0
    %p31 = por %p29, %p30
    %p32 = scmp.ne.s32.totalorder %s21, %s24
    %p33 = scmp.eq.s32.totalorder %s16, 1
    %p34 = por %p32, %p33
    %p35 = scmp.ne.s32.totalorder %s24, %s25
    %p36 = scmp.eq.s32.totalorder %s16, 0
    %p37 = por %p35, %p36
    %p38 = scmp.ne.s32.totalorder %s24, %s25
    %p39 = scmp.eq.s32.totalorder %s17, 1
    %p40 = por %p38, %p39
    %p42 = scmp.ne.s32.totalorder %s25, %s41
    %p43 = scmp.eq.s32.totalorder %s17, 0
    %p44 = por %p42, %p43
    %s46 = sadd.s32 %s45, 1
    %p49 = scmp.eq.s32.totalorder %s11, 1
    %p50 = scmp.ne.s32.totalorder %s45, %s47
    %p51 = scmp.eq.s32.totalorder %s11, 0
    %p52 = por %p50, %p51
    %p53 = scmp.ne.s32.totalorder %s45, %s47
    %p54 = scmp.eq.s32.totalorder %s16, 1
    %p55 = por %p53, %p54
    %p56 = scmp.ne.s32.totalorder %s47, %s48
    %p57 = scmp.eq.s32.totalorder %s16, 0
    %p58 = por %p56, %p57
    %p59 = scmp.ne.s32.totalorder %s47, %s48
    %p60 = scmp.eq.s32.totalorder %s17, 1
    %p61 = por %p59, %p60
    %p63 = scmp.ne.s32.totalorder %s48, %s62
    %p64 = scmp.eq.s32.totalorder %s17, 0
    %p65 = por %p63, %p64
    %s67 = sadd.s32 %s66, 1
    %p70 = scmp.eq.s32.totalorder %s11, 1
    %p71 = scmp.ne.s32.totalorder %s66, %s68
    %p72 = scmp.eq.s32.totalorder %s11, 0
    %p73 = por %p71, %p72
    %p74 = scmp.ne.s32.totalorder %s66, %s68
    %p75 = scmp.eq.s32.totalorder %s16, 1
    %p76 = por %p74, %p75
    %p77 = scmp.ne.s32.totalorder %s68, %s69
    %p78 = scmp.eq.s32.totalorder %s16, 0
    %p79 = por %p77, %p78
    %p80 = scmp.ne.s32.totalorder %s68, %s69
    %p81 = scmp.eq.s32.totalorder %s17, 1
    %p82 = por %p80, %p81
    %p84 = scmp.ne.s32.totalorder %s69, %s83
    %p85 = scmp.eq.s32.totalorder %s17, 0
    %p86 = por %p84, %p85
    %s88 = sadd.s32 %s87, 1
    %p91 = scmp.eq.s32.totalorder %s11, 1
    %p92 = scmp.ne.s32.totalorder %s87, %s89
    %p93 = scmp.eq.s32.totalorder %s11, 0
    %p94 = por %p92, %p93
    %p95 = scmp.ne.s32.totalorder %s87, %s89
    %p96 = scmp.eq.s32.totalorder %s16, 1
    %p97 = por %p95, %p96
    %p98 = scmp.ne.s32.totalorder %s89, %s90
    %p99 = scmp.eq.s32.totalorder %s16, 0
    %p100 = por %p98, %p99
    %p101 = scmp.ne.s32.totalorder %s89, %s90
    %p102 = scmp.eq.s32.totalorder %s17, 1
    %p103 = por %p101, %p102
    %p105 = scmp.ne.s32.totalorder %s90, %s104
    %p106 = scmp.eq.s32.totalorder %s17, 0
    %p107 = por %p105, %p106
    %s109 = sadd.s32 %s108, 1
    %p112 = scmp.eq.s32.totalorder %s11, 1
    %p113 = scmp.ne.s32.totalorder %s108, %s110
    %p114 = scmp.eq.s32.totalorder %s11, 0
    %p115 = por %p113, %p114
    %p116 = scmp.ne.s32.totalorder %s108, %s110
    %p117 = scmp.eq.s32.totalorder %s16, 1
    %p118 = por %p116, %p117
    %p119 = scmp.ne.s32.totalorder %s110, %s111
    %p120 = scmp.eq.s32.totalorder %s16, 0
    %p121 = por %p119, %p120
    %p122 = scmp.ne.s32.totalorder %s110, %s111
    %p123 = scmp.eq.s32.totalorder %s17, 1
    %p124 = por %p122, %p123
    %p126 = scmp.ne.s32.totalorder %s111, %s125
    %p127 = scmp.eq.s32.totalorder %s17, 0
    %p128 = por %p126, %p127
    %s129 = ssub.s32 %s11, %s18
    %p130 = scmp.eq.s32.totalorder %s129, 0
    %s132 = sadd.s32 %s131, 1
    %s133 = scalar_select %p130, %s131, %s132
    %p136 = pneg %p130
    %p137 = scmp.eq.s32.totalorder %s11, 1
    %p138 = por %p136, %p137
    %p139 = scmp.ne.s32.totalorder %s131, %s134
    %p140 = scmp.eq.s32.totalorder %s11, 0
    %p141 = por %p139, %p140
    %p142 = scmp.ne.s32.totalorder %s131, %s134
    %p143 = scmp.eq.s32.totalorder %s16, 1
    %p144 = por %p142, %p143
    %p145 = scmp.ne.s32.totalorder %s134, %s135
    %p146 = scmp.eq.s32.totalorder %s16, 0
    %p147 = por %p145, %p146
    %p148 = scmp.ne.s32.totalorder %s134, %s135
    %p149 = scmp.eq.s32.totalorder %s17, 1
    %p150 = por %p148, %p149
    %p152 = scmp.ne.s32.totalorder %s135, %s151
    %p153 = scmp.eq.s32.totalorder %s17, 0
    %p154 = por %p152, %p153
    %p155 = scmp.le.s32.totalorder 1, %s11
    %p156 = scmp.lt.s32.totalorder %s11, 3
    %p157 = pnand %p155, %p156
    %p158 = pneg %p157
    // Predicated region
    $region9: #{lenet5_forward.2} parent=5 // pred_check
      _
    $region10: #{lenet5_forward.2} parent=5 // pred_check_branch
      %160 = sbr.rel (%p157) target = $region12
    $region11: #{lenet5_forward.2} parent=5 // pred_region
      %s161 = ssub.s32 %s11, 1
      // Predicated region
      $region13: #{lenet5_forward.2} parent=11 // pred_check
        %p162 = pneg %p58
      $region14: #{lenet5_forward.2} parent=11 // pred_check_branch
        %164 = sbr.rel (%p162) target = $region16
      $region15: #{lenet5_forward.2} parent=11 // pred_region
        _
      $region16: #{lenet5_forward.2} parent=11 // pred_fallthru
        _
      // Predicated region
      $region17: #{lenet5_forward.2} parent=11 // pred_check
        %p165 = pneg %p79
      $region18: #{lenet5_forward.2} parent=11 // pred_check_branch
        %167 = sbr.rel (%p165) target = $region20
      $region19: #{lenet5_forward.2} parent=11 // pred_region
        _
      $region20: #{lenet5_forward.2} parent=11 // pred_fallthru
        _
      // Predicated region
      $region21: #{lenet5_forward.2} parent=11 // pred_check
        %p168 = pneg %p100
      $region22: #{lenet5_forward.2} parent=11 // pred_check_branch
        %170 = sbr.rel (%p168) target = $region24
      $region23: #{lenet5_forward.2} parent=11 // pred_region
        _
      $region24: #{lenet5_forward.2} parent=11 // pred_fallthru
        _
      // Predicated region
      $region25: #{lenet5_forward.2} parent=11 // pred_check
        %p171 = pneg %p121
      $region26: #{lenet5_forward.2} parent=11 // pred_check_branch
        %173 = sbr.rel (%p171) target = $region28
      $region27: #{lenet5_forward.2} parent=11 // pred_region
        _
      $region28: #{lenet5_forward.2} parent=11 // pred_fallthru
        _
    $region12: #{lenet5_forward.2} parent=5 // pred_fallthru
      _
    %p174 = scmp.lt.s32.totalorder %s11, 2
    // Predicated region
    $region29: #{lenet5_forward.2} parent=5 // pred_check
      %p175 = pneg %p174
    $region30: #{lenet5_forward.2} parent=5 // pred_check_branch
      %177 = sbr.rel (%p175) target = $region32
    $region31: #{lenet5_forward.2} parent=5 // pred_region
      // Predicated region
      $region33: #{lenet5_forward.2} parent=31 // pred_check
        %p178 = pneg %p31
      $region34: #{lenet5_forward.2} parent=31 // pred_check_branch
        %180 = sbr.rel (%p178) target = $region36
      $region35: #{lenet5_forward.2} parent=31 // pred_region
        %p181 = scmp.lt.s32.totalorder %s11, 1
        %s182 = scalar_select %p181, %s11, 1
        %s183 = smul.addr %s182, 9
        %s184 = scalar_lea.vmem %s0, %s183
      $region36: #{lenet5_forward.2} parent=31 // pred_fallthru
        _
    $region32: #{lenet5_forward.2} parent=5 // pred_fallthru
      _
    %p185 = scmp.le.s32.totalorder 1, %s11
    %p186 = scmp.lt.s32.totalorder %s11, 3
    %p187 = pnand %p185, %p186
    %p188 = pneg %p187
    // Predicated region
    $region37: #{lenet5_forward.2} parent=5 // pred_check
      _
    $region38: #{lenet5_forward.2} parent=5 // pred_check_branch
      %190 = sbr.rel (%p187) target = $region40
    $region39: #{lenet5_forward.2} parent=5 // pred_region
      %s191 = ssub.s32 %s11, 1
      %p192 = scmp.lt.s32.totalorder %s16, 1
      %s193 = scalar_select %p192, %s16, 1
      %s194 = smul.addr %s193, 9
      %s195 = scalar_lea.vmem %s0, %s194
      %p196 = pneg %p37
      %p197 = pneg %p34
      %p198 = pneg %p58
      %p199 = pneg %p55
      %p200 = pneg %p79
      %p201 = pneg %p76
      %p202 = pneg %p100
      %p203 = pneg %p97
      %p204 = pneg %p121
      %p205 = pneg %p118
      %p206 = pneg %p147
      %p207 = pneg %p144
      %p208 = scmp.lt.s32.totalorder %s16, 1
      %s209 = scalar_select %p208, %s16, 1
      %s210 = smul.addr %s209, 4
      %s211 = smul.addr %s210, 8
      %s212 = scalar_lea.vmem %s5, %s211
      %p213 = scmp.lt.s32.totalorder %s16, 1
      %s214 = scalar_select %p213, %s16, 1
      %s215 = smul.addr %s214, 9
      %s216 = scalar_lea.vmem %s0, %s215
      %p217 = scmp.lt.s32.totalorder %s16, 1
      %s218 = scalar_select %p217, %s16, 1
      %s219 = smul.addr %s218, 4
      %s220 = smul.addr %s219, 8
      %s221 = scalar_lea.vmem %s5, %s220
      %v222 = vld [vmem:[%s216] sm:$0xff]
      %v223 = vld [vmem:[%s216 + $0x1] sm:$0xff]
      %v225 = vlaneseq
      %v226 = vshrl.u32 %v225, 7
      %v227 = vsub.s32 0, %v226
      %v228 = vrot.slane %v222, %v227
      %v229 = vlaneseq
      %v230 = vshrl.u32 %v229, 7
      %v231 = vsub.s32 1, %v230
      %v232 = vrot.slane %v222, %v231
      %v233 = vlaneseq
      %v234 = vshrl.u32 %v233, 7
      %v235 = vsub.s32 2, %v234
      %v236 = vrot.slane %v222, %v235
      %v237 = vlaneseq
      %v238 = vshrl.u32 %v237, 7
      %v239 = vsub.s32 3, %v238
      %v240 = vrot.slane %v222, %v239
      %v241 = vlaneseq
      %v242 = vshrl.u32 %v241, 7
      %v243 = vsub.s32 4, %v242
      %v244 = vrot.slane %v222, %v243
      %v245 = vlaneseq
      %v246 = vshrl.u32 %v245, 7
      %v247 = vsub.s32 5, %v246
      %v248 = vrot.slane %v222, %v247
      %v249 = vlaneseq
      %v250 = vshrl.u32 %v249, 7
      %v251 = vsub.s32 6, %v250
      %v252 = vrot.slane %v222, %v251
      %v260 = vlaneseq
      %v261 = vshrl.u32 %v260, 7
      %v262 = vsub.s32 7, %v261
      %v263 = vrot.slane %v222, %v262
      %264 = vrot.lane.b32.xlu0 %v228, 127
      %v265 = vpop.permute.xlu0 %264
      %266 = vrot.lane.b32.xlu0 %v232, 127
      %v267 = vpop.permute.xlu0 %266
      %268 = vrot.lane.b32.xlu0 %v236, 127
      %v269 = vpop.permute.xlu0 %268
      %270 = vrot.lane.b32.xlu0 %v240, 127
      %v271 = vpop.permute.xlu0 %270
      %272 = vrot.lane.b32.xlu0 %v244, 127
      %v273 = vpop.permute.xlu0 %272
      %274 = vrot.lane.b32.xlu0 %v248, 127
      %v275 = vpop.permute.xlu0 %274
      %276 = vrot.lane.b32.xlu0 %v252, 127
      %v277 = vpop.permute.xlu0 %276
      %278 = vrot.lane.b32.xlu0 %v263, 127
      %v279 = vpop.permute.xlu0 %278
      %vm280 = vcmask 1039360
      %v281 = vsel %vm280, %v265, %v267
      %v282 = vsel %vm280, %v267, %v269
      %v283 = vsel %vm280, %v269, %v271
      %v284 = vsel %vm280, %v271, %v273
      %v285 = vsel %vm280, %v273, %v275
      %v286 = vsel %vm280, %v275, %v277
      %v287 = vsel %vm280, %v277, %v279
      %295 = vrot.lane.b32.xlu0 %v228, 126
      %v296 = vpop.permute.xlu0 %295
      %297 = vrot.lane.b32.xlu0 %v232, 126
      %v298 = vpop.permute.xlu0 %297
      %299 = vrot.lane.b32.xlu0 %v236, 126
      %v300 = vpop.permute.xlu0 %299
      %301 = vrot.lane.b32.xlu0 %v240, 126
      %v302 = vpop.permute.xlu0 %301
      %303 = vrot.lane.b32.xlu0 %v244, 126
      %v304 = vpop.permute.xlu0 %303
      %305 = vrot.lane.b32.xlu0 %v248, 126
      %v306 = vpop.permute.xlu0 %305
      %307 = vrot.lane.b32.xlu0 %v252, 126
      %v308 = vpop.permute.xlu0 %307
      %309 = vrot.lane.b32.xlu0 %v263, 126
      %v310 = vpop.permute.xlu0 %309
      %vm311 = vcmask 1031168
      %v312 = vsel %vm311, %v296, %v298
      %v313 = vsel %vm311, %v298, %v300
      %v314 = vsel %vm311, %v300, %v302
      %v315 = vsel %vm311, %v302, %v304
      %v316 = vsel %vm311, %v304, %v306
      %v317 = vsel %vm311, %v306, %v308
      %v318 = vsel %vm311, %v308, %v310
      %326 = vrot.lane.b32.xlu0 %v228, 125
      %v327 = vpop.permute.xlu0 %326
      %328 = vrot.lane.b32.xlu0 %v232, 125
      %v329 = vpop.permute.xlu0 %328
      %330 = vrot.lane.b32.xlu0 %v236, 125
      %v331 = vpop.permute.xlu0 %330
      %332 = vrot.lane.b32.xlu0 %v240, 125
      %v333 = vpop.permute.xlu0 %332
      %334 = vrot.lane.b32.xlu0 %v244, 125
      %v335 = vpop.permute.xlu0 %334
      %336 = vrot.lane.b32.xlu0 %v248, 125
      %v337 = vpop.permute.xlu0 %336
      %338 = vrot.lane.b32.xlu0 %v252, 125
      %v339 = vpop.permute.xlu0 %338
      %340 = vrot.lane.b32.xlu0 %v263, 125
      %v341 = vpop.permute.xlu0 %340
      %vm342 = vcmask 1022976
      %v343 = vsel %vm342, %v327, %v329
      %v344 = vsel %vm342, %v329, %v331
      %v345 = vsel %vm342, %v331, %v333
      %v346 = vsel %vm342, %v333, %v335
      %v347 = vsel %vm342, %v335, %v337
      %v348 = vsel %vm342, %v337, %v339
      %v349 = vsel %vm342, %v339, %v341
      %357 = vrot.lane.b32.xlu0 %v228, 124
      %v358 = vpop.permute.xlu0 %357
      %359 = vrot.lane.b32.xlu0 %v232, 124
      %v360 = vpop.permute.xlu0 %359
      %361 = vrot.lane.b32.xlu0 %v236, 124
      %v362 = vpop.permute.xlu0 %361
      %363 = vrot.lane.b32.xlu0 %v240, 124
      %v364 = vpop.permute.xlu0 %363
      %365 = vrot.lane.b32.xlu0 %v244, 124
      %v366 = vpop.permute.xlu0 %365
      %367 = vrot.lane.b32.xlu0 %v248, 124
      %v368 = vpop.permute.xlu0 %367
      %369 = vrot.lane.b32.xlu0 %v252, 124
      %v370 = vpop.permute.xlu0 %369
      %371 = vrot.lane.b32.xlu0 %v263, 124
      %v372 = vpop.permute.xlu0 %371
      %vm373 = vcmask 1014784
      %v374 = vsel %vm373, %v358, %v360
      %v375 = vsel %vm373, %v360, %v362
      %v376 = vsel %vm373, %v362, %v364
      %v377 = vsel %vm373, %v364, %v366
      %v378 = vsel %vm373, %v366, %v368
      %v379 = vsel %vm373, %v368, %v370
      %v380 = vsel %vm373, %v370, %v372
      %388 = vrot.lane.b32.xlu0 %v228, 96
      %v389 = vpop.permute.xlu0 %388
      %390 = vrot.lane.b32.xlu0 %v232, 96
      %v391 = vpop.permute.xlu0 %390
      %392 = vrot.lane.b32.xlu0 %v236, 96
      %v393 = vpop.permute.xlu0 %392
      %394 = vrot.lane.b32.xlu0 %v240, 96
      %v395 = vpop.permute.xlu0 %394
      %396 = vrot.lane.b32.xlu0 %v244, 96
      %v397 = vpop.permute.xlu0 %396
      %398 = vrot.lane.b32.xlu0 %v248, 96
      %v399 = vpop.permute.xlu0 %398
      %400 = vrot.lane.b32.xlu0 %v252, 96
      %v401 = vpop.permute.xlu0 %400
      %402 = vrot.lane.b32.xlu0 %v263, 96
      %v403 = vpop.permute.xlu0 %402
      %vm404 = vcmask 785408
      %v405 = vsel %vm404, %v389, %v391
      %v406 = vsel %vm404, %v391, %v393
      %v407 = vsel %vm404, %v393, %v395
      %v408 = vsel %vm404, %v395, %v397
      %v409 = vsel %vm404, %v397, %v399
      %v410 = vsel %vm404, %v399, %v401
      %v411 = vsel %vm404, %v401, %v403
      %419 = vrot.lane.b32.xlu0 %v228, 95
      %v420 = vpop.permute.xlu0 %419
      %421 = vrot.lane.b32.xlu0 %v232, 95
      %v422 = vpop.permute.xlu0 %421
      %423 = vrot.lane.b32.xlu0 %v236, 95
      %v424 = vpop.permute.xlu0 %423
      %425 = vrot.lane.b32.xlu0 %v240, 95
      %v426 = vpop.permute.xlu0 %425
      %427 = vrot.lane.b32.xlu0 %v244, 95
      %v428 = vpop.permute.xlu0 %427
      %429 = vrot.lane.b32.xlu0 %v248, 95
      %v430 = vpop.permute.xlu0 %429
      %431 = vrot.lane.b32.xlu0 %v252, 95
      %v432 = vpop.permute.xlu0 %431
      %433 = vrot.lane.b32.xlu0 %v263, 95
      %v434 = vpop.permute.xlu0 %433
      %vm435 = vcmask 777216
      %v436 = vsel %vm435, %v420, %v422
      %v437 = vsel %vm435, %v422, %v424
      %v438 = vsel %vm435, %v424, %v426
      %v439 = vsel %vm435, %v426, %v428
      %v440 = vsel %vm435, %v428, %v430
      %v441 = vsel %vm435, %v430, %v432
      %v442 = vsel %vm435, %v432, %v434
      %450 = vrot.lane.b32.xlu0 %v228, 94
      %v451 = vpop.permute.xlu0 %450
      %452 = vrot.lane.b32.xlu0 %v232, 94
      %v453 = vpop.permute.xlu0 %452
      %454 = vrot.lane.b32.xlu0 %v236, 94
      %v455 = vpop.permute.xlu0 %454
      %456 = vrot.lane.b32.xlu0 %v240, 94
      %v457 = vpop.permute.xlu0 %456
      %458 = vrot.lane.b32.xlu0 %v244, 94
      %v459 = vpop.permute.xlu0 %458
      %460 = vrot.lane.b32.xlu0 %v248, 94
      %v461 = vpop.permute.xlu0 %460
      %462 = vrot.lane.b32.xlu0 %v252, 94
      %v463 = vpop.permute.xlu0 %462
      %464 = vrot.lane.b32.xlu0 %v263, 94
      %v465 = vpop.permute.xlu0 %464
      %vm466 = vcmask 769024
      %v467 = vsel %vm466, %v451, %v453
      %v468 = vsel %vm466, %v453, %v455
      %v469 = vsel %vm466, %v455, %v457
      %v470 = vsel %vm466, %v457, %v459
      %v471 = vsel %vm466, %v459, %v461
      %v472 = vsel %vm466, %v461, %v463
      %v473 = vsel %vm466, %v463, %v465
      %481 = vrot.lane.b32.xlu0 %v228, 93
      %v482 = vpop.permute.xlu0 %481
      %483 = vrot.lane.b32.xlu0 %v232, 93
      %v484 = vpop.permute.xlu0 %483
      %485 = vrot.lane.b32.xlu0 %v236, 93
      %v486 = vpop.permute.xlu0 %485
      %487 = vrot.lane.b32.xlu0 %v240, 93
      %v488 = vpop.permute.xlu0 %487
      %489 = vrot.lane.b32.xlu0 %v244, 93
      %v490 = vpop.permute.xlu0 %489
      %491 = vrot.lane.b32.xlu0 %v248, 93
      %v492 = vpop.permute.xlu0 %491
      %493 = vrot.lane.b32.xlu0 %v252, 93
      %v494 = vpop.permute.xlu0 %493
      %495 = vrot.lane.b32.xlu0 %v263, 93
      %v496 = vpop.permute.xlu0 %495
      %vm497 = vcmask 760832
      %v498 = vsel %vm497, %v482, %v484
      %v499 = vsel %vm497, %v484, %v486
      %v500 = vsel %vm497, %v486, %v488
      %v501 = vsel %vm497, %v488, %v490
      %v502 = vsel %vm497, %v490, %v492
      %v503 = vsel %vm497, %v492, %v494
      %v504 = vsel %vm497, %v494, %v496
      %512 = vrot.lane.b32.xlu0 %v228, 92
      %v513 = vpop.permute.xlu0 %512
      %514 = vrot.lane.b32.xlu0 %v232, 92
      %v515 = vpop.permute.xlu0 %514
      %516 = vrot.lane.b32.xlu0 %v236, 92
      %v517 = vpop.permute.xlu0 %516
      %518 = vrot.lane.b32.xlu0 %v240, 92
      %v519 = vpop.permute.xlu0 %518
      %520 = vrot.lane.b32.xlu0 %v244, 92
      %v521 = vpop.permute.xlu0 %520
      %522 = vrot.lane.b32.xlu0 %v248, 92
      %v523 = vpop.permute.xlu0 %522
      %524 = vrot.lane.b32.xlu0 %v252, 92
      %v525 = vpop.permute.xlu0 %524
      %526 = vrot.lane.b32.xlu0 %v263, 92
      %v527 = vpop.permute.xlu0 %526
      %vm528 = vcmask 752640
      %v529 = vsel %vm528, %v513, %v515
      %v530 = vsel %vm528, %v515, %v517
      %v531 = vsel %vm528, %v517, %v519
      %v532 = vsel %vm528, %v519, %v521
      %v533 = vsel %vm528, %v521, %v523
      %v534 = vsel %vm528, %v523, %v525
      %v535 = vsel %vm528, %v525, %v527
      %543 = vrot.lane.b32.xlu0 %v228, 64
      %v544 = vpop.permute.xlu0 %543
      %545 = vrot.lane.b32.xlu0 %v232, 64
      %v546 = vpop.permute.xlu0 %545
      %547 = vrot.lane.b32.xlu0 %v236, 64
      %v548 = vpop.permute.xlu0 %547
      %549 = vrot.lane.b32.xlu0 %v240, 64
      %v550 = vpop.permute.xlu0 %549
      %551 = vrot.lane.b32.xlu0 %v244, 64
      %v552 = vpop.permute.xlu0 %551
      %553 = vrot.lane.b32.xlu0 %v248, 64
      %v554 = vpop.permute.xlu0 %553
      %555 = vrot.lane.b32.xlu0 %v252, 64
      %v556 = vpop.permute.xlu0 %555
      %557 = vrot.lane.b32.xlu0 %v263, 64
      %v558 = vpop.permute.xlu0 %557
      %vm559 = vcmask 523264
      %v560 = vsel %vm559, %v544, %v546
      %v561 = vsel %vm559, %v546, %v548
      %v562 = vsel %vm559, %v548, %v550
      %v563 = vsel %vm559, %v550, %v552
      %v564 = vsel %vm559, %v552, %v554
      %v565 = vsel %vm559, %v554, %v556
      %v566 = vsel %vm559, %v556, %v558
      %574 = vrot.lane.b32.xlu0 %v228, 63
      %v575 = vpop.permute.xlu0 %574
      %576 = vrot.lane.b32.xlu0 %v232, 63
      %v577 = vpop.permute.xlu0 %576
      %578 = vrot.lane.b32.xlu0 %v236, 63
      %v579 = vpop.permute.xlu0 %578
      %580 = vrot.lane.b32.xlu0 %v240, 63
      %v581 = vpop.permute.xlu0 %580
      %582 = vrot.lane.b32.xlu0 %v244, 63
      %v583 = vpop.permute.xlu0 %582
      %584 = vrot.lane.b32.xlu0 %v248, 63
      %v585 = vpop.permute.xlu0 %584
      %586 = vrot.lane.b32.xlu0 %v252, 63
      %v587 = vpop.permute.xlu0 %586
      %588 = vrot.lane.b32.xlu0 %v263, 63
      %v589 = vpop.permute.xlu0 %588
      %vm590 = vcmask 515072
      %v591 = vsel %vm590, %v575, %v577
      %v592 = vsel %vm590, %v577, %v579
      %v593 = vsel %vm590, %v579, %v581
      %v594 = vsel %vm590, %v581, %v583
      %v595 = vsel %vm590, %v583, %v585
      %v596 = vsel %vm590, %v585, %v587
      %v597 = vsel %vm590, %v587, %v589
      %605 = vrot.lane.b32.xlu0 %v228, 62
      %v606 = vpop.permute.xlu0 %605
      %607 = vrot.lane.b32.xlu0 %v232, 62
      %v608 = vpop.permute.xlu0 %607
      %609 = vrot.lane.b32.xlu0 %v236, 62
      %v610 = vpop.permute.xlu0 %609
      %611 = vrot.lane.b32.xlu0 %v240, 62
      %v612 = vpop.permute.xlu0 %611
      %613 = vrot.lane.b32.xlu0 %v244, 62
      %v614 = vpop.permute.xlu0 %613
      %615 = vrot.lane.b32.xlu0 %v248, 62
      %v616 = vpop.permute.xlu0 %615
      %617 = vrot.lane.b32.xlu0 %v252, 62
      %v618 = vpop.permute.xlu0 %617
      %619 = vrot.lane.b32.xlu0 %v263, 62
      %v620 = vpop.permute.xlu0 %619
      %vm621 = vcmask 506880
      %v622 = vsel %vm621, %v606, %v608
      %v623 = vsel %vm621, %v608, %v610
      %v624 = vsel %vm621, %v610, %v612
      %v625 = vsel %vm621, %v612, %v614
      %v626 = vsel %vm621, %v614, %v616
      %v627 = vsel %vm621, %v616, %v618
      %v628 = vsel %vm621, %v618, %v620
      %636 = vrot.lane.b32.xlu0 %v228, 61
      %v637 = vpop.permute.xlu0 %636
      %638 = vrot.lane.b32.xlu0 %v232, 61
      %v639 = vpop.permute.xlu0 %638
      %640 = vrot.lane.b32.xlu0 %v236, 61
      %v641 = vpop.permute.xlu0 %640
      %642 = vrot.lane.b32.xlu0 %v240, 61
      %v643 = vpop.permute.xlu0 %642
      %644 = vrot.lane.b32.xlu0 %v244, 61
      %v645 = vpop.permute.xlu0 %644
      %646 = vrot.lane.b32.xlu0 %v248, 61
      %v647 = vpop.permute.xlu0 %646
      %648 = vrot.lane.b32.xlu0 %v252, 61
      %v649 = vpop.permute.xlu0 %648
      %650 = vrot.lane.b32.xlu0 %v263, 61
      %v651 = vpop.permute.xlu0 %650
      %vm652 = vcmask 498688
      %v653 = vsel %vm652, %v637, %v639
      %v654 = vsel %vm652, %v639, %v641
      %v655 = vsel %vm652, %v641, %v643
      %v656 = vsel %vm652, %v643, %v645
      %v657 = vsel %vm652, %v645, %v647
      %v658 = vsel %vm652, %v647, %v649
      %v659 = vsel %vm652, %v649, %v651
      %667 = vrot.lane.b32.xlu0 %v228, 60
      %v668 = vpop.permute.xlu0 %667
      %669 = vrot.lane.b32.xlu0 %v232, 60
      %v670 = vpop.permute.xlu0 %669
      %671 = vrot.lane.b32.xlu0 %v236, 60
      %v672 = vpop.permute.xlu0 %671
      %673 = vrot.lane.b32.xlu0 %v240, 60
      %v674 = vpop.permute.xlu0 %673
      %675 = vrot.lane.b32.xlu0 %v244, 60
      %v676 = vpop.permute.xlu0 %675
      %677 = vrot.lane.b32.xlu0 %v248, 60
      %v678 = vpop.permute.xlu0 %677
      %679 = vrot.lane.b32.xlu0 %v252, 60
      %v680 = vpop.permute.xlu0 %679
      %681 = vrot.lane.b32.xlu0 %v263, 60
      %v682 = vpop.permute.xlu0 %681
      %vm683 = vcmask 490496
      %v684 = vsel %vm683, %v668, %v670
      %v685 = vsel %vm683, %v670, %v672
      %v686 = vsel %vm683, %v672, %v674
      %v687 = vsel %vm683, %v674, %v676
      %v688 = vsel %vm683, %v676, %v678
      %v689 = vsel %vm683, %v678, %v680
      %v690 = vsel %vm683, %v680, %v682
      %698 = vrot.lane.b32.xlu0 %v228, 32
      %v699 = vpop.permute.xlu0 %698
      %700 = vrot.lane.b32.xlu0 %v232, 32
      %v701 = vpop.permute.xlu0 %700
      %702 = vrot.lane.b32.xlu0 %v236, 32
      %v703 = vpop.permute.xlu0 %702
      %704 = vrot.lane.b32.xlu0 %v240, 32
      %v705 = vpop.permute.xlu0 %704
      %706 = vrot.lane.b32.xlu0 %v244, 32
      %v707 = vpop.permute.xlu0 %706
      %708 = vrot.lane.b32.xlu0 %v248, 32
      %v709 = vpop.permute.xlu0 %708
      %710 = vrot.lane.b32.xlu0 %v252, 32
      %v711 = vpop.permute.xlu0 %710
      %712 = vrot.lane.b32.xlu0 %v263, 32
      %v713 = vpop.permute.xlu0 %712
      %vm714 = vcmask 261120
      %v715 = vsel %vm714, %v699, %v701
      %v716 = vsel %vm714, %v701, %v703
      %v717 = vsel %vm714, %v703, %v705
      %v718 = vsel %vm714, %v705, %v707
      %v719 = vsel %vm714, %v707, %v709
      %v720 = vsel %vm714, %v709, %v711
      %v721 = vsel %vm714, %v711, %v713
      %vm729 = vcmask 1040384
      %v730 = vsel %vm729, %v228, %v281
      %v731 = vsel %vm729, %v232, %v282
      %v732 = vsel %vm729, %v236, %v283
      %v733 = vsel %vm729, %v240, %v284
      %v734 = vsel %vm729, %v244, %v285
      %v735 = vsel %vm729, %v248, %v286
      %v736 = vsel %vm729, %v252, %v287
      %vm737 = vcmask 1041408
      %v738 = vsel %vm737, %v730, %v312
      %v739 = vsel %vm737, %v731, %v313
      %v740 = vsel %vm737, %v732, %v314
      %v741 = vsel %vm737, %v733, %v315
      %v742 = vsel %vm737, %v734, %v316
      %v743 = vsel %vm737, %v735, %v317
      %v744 = vsel %vm737, %v736, %v318
      %vm745 = vcmask 1042432
      %v746 = vsel %vm745, %v738, %v343
      %v747 = vsel %vm745, %v739, %v344
      %v748 = vsel %vm745, %v740, %v345
      %v749 = vsel %vm745, %v741, %v346
      %v750 = vsel %vm745, %v742, %v347
      %v751 = vsel %vm745, %v743, %v348
      %v752 = vsel %vm745, %v744, %v349
      %vm753 = vcmask 1043456
      %v754 = vsel %vm753, %v746, %v374
      %v755 = vsel %vm753, %v747, %v375
      %v756 = vsel %vm753, %v748, %v376
      %v757 = vsel %vm753, %v749, %v377
      %v758 = vsel %vm753, %v750, %v378
      %v759 = vsel %vm753, %v751, %v379
      %v760 = vsel %vm753, %v752, %v380
      %vm761 = vcmask 1044480
      %v762 = vsel %vm761, %v754, %v405
      %v763 = vsel %vm761, %v755, %v406
      %v764 = vsel %vm761, %v756, %v407
      %v765 = vsel %vm761, %v757, %v408
      %v766 = vsel %vm761, %v758, %v409
      %v767 = vsel %vm761, %v759, %v410
      %v768 = vsel %vm761, %v760, %v411
      %vm769 = vcmask 1045504
      %v770 = vsel %vm769, %v762, %v436
      %v771 = vsel %vm769, %v763, %v437
      %v772 = vsel %vm769, %v764, %v438
      %v773 = vsel %vm769, %v765, %v439
      %v774 = vsel %vm769, %v766, %v440
      %v775 = vsel %vm769, %v767, %v441
      %v776 = vsel %vm769, %v768, %v442
      %vm777 = vcmask 1046528
      %v778 = vsel %vm777, %v770, %v467
      %v779 = vsel %vm777, %v771, %v468
      %v780 = vsel %vm777, %v772, %v469
      %v781 = vsel %vm777, %v773, %v470
      %v782 = vsel %vm777, %v774, %v471
      %v783 = vsel %vm777, %v775, %v472
      %v784 = vsel %vm777, %v776, %v473
      %v785 = vsel %vm729, %v498, %v529
      %v786 = vsel %vm729, %v499, %v530
      %v787 = vsel %vm729, %v500, %v531
      %v788 = vsel %vm729, %v501, %v532
      %v789 = vsel %vm729, %v502, %v533
      %v790 = vsel %vm729, %v503, %v534
      %v791 = vsel %vm729, %v504, %v535
      %v792 = vsel %vm737, %v785, %v560
      %v793 = vsel %vm737, %v786, %v561
      %v794 = vsel %vm737, %v787, %v562
      %v795 = vsel %vm737, %v788, %v563
      %v796 = vsel %vm737, %v789, %v564
      %v797 = vsel %vm737, %v790, %v565
      %v798 = vsel %vm737, %v791, %v566
      %v799 = vsel %vm745, %v792, %v591
      %v800 = vsel %vm745, %v793, %v592
      %v801 = vsel %vm745, %v794, %v593
      %v802 = vsel %vm745, %v795, %v594
      %v803 = vsel %vm745, %v796, %v595
      %v804 = vsel %vm745, %v797, %v596
      %v805 = vsel %vm745, %v798, %v597
      %v806 = vsel %vm753, %v799, %v622
      %v807 = vsel %vm753, %v800, %v623
      %v808 = vsel %vm753, %v801, %v624
      %v809 = vsel %vm753, %v802, %v625
      %v810 = vsel %vm753, %v803, %v626
      %v811 = vsel %vm753, %v804, %v627
      %v812 = vsel %vm753, %v805, %v628
      %v813 = vsel %vm761, %v806, %v653
      %v814 = vsel %vm761, %v807, %v654
      %v815 = vsel %vm761, %v808, %v655
      %v816 = vsel %vm761, %v809, %v656
      %v817 = vsel %vm761, %v810, %v657
      %v818 = vsel %vm761, %v811, %v658
      %v819 = vsel %vm761, %v812, %v659
      %v820 = vsel %vm769, %v813, %v684
      %v821 = vsel %vm769, %v814, %v685
      %v822 = vsel %vm769, %v815, %v686
      %v823 = vsel %vm769, %v816, %v687
      %v824 = vsel %vm769, %v817, %v688
      %v825 = vsel %vm769, %v818, %v689
      %v826 = vsel %vm769, %v819, %v690
      %v827 = vsel %vm777, %v820, %v715
      %v828 = vsel %vm777, %v821, %v716
      %v829 = vsel %vm777, %v822, %v717
      %v830 = vsel %vm777, %v823, %v718
      %v831 = vsel %vm777, %v824, %v719
      %v832 = vsel %vm777, %v825, %v720
      %v833 = vsel %vm777, %v826, %v721
      %v839 = vlaneseq
      %v840 = vshrl.u32 %v839, 7
      %v841 = vsub.s32 0, %v840
      %v842 = vrot.slane %v223, %v841
      %v843 = vlaneseq
      %v844 = vshrl.u32 %v843, 7
      %v845 = vsub.s32 1, %v844
      %v846 = vrot.slane %v223, %v845
      %v847 = vlaneseq
      %v848 = vshrl.u32 %v847, 7
      %v849 = vsub.s32 2, %v848
      %v850 = vrot.slane %v223, %v849
      %v851 = vlaneseq
      %v852 = vshrl.u32 %v851, 7
      %v853 = vsub.s32 3, %v852
      %v854 = vrot.slane %v223, %v853
      %v855 = vlaneseq
      %v856 = vshrl.u32 %v855, 7
      %v857 = vsub.s32 4, %v856
      %v858 = vrot.slane %v223, %v857
      %v859 = vlaneseq
      %v860 = vshrl.u32 %v859, 7
      %v861 = vsub.s32 5, %v860
      %v862 = vrot.slane %v223, %v861
      %v863 = vlaneseq
      %v864 = vshrl.u32 %v863, 7
      %v865 = vsub.s32 6, %v864
      %v866 = vrot.slane %v223, %v865
      %867 = vrot.lane.b32.xlu0 %v842, 97
      %v868 = vpop.permute.xlu0 %867
      %869 = vrot.lane.b32.xlu0 %v846, 97
      %v870 = vpop.permute.xlu0 %869
      %871 = vrot.lane.b32.xlu0 %v850, 97
      %v872 = vpop.permute.xlu0 %871
      %873 = vrot.lane.b32.xlu0 %v854, 97
      %v874 = vpop.permute.xlu0 %873
      %875 = vrot.lane.b32.xlu0 %v858, 97
      %v876 = vpop.permute.xlu0 %875
      %877 = vrot.lane.b32.xlu0 %v862, 97
      %v878 = vpop.permute.xlu0 %877
      %879 = vrot.lane.b32.xlu0 %v866, 97
      %v880 = vpop.permute.xlu0 %879
      %vm881 = vcmask 793600
      %v882 = vsel %vm881, %v868, %v870
      %v883 = vsel %vm881, %v870, %v872
      %v884 = vsel %vm881, %v872, %v874
      %v885 = vsel %vm881, %v874, %v876
      %v886 = vsel %vm881, %v876, %v878
      %v887 = vsel %vm881, %v878, %v880
      %v896 = vlaneseq
      %v897 = vshrl.u32 %v896, 7
      %v898 = vsub.s32 7, %v897
      %v899 = vrot.slane %v223, %v898
      %900 = vrot.lane.b32.xlu0 %v842, 96
      %v901 = vpop.permute.xlu0 %900
      %902 = vrot.lane.b32.xlu0 %v846, 96
      %v903 = vpop.permute.xlu0 %902
      %904 = vrot.lane.b32.xlu0 %v850, 96
      %v905 = vpop.permute.xlu0 %904
      %906 = vrot.lane.b32.xlu0 %v854, 96
      %v907 = vpop.permute.xlu0 %906
      %908 = vrot.lane.b32.xlu0 %v858, 96
      %v909 = vpop.permute.xlu0 %908
      %910 = vrot.lane.b32.xlu0 %v862, 96
      %v911 = vpop.permute.xlu0 %910
      %912 = vrot.lane.b32.xlu0 %v866, 96
      %v913 = vpop.permute.xlu0 %912
      %914 = vrot.lane.b32.xlu0 %v899, 96
      %v915 = vpop.permute.xlu0 %914
      %v916 = vsel %vm404, %v901, %v903
      %v917 = vsel %vm404, %v903, %v905
      %v918 = vsel %vm404, %v905, %v907
      %v919 = vsel %vm404, %v907, %v909
      %v920 = vsel %vm404, %v909, %v911
      %v921 = vsel %vm404, %v911, %v913
      %v922 = vsel %vm404, %v913, %v915
      %931 = vrot.lane.b32.xlu0 %v842, 95
      %v932 = vpop.permute.xlu0 %931
      %933 = vrot.lane.b32.xlu0 %v846, 95
      %v934 = vpop.permute.xlu0 %933
      %935 = vrot.lane.b32.xlu0 %v850, 95
      %v936 = vpop.permute.xlu0 %935
      %937 = vrot.lane.b32.xlu0 %v854, 95
      %v938 = vpop.permute.xlu0 %937
      %939 = vrot.lane.b32.xlu0 %v858, 95
      %v940 = vpop.permute.xlu0 %939
      %941 = vrot.lane.b32.xlu0 %v862, 95
      %v942 = vpop.permute.xlu0 %941
      %943 = vrot.lane.b32.xlu0 %v866, 95
      %v944 = vpop.permute.xlu0 %943
      %945 = vrot.lane.b32.xlu0 %v899, 95
      %v946 = vpop.permute.xlu0 %945
      %v947 = vsel %vm435, %v932, %v934
      %v948 = vsel %vm435, %v934, %v936
      %v949 = vsel %vm435, %v936, %v938
      %v950 = vsel %vm435, %v938, %v940
      %v951 = vsel %vm435, %v940, %v942
      %v952 = vsel %vm435, %v942, %v944
      %v953 = vsel %vm435, %v944, %v946
      %962 = vrot.lane.b32.xlu0 %v842, 94
      %v963 = vpop.permute.xlu0 %962
      %964 = vrot.lane.b32.xlu0 %v846, 94
      %v965 = vpop.permute.xlu0 %964
      %966 = vrot.lane.b32.xlu0 %v850, 94
      %v967 = vpop.permute.xlu0 %966
      %968 = vrot.lane.b32.xlu0 %v854, 94
      %v969 = vpop.permute.xlu0 %968
      %970 = vrot.lane.b32.xlu0 %v858, 94
      %v971 = vpop.permute.xlu0 %970
      %972 = vrot.lane.b32.xlu0 %v862, 94
      %v973 = vpop.permute.xlu0 %972
      %974 = vrot.lane.b32.xlu0 %v866, 94
      %v975 = vpop.permute.xlu0 %974
      %976 = vrot.lane.b32.xlu0 %v899, 94
      %v977 = vpop.permute.xlu0 %976
      %v978 = vsel %vm466, %v963, %v965
      %v979 = vsel %vm466, %v965, %v967
      %v980 = vsel %vm466, %v967, %v969
      %v981 = vsel %vm466, %v969, %v971
      %v982 = vsel %vm466, %v971, %v973
      %v983 = vsel %vm466, %v973, %v975
      %v984 = vsel %vm466, %v975, %v977
      %993 = vrot.lane.b32.xlu0 %v842, 93
      %v994 = vpop.permute.xlu0 %993
      %995 = vrot.lane.b32.xlu0 %v846, 93
      %v996 = vpop.permute.xlu0 %995
      %997 = vrot.lane.b32.xlu0 %v850, 93
      %v998 = vpop.permute.xlu0 %997
      %999 = vrot.lane.b32.xlu0 %v854, 93
      %v1000 = vpop.permute.xlu0 %999
      %1001 = vrot.lane.b32.xlu0 %v858, 93
      %v1002 = vpop.permute.xlu0 %1001
      %1003 = vrot.lane.b32.xlu0 %v862, 93
      %v1004 = vpop.permute.xlu0 %1003
      %1005 = vrot.lane.b32.xlu0 %v866, 93
      %v1006 = vpop.permute.xlu0 %1005
      %1007 = vrot.lane.b32.xlu0 %v899, 93
      %v1008 = vpop.permute.xlu0 %1007
      %v1009 = vsel %vm497, %v994, %v996
      %v1010 = vsel %vm497, %v996, %v998
      %v1011 = vsel %vm497, %v998, %v1000
      %v1012 = vsel %vm497, %v1000, %v1002
      %v1013 = vsel %vm497, %v1002, %v1004
      %v1014 = vsel %vm497, %v1004, %v1006
      %v1015 = vsel %vm497, %v1006, %v1008
      %v1024 = vsel %vm729, %v263, %v279
      %v1025 = vsel %vm737, %v1024, %v310
      %v1026 = vsel %vm745, %v1025, %v341
      %v1027 = vsel %vm753, %v746, %v868
      %v1028 = vsel %vm753, %v747, %v882
      %v1029 = vsel %vm753, %v748, %v883
      %v1030 = vsel %vm753, %v749, %v884
      %v1031 = vsel %vm753, %v750, %v885
      %v1032 = vsel %vm753, %v751, %v886
      %v1033 = vsel %vm753, %v752, %v887
      %v1034 = vsel %vm753, %v1026, %v880
      %v1035 = vsel %vm761, %v1027, %v901
      %v1036 = vsel %vm761, %v1028, %v916
      %v1037 = vsel %vm761, %v1029, %v917
      %v1038 = vsel %vm761, %v1030, %v918
      %v1039 = vsel %vm761, %v1031, %v919
      %v1040 = vsel %vm761, %v1032, %v920
      %v1041 = vsel %vm761, %v1033, %v921
      %v1042 = vsel %vm761, %v1034, %v922
      %v1043 = vsel %vm769, %v1035, %v932
      %v1044 = vsel %vm769, %v1036, %v947
      %v1045 = vsel %vm769, %v1037, %v948
      %v1046 = vsel %vm769, %v1038, %v949
      %v1047 = vsel %vm769, %v1039, %v950
      %v1048 = vsel %vm769, %v1040, %v951
      %v1049 = vsel %vm769, %v1041, %v952
      %v1050 = vsel %vm769, %v1042, %v953
      %v1051 = vsel %vm777, %v1043, %v963
      %v1052 = vsel %vm777, %v1044, %v978
      %v1053 = vsel %vm777, %v1045, %v979
      %v1054 = vsel %vm777, %v1046, %v980
      %v1055 = vsel %vm777, %v1047, %v981
      %v1056 = vsel %vm777, %v1048, %v982
      %v1057 = vsel %vm777, %v1049, %v983
      %v1058 = vsel %vm777, %v1050, %v984
      %v1059 = vsel %vm729, %v994, 0.0
      %v1060 = vsel %vm729, %v1009, 0.0
      %v1061 = vsel %vm729, %v1010, 0.0
      %v1062 = vsel %vm729, %v1011, 0.0
      %v1063 = vsel %vm729, %v1012, 0.0
      %v1064 = vsel %vm729, %v1013, 0.0
      %v1065 = vsel %vm729, %v1014, 0.0
      %v1066 = vsel %vm729, %v1015, 0.0
      %1083 = vrot.lane.b32.xlu0 %v1051, 31
      %v1084 = vpop.permute.xlu0 %1083
      %1085 = vrot.lane.b32.xlu0 %v1052, 31
      %v1086 = vpop.permute.xlu0 %1085
      %1087 = vrot.lane.b32.xlu0 %v1053, 31
      %v1088 = vpop.permute.xlu0 %1087
      %1089 = vrot.lane.b32.xlu0 %v1054, 31
      %v1090 = vpop.permute.xlu0 %1089
      %1091 = vrot.lane.b32.xlu0 %v1055, 31
      %v1092 = vpop.permute.xlu0 %1091
      %1093 = vrot.lane.b32.xlu0 %v1056, 31
      %v1094 = vpop.permute.xlu0 %1093
      %1095 = vrot.lane.b32.xlu0 %v1057, 31
      %v1096 = vpop.permute.xlu0 %1095
      %1097 = vrot.lane.b32.xlu0 %v1058, 31
      %v1098 = vpop.permute.xlu0 %1097
      %1099 = vrot.lane.b32.xlu0 %v1059, 31
      %v1100 = vpop.permute.xlu0 %1099
      %1101 = vrot.lane.b32.xlu0 %v1060, 31
      %v1102 = vpop.permute.xlu0 %1101
      %1103 = vrot.lane.b32.xlu0 %v1061, 31
      %v1104 = vpop.permute.xlu0 %1103
      %1105 = vrot.lane.b32.xlu0 %v1062, 31
      %v1106 = vpop.permute.xlu0 %1105
      %1107 = vrot.lane.b32.xlu0 %v1063, 31
      %v1108 = vpop.permute.xlu0 %1107
      %1109 = vrot.lane.b32.xlu0 %v1064, 31
      %v1110 = vpop.permute.xlu0 %1109
      %1111 = vrot.lane.b32.xlu0 %v1065, 31
      %v1112 = vpop.permute.xlu0 %1111
      %1113 = vrot.lane.b32.xlu0 %v1066, 31
      %v1114 = vpop.permute.xlu0 %1113
      %vm1115 = vcmask 252928
      %v1116 = vsel %vm1115, %v1084, %v1086
      %v1117 = vsel %vm1115, %v1086, %v1088
      %v1118 = vsel %vm1115, %v1088, %v1090
      %v1119 = vsel %vm1115, %v1090, %v1092
      %v1120 = vsel %vm1115, %v1092, %v1094
      %v1121 = vsel %vm1115, %v1094, %v1096
      %v1122 = vsel %vm1115, %v1096, %v1098
      %v1123 = vsel %vm1115, %v1100, %v1102
      %v1124 = vsel %vm1115, %v1102, %v1104
      %v1125 = vsel %vm1115, %v1104, %v1106
      %v1126 = vsel %vm1115, %v1106, %v1108
      %v1127 = vsel %vm1115, %v1108, %v1110
      %v1128 = vsel %vm1115, %v1110, %v1112
      %v1129 = vsel %vm1115, %v1112, %v1114
      %1144 = vxpose.xlu0.b32.start [1/16] %v778, 128
      %1145 = vxpose.xlu0.b32.cont [2/16] %v827, 128
      %1146 = vxpose.xlu0.b32.cont [3/16] %v1116, 128
      %1147 = vxpose.xlu0.b32.cont [4/16] %v1123, 128
      %1148 = vxpose.xlu0.b32.cont [5/16] 0.0, 128
      %1149 = vxpose.xlu0.b32.cont [6/16] 0.0, 128
      %1150 = vxpose.xlu0.b32.cont [7/16] 0.0, 128
      %1151 = vxpose.xlu0.b32.cont [8/16] 0.0, 128
      %1152 = vxpose.xlu0.b32.cont [9/16] 0.0, 128
      %1153 = vxpose.xlu0.b32.cont [10/16] 0.0, 128
      %1154 = vxpose.xlu0.b32.cont [11/16] 0.0, 128
      %1155 = vxpose.xlu0.b32.cont [12/16] 0.0, 128
      %1156 = vxpose.xlu0.b32.cont [13/16] 0.0, 128
      %1157 = vxpose.xlu0.b32.cont [14/16] 0.0, 128
      %1158 = vxpose.xlu0.b32.cont [15/16] 0.0, 128
      %1159 = vxpose.xlu0.b32.end [16/16] 0.0, 128
      %v1160 = vpop.trf.xlu0
      %v1161 = vpop.trf.xlu0
      %v1162 = vpop.trf.xlu0
      %v1163 = vpop.trf.xlu0
      %v1164 = vpop.trf.xlu0
      %v1165 = vpop.trf.xlu0
      %v1166 = vpop.trf.xlu0
      %v1167 = vpop.trf.xlu0
      %v1168 = vpop.trf.xlu0
      %v1169 = vpop.trf.xlu0
      %v1170 = vpop.trf.xlu0
      %v1171 = vpop.trf.xlu0
      %v1172 = vpop.trf.xlu0
      %v1173 = vpop.trf.xlu0
      %v1174 = vpop.trf.xlu0
      %v1175 = vpop.trf.xlu0
      %1176 = vxpose.xlu0.b32.start [1/16] %v779, 128
      %1177 = vxpose.xlu0.b32.cont [2/16] %v828, 128
      %1178 = vxpose.xlu0.b32.cont [3/16] %v1117, 128
      %1179 = vxpose.xlu0.b32.cont [4/16] %v1124, 128
      %1180 = vxpose.xlu0.b32.cont [5/16] 0.0, 128
      %1181 = vxpose.xlu0.b32.cont [6/16] 0.0, 128
      %1182 = vxpose.xlu0.b32.cont [7/16] 0.0, 128
      %1183 = vxpose.xlu0.b32.cont [8/16] 0.0, 128
      %1184 = vxpose.xlu0.b32.cont [9/16] 0.0, 128
      %1185 = vxpose.xlu0.b32.cont [10/16] 0.0, 128
      %1186 = vxpose.xlu0.b32.cont [11/16] 0.0, 128
      %1187 = vxpose.xlu0.b32.cont [12/16] 0.0, 128
      %1188 = vxpose.xlu0.b32.cont [13/16] 0.0, 128
      %1189 = vxpose.xlu0.b32.cont [14/16] 0.0, 128
      %1190 = vxpose.xlu0.b32.cont [15/16] 0.0, 128
      %1191 = vxpose.xlu0.b32.end [16/16] 0.0, 128
      %v1192 = vpop.trf.xlu0
      %v1193 = vpop.trf.xlu0
      %v1194 = vpop.trf.xlu0
      %v1195 = vpop.trf.xlu0
      %v1196 = vpop.trf.xlu0
      %v1197 = vpop.trf.xlu0
      %v1198 = vpop.trf.xlu0
      %v1199 = vpop.trf.xlu0
      %v1200 = vpop.trf.xlu0
      %v1201 = vpop.trf.xlu0
      %v1202 = vpop.trf.xlu0
      %v1203 = vpop.trf.xlu0
      %v1204 = vpop.trf.xlu0
      %v1205 = vpop.trf.xlu0
      %v1206 = vpop.trf.xlu0
      %v1207 = vpop.trf.xlu0
      %1208 = vxpose.xlu0.b32.start [1/16] %v780, 128
      %1209 = vxpose.xlu0.b32.cont [2/16] %v829, 128
      %1210 = vxpose.xlu0.b32.cont [3/16] %v1118, 128
      %1211 = vxpose.xlu0.b32.cont [4/16] %v1125, 128
      %1212 = vxpose.xlu0.b32.cont [5/16] 0.0, 128
      %1213 = vxpose.xlu0.b32.cont [6/16] 0.0, 128
      %1214 = vxpose.xlu0.b32.cont [7/16] 0.0, 128
      %1215 = vxpose.xlu0.b32.cont [8/16] 0.0, 128
      %1216 = vxpose.xlu0.b32.cont [9/16] 0.0, 128
      %1217 = vxpose.xlu0.b32.cont [10/16] 0.0, 128
      %1218 = vxpose.xlu0.b32.cont [11/16] 0.0, 128
      %1219 = vxpose.xlu0.b32.cont [12/16] 0.0, 128
      %1220 = vxpose.xlu0.b32.cont [13/16] 0.0, 128
      %1221 = vxpose.xlu0.b32.cont [14/16] 0.0, 128
      %1222 = vxpose.xlu0.b32.cont [15/16] 0.0, 128
      %1223 = vxpose.xlu0.b32.end [16/16] 0.0, 128
      %v1224 = vpop.trf.xlu0
      %v1225 = vpop.trf.xlu0
      %v1226 = vpop.trf.xlu0
      %v1227 = vpop.trf.xlu0
      %v1228 = vpop.trf.xlu0
      %v1229 = vpop.trf.xlu0
      %v1230 = vpop.trf.xlu0
      %v1231 = vpop.trf.xlu0
      %v1232 = vpop.trf.xlu0
      %v1233 = vpop.trf.xlu0
      %v1234 = vpop.trf.xlu0
      %v1235 = vpop.trf.xlu0
      %v1236 = vpop.trf.xlu0
      %v1237 = vpop.trf.xlu0
      %v1238 = vpop.trf.xlu0
      %v1239 = vpop.trf.xlu0
      %1240 = vxpose.xlu0.b32.start [1/16] %v781, 128
      %1241 = vxpose.xlu0.b32.cont [2/16] %v830, 128
      %1242 = vxpose.xlu0.b32.cont [3/16] %v1119, 128
      %1243 = vxpose.xlu0.b32.cont [4/16] %v1126, 128
      %1244 = vxpose.xlu0.b32.cont [5/16] 0.0, 128
      %1245 = vxpose.xlu0.b32.cont [6/16] 0.0, 128
      %1246 = vxpose.xlu0.b32.cont [7/16] 0.0, 128
      %1247 = vxpose.xlu0.b32.cont [8/16] 0.0, 128
      %1248 = vxpose.xlu0.b32.cont [9/16] 0.0, 128
      %1249 = vxpose.xlu0.b32.cont [10/16] 0.0, 128
      %1250 = vxpose.xlu0.b32.cont [11/16] 0.0, 128
      %1251 = vxpose.xlu0.b32.cont [12/16] 0.0, 128
      %1252 = vxpose.xlu0.b32.cont [13/16] 0.0, 128
      %1253 = vxpose.xlu0.b32.cont [14/16] 0.0, 128
      %1254 = vxpose.xlu0.b32.cont [15/16] 0.0, 128
      %1255 = vxpose.xlu0.b32.end [16/16] 0.0, 128
      %v1256 = vpop.trf.xlu0
      %v1257 = vpop.trf.xlu0
      %v1258 = vpop.trf.xlu0
      %v1259 = vpop.trf.xlu0
      %v1260 = vpop.trf.xlu0
      %v1261 = vpop.trf.xlu0
      %v1262 = vpop.trf.xlu0
      %v1263 = vpop.trf.xlu0
      %v1264 = vpop.trf.xlu0
      %v1265 = vpop.trf.xlu0
      %v1266 = vpop.trf.xlu0
      %v1267 = vpop.trf.xlu0
      %v1268 = vpop.trf.xlu0
      %v1269 = vpop.trf.xlu0
      %v1270 = vpop.trf.xlu0
      %v1271 = vpop.trf.xlu0
      %1272 = vxpose.xlu0.b32.start [1/16] %v782, 128
      %1273 = vxpose.xlu0.b32.cont [2/16] %v831, 128
      %1274 = vxpose.xlu0.b32.cont [3/16] %v1120, 128
      %1275 = vxpose.xlu0.b32.cont [4/16] %v1127, 128
      %1276 = vxpose.xlu0.b32.cont [5/16] 0.0, 128
      %1277 = vxpose.xlu0.b32.cont [6/16] 0.0, 128
      %1278 = vxpose.xlu0.b32.cont [7/16] 0.0, 128
      %1279 = vxpose.xlu0.b32.cont [8/16] 0.0, 128
      %1280 = vxpose.xlu0.b32.cont [9/16] 0.0, 128
      %1281 = vxpose.xlu0.b32.cont [10/16] 0.0, 128
      %1282 = vxpose.xlu0.b32.cont [11/16] 0.0, 128
      %1283 = vxpose.xlu0.b32.cont [12/16] 0.0, 128
      %1284 = vxpose.xlu0.b32.cont [13/16] 0.0, 128
      %1285 = vxpose.xlu0.b32.cont [14/16] 0.0, 128
      %1286 = vxpose.xlu0.b32.cont [15/16] 0.0, 128
      %1287 = vxpose.xlu0.b32.end [16/16] 0.0, 128
      %v1288 = vpop.trf.xlu0
      %v1289 = vpop.trf.xlu0
      %v1290 = vpop.trf.xlu0
      %v1291 = vpop.trf.xlu0
      %v1292 = vpop.trf.xlu0
      %v1293 = vpop.trf.xlu0
      %v1294 = vpop.trf.xlu0
      %v1295 = vpop.trf.xlu0
      %v1296 = vpop.trf.xlu0
      %v1297 = vpop.trf.xlu0
      %v1298 = vpop.trf.xlu0
      %v1299 = vpop.trf.xlu0
      %v1300 = vpop.trf.xlu0
      %v1301 = vpop.trf.xlu0
      %v1302 = vpop.trf.xlu0
      %v1303 = vpop.trf.xlu0
      %1304 = vxpose.xlu0.b32.start [1/16] %v783, 128
      %1305 = vxpose.xlu0.b32.cont [2/16] %v832, 128
      %1306 = vxpose.xlu0.b32.cont [3/16] %v1121, 128
      %1307 = vxpose.xlu0.b32.cont [4/16] %v1128, 128
      %1308 = vxpose.xlu0.b32.cont [5/16] 0.0, 128
      %1309 = vxpose.xlu0.b32.cont [6/16] 0.0, 128
      %1310 = vxpose.xlu0.b32.cont [7/16] 0.0, 128
      %1311 = vxpose.xlu0.b32.cont [8/16] 0.0, 128
      %1312 = vxpose.xlu0.b32.cont [9/16] 0.0, 128
      %1313 = vxpose.xlu0.b32.cont [10/16] 0.0, 128
      %1314 = vxpose.xlu0.b32.cont [11/16] 0.0, 128
      %1315 = vxpose.xlu0.b32.cont [12/16] 0.0, 128
      %1316 = vxpose.xlu0.b32.cont [13/16] 0.0, 128
      %1317 = vxpose.xlu0.b32.cont [14/16] 0.0, 128
      %1318 = vxpose.xlu0.b32.cont [15/16] 0.0, 128
      %1319 = vxpose.xlu0.b32.end [16/16] 0.0, 128
      %v1320 = vpop.trf.xlu0
      %v1321 = vpop.trf.xlu0
      %v1322 = vpop.trf.xlu0
      %v1323 = vpop.trf.xlu0
      %v1324 = vpop.trf.xlu0
      %v1325 = vpop.trf.xlu0
      %v1326 = vpop.trf.xlu0
      %v1327 = vpop.trf.xlu0
      %v1328 = vpop.trf.xlu0
      %v1329 = vpop.trf.xlu0
      %v1330 = vpop.trf.xlu0
      %v1331 = vpop.trf.xlu0
      %v1332 = vpop.trf.xlu0
      %v1333 = vpop.trf.xlu0
      %v1334 = vpop.trf.xlu0
      %v1335 = vpop.trf.xlu0
      %1336 = vxpose.xlu0.b32.start [1/16] %v784, 128
      %1337 = vxpose.xlu0.b32.cont [2/16] %v833, 128
      %1338 = vxpose.xlu0.b32.cont [3/16] %v1122, 128
      %1339 = vxpose.xlu0.b32.cont [4/16] %v1129, 128
      %1340 = vxpose.xlu0.b32.cont [5/16] 0.0, 128
      %1341 = vxpose.xlu0.b32.cont [6/16] 0.0, 128
      %1342 = vxpose.xlu0.b32.cont [7/16] 0.0, 128
      %1343 = vxpose.xlu0.b32.cont [8/16] 0.0, 128
      %1344 = vxpose.xlu0.b32.cont [9/16] 0.0, 128
      %1345 = vxpose.xlu0.b32.cont [10/16] 0.0, 128
      %1346 = vxpose.xlu0.b32.cont [11/16] 0.0, 128
      %1347 = vxpose.xlu0.b32.cont [12/16] 0.0, 128
      %1348 = vxpose.xlu0.b32.cont [13/16] 0.0, 128
      %1349 = vxpose.xlu0.b32.cont [14/16] 0.0, 128
      %1350 = vxpose.xlu0.b32.cont [15/16] 0.0, 128
      %1351 = vxpose.xlu0.b32.end [16/16] 0.0, 128
      %v1352 = vpop.trf.xlu0
      %v1353 = vpop.trf.xlu0
      %v1354 = vpop.trf.xlu0
      %v1355 = vpop.trf.xlu0
      %v1356 = vpop.trf.xlu0
      %v1357 = vpop.trf.xlu0
      %v1358 = vpop.trf.xlu0
      %v1359 = vpop.trf.xlu0
      %v1360 = vpop.trf.xlu0
      %v1361 = vpop.trf.xlu0
      %v1362 = vpop.trf.xlu0
      %v1363 = vpop.trf.xlu0
      %v1364 = vpop.trf.xlu0
      %v1365 = vpop.trf.xlu0
      %v1366 = vpop.trf.xlu0
      %v1367 = vpop.trf.xlu0
      %v1368 = vld [vmem:[%s1] sm:$0xff]
      %v1369 = vld [vmem:[%s1 + $0x8] sm:$0xff]
      %v1370 = vld [vmem:[%s1 + $0x10] sm:$0xff]
      %v1371 = vld [vmem:[%s1 + $0x18] sm:$0xff]
      %v1372 = vld [vmem:[%s2] sm:$0x1]
      %v1374 = vlaneseq
      %v1375 = vshrl.u32 %v1374, 7
      %v1376 = vsub.s32 0, %v1375
      %v1377 = vrot.slane %v1372, %v1376
      %v1380 = vsel %vm714, %v1160, 0
      %v1383 = vsel %vm714, %v1161, 0
      %v1386 = vsel %vm714, %v1162, 0
      %v1389 = vsel %vm714, %v1163, 0
      %v1392 = vsel %vm714, %v1164, 0
      %v1395 = vsel %vm714, %v1165, 0
      %v1398 = vsel %vm714, %v1166, 0
      %v1401 = vsel %vm714, %v1167, 0
      %v1404 = vsel %vm714, %v1168, 0
      %v1407 = vsel %vm714, %v1169, 0
      %v1410 = vsel %vm714, %v1170, 0
      %v1413 = vsel %vm714, %v1171, 0
      %v1416 = vsel %vm714, %v1172, 0
      %v1419 = vsel %vm714, %v1173, 0
      %v1422 = vsel %vm714, %v1174, 0
      %v1425 = vsel %vm714, %v1175, 0
      %v1428 = vsel %vm714, %v1192, 0
      %v1431 = vsel %vm714, %v1193, 0
      %v1434 = vsel %vm714, %v1194, 0
      %v1437 = vsel %vm714, %v1195, 0
      %v1440 = vsel %vm714, %v1196, 0
      %v1443 = vsel %vm714, %v1197, 0
      %v1446 = vsel %vm714, %v1198, 0
      %v1449 = vsel %vm714, %v1199, 0
      %v1452 = vsel %vm714, %v1200, 0
      %v1455 = vsel %vm714, %v1201, 0
      %v1458 = vsel %vm714, %v1202, 0
      %v1461 = vsel %vm714, %v1203, 0
      %v1464 = vsel %vm714, %v1204, 0
      %v1467 = vsel %vm714, %v1205, 0
      %v1470 = vsel %vm714, %v1206, 0
      %v1473 = vsel %vm714, %v1207, 0
      %v1476 = vsel %vm714, %v1224, 0
      %v1479 = vsel %vm714, %v1225, 0
      %v1482 = vsel %vm714, %v1226, 0
      %v1485 = vsel %vm714, %v1227, 0
      %v1488 = vsel %vm714, %v1228, 0
      %v1491 = vsel %vm714, %v1229, 0
      %v1494 = vsel %vm714, %v1230, 0
      %v1497 = vsel %vm714, %v1231, 0
      %v1500 = vsel %vm714, %v1232, 0
      %v1503 = vsel %vm714, %v1233, 0
      %v1506 = vsel %vm714, %v1234, 0
      %v1509 = vsel %vm714, %v1235, 0
      %v1512 = vsel %vm714, %v1236, 0
      %v1515 = vsel %vm714, %v1237, 0
      %v1518 = vsel %vm714, %v1238, 0
      %v1521 = vsel %vm714, %v1239, 0
      %v1524 = vsel %vm714, %v1256, 0
      %v1527 = vsel %vm714, %v1257, 0
      %v1530 = vsel %vm714, %v1258, 0
      %v1533 = vsel %vm714, %v1259, 0
      %v1536 = vsel %vm714, %v1260, 0
      %v1539 = vsel %vm714, %v1261, 0
      %v1542 = vsel %vm714, %v1262, 0
      %v1545 = vsel %vm714, %v1263, 0
      %v1548 = vsel %vm714, %v1264, 0
      %v1551 = vsel %vm714, %v1265, 0
      %v1554 = vsel %vm714, %v1266, 0
      %v1557 = vsel %vm714, %v1267, 0
      %v1560 = vsel %vm714, %v1268, 0
      %v1563 = vsel %vm714, %v1269, 0
      %v1566 = vsel %vm714, %v1270, 0
      %v1569 = vsel %vm714, %v1271, 0
      %v1572 = vsel %vm714, %v1288, 0
      %v1575 = vsel %vm714, %v1289, 0
      %v1578 = vsel %vm714, %v1290, 0
      %v1581 = vsel %vm714, %v1291, 0
      %v1584 = vsel %vm714, %v1292, 0
      %v1587 = vsel %vm714, %v1293, 0
      %v1590 = vsel %vm714, %v1294, 0
      %v1593 = vsel %vm714, %v1295, 0
      %v1596 = vsel %vm714, %v1296, 0
      %v1599 = vsel %vm714, %v1297, 0
      %v1602 = vsel %vm714, %v1298, 0
      %v1605 = vsel %vm714, %v1299, 0
      %v1608 = vsel %vm714, %v1300, 0
      %v1611 = vsel %vm714, %v1301, 0
      %v1614 = vsel %vm714, %v1302, 0
      %v1617 = vsel %vm714, %v1303, 0
      %v1620 = vsel %vm714, %v1320, 0
      %v1623 = vsel %vm714, %v1321, 0
      %v1626 = vsel %vm714, %v1322, 0
      %v1629 = vsel %vm714, %v1323, 0
      %v1632 = vsel %vm714, %v1324, 0
      %v1635 = vsel %vm714, %v1325, 0
      %v1638 = vsel %vm714, %v1326, 0
      %v1641 = vsel %vm714, %v1327, 0
      %v1644 = vsel %vm714, %v1328, 0
      %v1647 = vsel %vm714, %v1329, 0
      %v1650 = vsel %vm714, %v1330, 0
      %v1653 = vsel %vm714, %v1331, 0
      %v1656 = vsel %vm714, %v1332, 0
      %v1659 = vsel %vm714, %v1333, 0
      %v1662 = vsel %vm714, %v1334, 0
      %v1665 = vsel %vm714, %v1335, 0
      %v1668 = vsel %vm714, %v1352, 0
      %v1671 = vsel %vm714, %v1353, 0
      %v1674 = vsel %vm714, %v1354, 0
      %v1677 = vsel %vm714, %v1355, 0
      %v1680 = vsel %vm714, %v1356, 0
      %v1683 = vsel %vm714, %v1357, 0
      %v1686 = vsel %vm714, %v1358, 0
      %v1689 = vsel %vm714, %v1359, 0
      %v1692 = vsel %vm714, %v1360, 0
      %v1695 = vsel %vm714, %v1361, 0
      %v1698 = vsel %vm714, %v1362, 0
      %v1701 = vsel %vm714, %v1363, 0
      %v1704 = vsel %vm714, %v1364, 0
      %v1707 = vsel %vm714, %v1365, 0
      %v1710 = vsel %vm714, %v1366, 0
      %v1713 = vsel %vm714, %v1367, 0
      %1715 = vmatprep.subr.mxu0 0.0
      %1716 = vmatpush1.msra.mxu0 %v1368
      %1717 = vmatprep.subr.mxu0 0.0
      %1718 = vmatpush1.msra.mxu0 %v1369
      %1719 = vmatprep.subr.mxu0 0.0
      %1720 = vmatpush1.msra.mxu0 %v1370
      %1721 = vmatprep.subr.mxu0 0.0
      %1722 = vmatpush1.msra.mxu0 %v1371
      %1723 = vmatprep.subr.mxu0 0.0
      %1724 = vmatpush1.msra.mxu0 0.0
      %1725 = vmatprep.subr.mxu0 0.0
      %1726 = vmatpush1.msra.mxu0 0.0
      %1727 = vmatprep.subr.mxu0 0.0
      %1728 = vmatpush1.msra.mxu0 0.0
      %1729 = vmatprep.subr.mxu0 0.0
      %1730 = vmatpush1.msra.mxu0 0.0
      %1731 = vmatprep.subr.mxu0 0.0
      %1732 = vmatpush1.msra.mxu0 0.0
      %1733 = vmatprep.subr.mxu0 0.0
      %1734 = vmatpush1.msra.mxu0 0.0
      %1735 = vmatprep.subr.mxu0 0.0
      %1736 = vmatpush1.msra.mxu0 0.0
      %1737 = vmatprep.subr.mxu0 0.0
      %1738 = vmatpush1.msra.mxu0 0.0
      %1739 = vmatprep.subr.mxu0 0.0
      %1740 = vmatpush1.msra.mxu0 0.0
      %1741 = vmatprep.subr.mxu0 0.0
      %1742 = vmatpush1.msra.mxu0 0.0
      %1743 = vmatprep.subr.mxu0 0.0
      %1744 = vmatpush1.msra.mxu0 0.0
      %1745 = vmatprep.subr.mxu0 0.0
      %1746 = vmatpush1.msra.mxu0 0.0
      %1747 = vmatprep.subr.mxu0 0.0
      %1748 = vmatpush1.msra.mxu0 0.0
      %1749 = vmatprep.subr.mxu0 0.0
      %1750 = vmatpush1.msra.mxu0 0.0
      %1751 = vmatprep.subr.mxu0 0.0
      %1752 = vmatpush1.msra.mxu0 0.0
      %1753 = vmatprep.subr.mxu0 0.0
      %1754 = vmatpush1.msra.mxu0 0.0
      %1755 = vmatprep.subr.mxu0 0.0
      %1756 = vmatpush1.msra.mxu0 0.0
      %1757 = vmatprep.subr.mxu0 0.0
      %1758 = vmatpush1.msra.mxu0 0.0
      %1759 = vmatprep.subr.mxu0 0.0
      %1760 = vmatpush1.msra.mxu0 0.0
      %1761 = vmatprep.subr.mxu0 0.0
      %1762 = vmatpush1.msra.mxu0 0.0
      %1763 = vmatprep.subr.mxu0 0.0
      %1764 = vmatpush1.msra.mxu0 0.0
      %1765 = vmatprep.subr.mxu0 0.0
      %1766 = vmatpush1.msra.mxu0 0.0
      %1767 = vmatprep.subr.mxu0 0.0
      %1768 = vmatpush1.msra.mxu0 0.0
      %1769 = vmatprep.subr.mxu0 0.0
      %1770 = vmatpush1.msra.mxu0 0.0
      %1771 = vmatprep.subr.mxu0 0.0
      %1772 = vmatpush1.msra.mxu0 0.0
      %1773 = vmatprep.subr.mxu0 0.0
      %1774 = vmatpush1.msra.mxu0 0.0
      %1775 = vmatprep.subr.mxu0 0.0
      %1776 = vmatpush1.msra.mxu0 0.0
      %1777 = vmatprep.subr.mxu0 0.0
      %1778 = vmatpush1.msra.mxu0 0.0
      %1779 = vmatprep.mubr.f32.mxu0 0.0
      %1780 = vmatmul.mubr.f32.gmra.mrb[0].mxu0 %v1380
      %v1781 = vpop.f32.mrb[0].mxu0
      %v1782 = vadd.f32 %v1377, %v1781
      %v1783 = vpop.f32.mrb[0].mxu0
      %1784 = vmatprep.mubr.f32.mxu0 0.0
      %1785 = vmatmul.mubr.f32.gmra.mrb[0].mxu0 %v1383
      %v1786 = vpop.f32.mrb[0].mxu0
      %v1787 = vadd.f32 %v1377, %v1786
      %v1788 = vpop.f32.mrb[0].mxu0
      %1789 = vmatprep.mubr.f32.mxu0 0.0
      %1790 = vmatmul.mubr.f32.gmra.mrb[0].mxu0 %v1386
      %v1791 = vpop.f32.mrb[0].mxu0
      %v1792 = vadd.f32 %v1377, %v1791
      %v1793 = vpop.f32.mrb[0].mxu0
      %1794 = vmatprep.mubr.f32.mxu0 0.0
      %1795 = vmatmul.mubr.f32.gmra.mrb[0].mxu0 %v1389
      %v1796 = vpop.f32.mrb[0].mxu0
      %v1797 = vadd.f32 %v1377, %v1796
      %v1798 = vpop.f32.mrb[0].mxu0
      %1799 = vmatprep.mubr.f32.mxu0 0.0
      %1800 = vmatmul.mubr.f32.gmra.mrb[0].mxu0 %v1392
      %v1801 = vpop.f32.mrb[0].mxu0
      %v1802 = vadd.f32 %v1377, %v1801
      %v1803 = vpop.f32.mrb[0].mxu0
      %1804 = vmatprep.mubr.f32.mxu0 0.0
      %1805 = vmatmul.mubr.f32.gmra.mrb[0].mxu0 %v1395
      %v1806 = vpop.f32.mrb[0].mxu0
      %v1807 = vadd.f32 %v1377, %v1806
      %v1808 = vpop.f32.mrb[0].mxu0
      %1809 = vmatprep.mubr.f32.mxu0 0.0
      %1810 = vmatmul.mubr.f32.gmra.mrb[0].mxu0 %v1398
      %v1811 = vpop.f32.mrb[0].mxu0
      %v1812 = vadd.f32 %v1377, %v1811
      %v1813 = vpop.f32.mrb[0].mxu0
      %1814 = vmatprep.mubr.f32.mxu0 0.0
      %1815 = vmatmul.mubr.f32.gmra.mrb[0].mxu0 %v1401
      %v1816 = vpop.f32.mrb[0].mxu0
      %v1817 = vadd.f32 %v1377, %v1816
      %v1818 = vpop.f32.mrb[0].mxu0
      %1819 = vmatprep.mubr.f32.mxu0 0.0
      %1820 = vmatmul.mubr.f32.gmra.mrb[0].mxu0 %v1404
      %v1821 = vpop.f32.mrb[0].mxu0
      %v1822 = vadd.f32 %v1377, %v1821
      %v1823 = vpop.f32.mrb[0].mxu0
      %1824 = vmatprep.mubr.f32.mxu0 0.0
      %1825 = vmatmul.mubr.f32.gmra.mrb[0].mxu0 %v1407
      %v1826 = vpop.f32.mrb[0].mxu0
      %v1827 = vadd.f32 %v1377, %v1826
      %v1828 = vpop.f32.mrb[0].mxu0
      %1829 = vmatprep.mubr.f32.mxu0 0.0
      %1830 = vmatmul.mubr.f32.gmra.mrb[0].mxu0 %v1410
      %v1831 = vpop.f32.mrb[0].mxu0
      %v1832 = vadd.f32 %v1377, %v1831
      %v1833 = vpop.f32.mrb[0].mxu0
      %1834 = vmatprep.mubr.f32.mxu0 0.0
      %1835 = vmatmul.mubr.f32.gmra.mrb[0].mxu0 %v1413
      %v1836 = vpop.f32.mrb[0].mxu0
      %v1837 = vadd.f32 %v1377, %v1836
      %v1838 = vpop.f32.mrb[0].mxu0
      %1839 = vmatprep.mubr.f32.mxu0 0.0
      %1840 = vmatmul.mubr.f32.gmra.mrb[0].mxu0 %v1416
      %v1841 = vpop.f32.mrb[0].mxu0
      %v1842 = vadd.f32 %v1377, %v1841
      %v1843 = vpop.f32.mrb[0].mxu0
      %1844 = vmatprep.mubr.f32.mxu0 0.0
      %1845 = vmatmul.mubr.f32.gmra.mrb[0].mxu0 %v1419
      %v1846 = vpop.f32.mrb[0].mxu0
      %v1847 = vadd.f32 %v1377, %v1846
      %v1848 = vpop.f32.mrb[0].mxu0
      %1849 = vmatprep.mubr.f32.mxu0 0.0
      %1850 = vmatmul.mubr.f32.gmra.mrb[0].mxu0 %v1422
      %v1851 = vpop.f32.mrb[0].mxu0
      %v1852 = vadd.f32 %v1377, %v1851
      %v1853 = vpop.f32.mrb[0].mxu0
      %1854 = vmatprep.mubr.f32.mxu0 0.0
      %1855 = vmatmul.mubr.f32.gmra.mrb[0].mxu0 %v1425
      %v1856 = vpop.f32.mrb[0].mxu0
      %v1857 = vadd.f32 %v1377, %v1856
      %v1858 = vpop.f32.mrb[0].mxu0
      %1859 = vmatprep.mubr.f32.mxu0 0.0
      %1860 = vmatmul.mubr.f32.gmra.mrb[0].mxu0 %v1428
      %v1861 = vpop.f32.mrb[0].mxu0
      %v1862 = vadd.f32 %v1377, %v1861
      %v1863 = vpop.f32.mrb[0].mxu0
      %1864 = vmatprep.mubr.f32.mxu0 0.0
      %1865 = vmatmul.mubr.f32.gmra.mrb[0].mxu0 %v1431
      %v1866 = vpop.f32.mrb[0].mxu0
      %v1867 = vadd.f32 %v1377, %v1866
      %v1868 = vpop.f32.mrb[0].mxu0
      %1869 = vmatprep.mubr.f32.mxu0 0.0
      %1870 = vmatmul.mubr.f32.gmra.mrb[0].mxu0 %v1434
      %v1871 = vpop.f32.mrb[0].mxu0
      %v1872 = vadd.f32 %v1377, %v1871
      %v1873 = vpop.f32.mrb[0].mxu0
      %1874 = vmatprep.mubr.f32.mxu0 0.0
      %1875 = vmatmul.mubr.f32.gmra.mrb[0].mxu0 %v1437
      %v1876 = vpop.f32.mrb[0].mxu0
      %v1877 = vadd.f32 %v1377, %v1876
      %v1878 = vpop.f32.mrb[0].mxu0
      %1879 = vmatprep.mubr.f32.mxu0 0.0
      %1880 = vmatmul.mubr.f32.gmra.mrb[0].mxu0 %v1440
      %v1881 = vpop.f32.mrb[0].mxu0
      %v1882 = vadd.f32 %v1377, %v1881
      %v1883 = vpop.f32.mrb[0].mxu0
      %1884 = vmatprep.mubr.f32.mxu0 0.0
      %1885 = vmatmul.mubr.f32.gmra.mrb[0].mxu0 %v1443
      %v1886 = vpop.f32.mrb[0].mxu0
      %v1887 = vadd.f32 %v1377, %v1886
      %v1888 = vpop.f32.mrb[0].mxu0
      %1889 = vmatprep.mubr.f32.mxu0 0.0
      %1890 = vmatmul.mubr.f32.gmra.mrb[0].mxu0 %v1446
      %v1891 = vpop.f32.mrb[0].mxu0
      %v1892 = vadd.f32 %v1377, %v1891
      %v1893 = vpop.f32.mrb[0].mxu0
      %1894 = vmatprep.mubr.f32.mxu0 0.0
      %1895 = vmatmul.mubr.f32.gmra.mrb[0].mxu0 %v1449
      %v1896 = vpop.f32.mrb[0].mxu0
      %v1897 = vadd.f32 %v1377, %v1896
      %v1898 = vpop.f32.mrb[0].mxu0
      %1899 = vmatprep.mubr.f32.mxu0 0.0
      %1900 = vmatmul.mubr.f32.gmra.mrb[0].mxu0 %v1452
      %v1901 = vpop.f32.mrb[0].mxu0
      %v1902 = vadd.f32 %v1377, %v1901
      %v1903 = vpop.f32.mrb[0].mxu0
      %1904 = vmatprep.mubr.f32.mxu0 0.0
      %1905 = vmatmul.mubr.f32.gmra.mrb[0].mxu0 %v1455
      %v1906 = vpop.f32.mrb[0].mxu0
      %v1907 = vadd.f32 %v1377, %v1906
      %v1908 = vpop.f32.mrb[0].mxu0
      %1909 = vmatprep.mubr.f32.mxu0 0.0
      %1910 = vmatmul.mubr.f32.gmra.mrb[0].mxu0 %v1458
      %v1911 = vpop.f32.mrb[0].mxu0
      %v1912 = vadd.f32 %v1377, %v1911
      %v1913 = vpop.f32.mrb[0].mxu0
      %1914 = vmatprep.mubr.f32.mxu0 0.0
      %1915 = vmatmul.mubr.f32.gmra.mrb[0].mxu0 %v1461
      %v1916 = vpop.f32.mrb[0].mxu0
      %v1917 = vadd.f32 %v1377, %v1916
      %v1918 = vpop.f32.mrb[0].mxu0
      %1919 = vmatprep.mubr.f32.mxu0 0.0
      %1920 = vmatmul.mubr.f32.gmra.mrb[0].mxu0 %v1464
      %v1921 = vpop.f32.mrb[0].mxu0
      %v1922 = vadd.f32 %v1377, %v1921
      %v1923 = vpop.f32.mrb[0].mxu0
      %1924 = vmatprep.mubr.f32.mxu0 0.0
      %1925 = vmatmul.mubr.f32.gmra.mrb[0].mxu0 %v1467
      %v1926 = vpop.f32.mrb[0].mxu0
      %v1927 = vadd.f32 %v1377, %v1926
      %v1928 = vpop.f32.mrb[0].mxu0
      %1929 = vmatprep.mubr.f32.mxu0 0.0
      %1930 = vmatmul.mubr.f32.gmra.mrb[0].mxu0 %v1470
      %v1931 = vpop.f32.mrb[0].mxu0
      %v1932 = vadd.f32 %v1377, %v1931
      %v1933 = vpop.f32.mrb[0].mxu0
      %1934 = vmatprep.mubr.f32.mxu0 0.0
      %1935 = vmatmul.mubr.f32.gmra.mrb[0].mxu0 %v1473
      %v1936 = vpop.f32.mrb[0].mxu0
      %v1937 = vadd.f32 %v1377, %v1936
      %v1938 = vpop.f32.mrb[0].mxu0
      %1939 = vmatprep.mubr.f32.mxu0 0.0
      %1940 = vmatmul.mubr.f32.gmra.mrb[0].mxu0 %v1476
      %v1941 = vpop.f32.mrb[0].mxu0
      %v1942 = vadd.f32 %v1377, %v1941
      %v1943 = vpop.f32.mrb[0].mxu0
      %1944 = vmatprep.mubr.f32.mxu0 0.0
      %1945 = vmatmul.mubr.f32.gmra.mrb[0].mxu0 %v1479
      %v1946 = vpop.f32.mrb[0].mxu0
      %v1947 = vadd.f32 %v1377, %v1946
      %v1948 = vpop.f32.mrb[0].mxu0
      %1949 = vmatprep.mubr.f32.mxu0 0.0
      %1950 = vmatmul.mubr.f32.gmra.mrb[0].mxu0 %v1482
      %v1951 = vpop.f32.mrb[0].mxu0
      %v1952 = vadd.f32 %v1377, %v1951
      %v1953 = vpop.f32.mrb[0].mxu0
      %1954 = vmatprep.mubr.f32.mxu0 0.0
      %1955 = vmatmul.mubr.f32.gmra.mrb[0].mxu0 %v1485
      %v1956 = vpop.f32.mrb[0].mxu0
      %v1957 = vadd.f32 %v1377, %v1956
      %v1958 = vpop.f32.mrb[0].mxu0
      %1959 = vmatprep.mubr.f32.mxu0 0.0
      %1960 = vmatmul.mubr.f32.gmra.mrb[0].mxu0 %v1488
      %v1961 = vpop.f32.mrb[0].mxu0
      %v1962 = vadd.f32 %v1377, %v1961
      %v1963 = vpop.f32.mrb[0].mxu0
      %1964 = vmatprep.mubr.f32.mxu0 0.0
      %1965 = vmatmul.mubr.f32.gmra.mrb[0].mxu0 %v1491
      %v1966 = vpop.f32.mrb[0].mxu0
      %v1967 = vadd.f32 %v1377, %v1966
      %v1968 = vpop.f32.mrb[0].mxu0
      %1969 = vmatprep.mubr.f32.mxu0 0.0
      %1970 = vmatmul.mubr.f32.gmra.mrb[0].mxu0 %v1494
      %v1971 = vpop.f32.mrb[0].mxu0
      %v1972 = vadd.f32 %v1377, %v1971
      %v1973 = vpop.f32.mrb[0].mxu0
      %1974 = vmatprep.mubr.f32.mxu0 0.0
      %1975 = vmatmul.mubr.f32.gmra.mrb[0].mxu0 %v1497
      %v1976 = vpop.f32.mrb[0].mxu0
      %v1977 = vadd.f32 %v1377, %v1976
      %v1978 = vpop.f32.mrb[0].mxu0
      %1979 = vmatprep.mubr.f32.mxu0 0.0
      %1980 = vmatmul.mubr.f32.gmra.mrb[0].mxu0 %v1500
      %v1981 = vpop.f32.mrb[0].mxu0
      %v1982 = vadd.f32 %v1377, %v1981
      %v1983 = vpop.f32.mrb[0].mxu0
      %1984 = vmatprep.mubr.f32.mxu0 0.0
      %1985 = vmatmul.mubr.f32.gmra.mrb[0].mxu0 %v1503
      %v1986 = vpop.f32.mrb[0].mxu0
      %v1987 = vadd.f32 %v1377, %v1986
      %v1988 = vpop.f32.mrb[0].mxu0
      %1989 = vmatprep.mubr.f32.mxu0 0.0
      %1990 = vmatmul.mubr.f32.gmra.mrb[0].mxu0 %v1506
      %v1991 = vpop.f32.mrb[0].mxu0
      %v1992 = vadd.f32 %v1377, %v1991
      %v1993 = vpop.f32.mrb[0].mxu0
      %1994 = vmatprep.mubr.f32.mxu0 0.0
      %1995 = vmatmul.mubr.f32.gmra.mrb[0].mxu0 %v1509
      %v1996 = vpop.f32.mrb[0].mxu0
      %v1997 = vadd.f32 %v1377, %v1996
      %v1998 = vpop.f32.mrb[0].mxu0
      %1999 = vmatprep.mubr.f32.mxu0 0.0
      %2000 = vmatmul.mubr.f32.gmra.mrb[0].mxu0 %v1512
      %v2001 = vpop.f32.mrb[0].mxu0
      %v2002 = vadd.f32 %v1377, %v2001
      %v2003 = vpop.f32.mrb[0].mxu0
      %2004 = vmatprep.mubr.f32.mxu0 0.0
      %2005 = vmatmul.mubr.f32.gmra.mrb[0].mxu0 %v1515
      %v2006 = vpop.f32.mrb[0].mxu0
      %v2007 = vadd.f32 %v1377, %v2006
      %v2008 = vpop.f32.mrb[0].mxu0
      %2009 = vmatprep.mubr.f32.mxu0 0.0
      %2010 = vmatmul.mubr.f32.gmra.mrb[0].mxu0 %v1518
      %v2011 = vpop.f32.mrb[0].mxu0
      %v2012 = vadd.f32 %v1377, %v2011
      %v2013 = vpop.f32.mrb[0].mxu0
      %2014 = vmatprep.mubr.f32.mxu0 0.0
      %2015 = vmatmul.mubr.f32.gmra.mrb[0].mxu0 %v1521
      %v2016 = vpop.f32.mrb[0].mxu0
      %v2017 = vadd.f32 %v1377, %v2016
      %v2018 = vpop.f32.mrb[0].mxu0
      %2019 = vmatprep.mubr.f32.mxu0 0.0
      %2020 = vmatmul.mubr.f32.gmra.mrb[0].mxu0 %v1524
      %v2021 = vpop.f32.mrb[0].mxu0
      %v2022 = vadd.f32 %v1377, %v2021
      %v2023 = vpop.f32.mrb[0].mxu0
      %2024 = vmatprep.mubr.f32.mxu0 0.0
      %2025 = vmatmul.mubr.f32.gmra.mrb[0].mxu0 %v1527
      %v2026 = vpop.f32.mrb[0].mxu0
      %v2027 = vadd.f32 %v1377, %v2026
      %v2028 = vpop.f32.mrb[0].mxu0
      %2029 = vmatprep.mubr.f32.mxu0 0.0
      %2030 = vmatmul.mubr.f32.gmra.mrb[0].mxu0 %v1530
      %v2031 = vpop.f32.mrb[0].mxu0
      %v2032 = vadd.f32 %v1377, %v2031
      %v2033 = vpop.f32.mrb[0].mxu0
      %2034 = vmatprep.mubr.f32.mxu0 0.0
      %2035 = vmatmul.mubr.f32.gmra.mrb[0].mxu0 %v1533
      %v2036 = vpop.f32.mrb[0].mxu0
      %v2037 = vadd.f32 %v1377, %v2036
      %v2038 = vpop.f32.mrb[0].mxu0
      %2039 = vmatprep.mubr.f32.mxu0 0.0
      %2040 = vmatmul.mubr.f32.gmra.mrb[0].mxu0 %v1536
      %v2041 = vpop.f32.mrb[0].mxu0
      %v2042 = vadd.f32 %v1377, %v2041
      %v2043 = vpop.f32.mrb[0].mxu0
      %2044 = vmatprep.mubr.f32.mxu0 0.0
      %2045 = vmatmul.mubr.f32.gmra.mrb[0].mxu0 %v1539
      %v2046 = vpop.f32.mrb[0].mxu0
      %v2047 = vadd.f32 %v1377, %v2046
      %v2048 = vpop.f32.mrb[0].mxu0
      %2049 = vmatprep.mubr.f32.mxu0 0.0
      %2050 = vmatmul.mubr.f32.gmra.mrb[0].mxu0 %v1542
      %v2051 = vpop.f32.mrb[0].mxu0
      %v2052 = vadd.f32 %v1377, %v2051
      %v2053 = vpop.f32.mrb[0].mxu0
      %2054 = vmatprep.mubr.f32.mxu0 0.0
      %2055 = vmatmul.mubr.f32.gmra.mrb[0].mxu0 %v1545
      %v2056 = vpop.f32.mrb[0].mxu0
      %v2057 = vadd.f32 %v1377, %v2056
      %v2058 = vpop.f32.mrb[0].mxu0
      %2059 = vmatprep.mubr.f32.mxu0 0.0
      %2060 = vmatmul.mubr.f32.gmra.mrb[0].mxu0 %v1548
      %v2061 = vpop.f32.mrb[0].mxu0
      %v2062 = vadd.f32 %v1377, %v2061
      %v2063 = vpop.f32.mrb[0].mxu0
      %2064 = vmatprep.mubr.f32.mxu0 0.0
      %2065 = vmatmul.mubr.f32.gmra.mrb[0].mxu0 %v1551
      %v2066 = vpop.f32.mrb[0].mxu0
      %v2067 = vadd.f32 %v1377, %v2066
      %v2068 = vpop.f32.mrb[0].mxu0
      %2069 = vmatprep.mubr.f32.mxu0 0.0
      %2070 = vmatmul.mubr.f32.gmra.mrb[0].mxu0 %v1554
      %v2071 = vpop.f32.mrb[0].mxu0
      %v2072 = vadd.f32 %v1377, %v2071
      %v2073 = vpop.f32.mrb[0].mxu0
      %2074 = vmatprep.mubr.f32.mxu0 0.0
      %2075 = vmatmul.mubr.f32.gmra.mrb[0].mxu0 %v1557
      %v2076 = vpop.f32.mrb[0].mxu0
      %v2077 = vadd.f32 %v1377, %v2076
      %v2078 = vpop.f32.mrb[0].mxu0
      %2079 = vmatprep.mubr.f32.mxu0 0.0
      %2080 = vmatmul.mubr.f32.gmra.mrb[0].mxu0 %v1560
      %v2081 = vpop.f32.mrb[0].mxu0
      %v2082 = vadd.f32 %v1377, %v2081
      %v2083 = vpop.f32.mrb[0].mxu0
      %2084 = vmatprep.mubr.f32.mxu0 0.0
      %2085 = vmatmul.mubr.f32.gmra.mrb[0].mxu0 %v1563
      %v2086 = vpop.f32.mrb[0].mxu0
      %v2087 = vadd.f32 %v1377, %v2086
      %v2088 = vpop.f32.mrb[0].mxu0
      %2089 = vmatprep.mubr.f32.mxu0 0.0
      %2090 = vmatmul.mubr.f32.gmra.mrb[0].mxu0 %v1566
      %v2091 = vpop.f32.mrb[0].mxu0
      %v2092 = vadd.f32 %v1377, %v2091
      %v2093 = vpop.f32.mrb[0].mxu0
      %2094 = vmatprep.mubr.f32.mxu0 0.0
      %2095 = vmatmul.mubr.f32.gmra.mrb[0].mxu0 %v1569
      %v2096 = vpop.f32.mrb[0].mxu0
      %v2097 = vadd.f32 %v1377, %v2096
      %v2098 = vpop.f32.mrb[0].mxu0
      %2099 = vmatprep.mubr.f32.mxu0 0.0
      %2100 = vmatmul.mubr.f32.gmra.mrb[0].mxu0 %v1572
      %v2101 = vpop.f32.mrb[0].mxu0
      %v2102 = vadd.f32 %v1377, %v2101
      %v2103 = vpop.f32.mrb[0].mxu0
      %2104 = vmatprep.mubr.f32.mxu0 0.0
      %2105 = vmatmul.mubr.f32.gmra.mrb[0].mxu0 %v1575
      %v2106 = vpop.f32.mrb[0].mxu0
      %v2107 = vadd.f32 %v1377, %v2106
      %v2108 = vpop.f32.mrb[0].mxu0
      %2109 = vmatprep.mubr.f32.mxu0 0.0
      %2110 = vmatmul.mubr.f32.gmra.mrb[0].mxu0 %v1578
      %v2111 = vpop.f32.mrb[0].mxu0
      %v2112 = vadd.f32 %v1377, %v2111
      %v2113 = vpop.f32.mrb[0].mxu0
      %2114 = vmatprep.mubr.f32.mxu0 0.0
      %2115 = vmatmul.mubr.f32.gmra.mrb[0].mxu0 %v1581
      %v2116 = vpop.f32.mrb[0].mxu0
      %v2117 = vadd.f32 %v1377, %v2116
      %v2118 = vpop.f32.mrb[0].mxu0
      %2119 = vmatprep.mubr.f32.mxu0 0.0
      %2120 = vmatmul.mubr.f32.gmra.mrb[0].mxu0 %v1584
      %v2121 = vpop.f32.mrb[0].mxu0
      %v2122 = vadd.f32 %v1377, %v2121
      %v2123 = vpop.f32.mrb[0].mxu0
      %2124 = vmatprep.mubr.f32.mxu0 0.0
      %2125 = vmatmul.mubr.f32.gmra.mrb[0].mxu0 %v1587
      %v2126 = vpop.f32.mrb[0].mxu0
      %v2127 = vadd.f32 %v1377, %v2126
      %v2128 = vpop.f32.mrb[0].mxu0
      %2129 = vmatprep.mubr.f32.mxu0 0.0
      %2130 = vmatmul.mubr.f32.gmra.mrb[0].mxu0 %v1590
      %v2131 = vpop.f32.mrb[0].mxu0
      %v2132 = vadd.f32 %v1377, %v2131
      %v2133 = vpop.f32.mrb[0].mxu0
      %2134 = vmatprep.mubr.f32.mxu0 0.0
      %2135 = vmatmul.mubr.f32.gmra.mrb[0].mxu0 %v1593
      %v2136 = vpop.f32.mrb[0].mxu0
      %v2137 = vadd.f32 %v1377, %v2136
      %v2138 = vpop.f32.mrb[0].mxu0
      %2139 = vmatprep.mubr.f32.mxu0 0.0
      %2140 = vmatmul.mubr.f32.gmra.mrb[0].mxu0 %v1596
      %v2141 = vpop.f32.mrb[0].mxu0
      %v2142 = vadd.f32 %v1377, %v2141
      %v2143 = vpop.f32.mrb[0].mxu0
      %2144 = vmatprep.mubr.f32.mxu0 0.0
      %2145 = vmatmul.mubr.f32.gmra.mrb[0].mxu0 %v1599
      %v2146 = vpop.f32.mrb[0].mxu0
      %v2147 = vadd.f32 %v1377, %v2146
      %v2148 = vpop.f32.mrb[0].mxu0
      %2149 = vmatprep.mubr.f32.mxu0 0.0
      %2150 = vmatmul.mubr.f32.gmra.mrb[0].mxu0 %v1602
      %v2151 = vpop.f32.mrb[0].mxu0
      %v2152 = vadd.f32 %v1377, %v2151
      %v2153 = vpop.f32.mrb[0].mxu0
      %2154 = vmatprep.mubr.f32.mxu0 0.0
      %2155 = vmatmul.mubr.f32.gmra.mrb[0].mxu0 %v1605
      %v2156 = vpop.f32.mrb[0].mxu0
      %v2157 = vadd.f32 %v1377, %v2156
      %v2158 = vpop.f32.mrb[0].mxu0
      %2159 = vmatprep.mubr.f32.mxu0 0.0
      %2160 = vmatmul.mubr.f32.gmra.mrb[0].mxu0 %v1608
      %v2161 = vpop.f32.mrb[0].mxu0
      %v2162 = vadd.f32 %v1377, %v2161
      %v2163 = vpop.f32.mrb[0].mxu0
      %2164 = vmatprep.mubr.f32.mxu0 0.0
      %2165 = vmatmul.mubr.f32.gmra.mrb[0].mxu0 %v1611
      %v2166 = vpop.f32.mrb[0].mxu0
      %v2167 = vadd.f32 %v1377, %v2166
      %v2168 = vpop.f32.mrb[0].mxu0
      %2169 = vmatprep.mubr.f32.mxu0 0.0
      %2170 = vmatmul.mubr.f32.gmra.mrb[0].mxu0 %v1614
      %v2171 = vpop.f32.mrb[0].mxu0
      %v2172 = vadd.f32 %v1377, %v2171
      %v2173 = vpop.f32.mrb[0].mxu0
      %2174 = vmatprep.mubr.f32.mxu0 0.0
      %2175 = vmatmul.mubr.f32.gmra.mrb[0].mxu0 %v1617
      %v2176 = vpop.f32.mrb[0].mxu0
      %v2177 = vadd.f32 %v1377, %v2176
      %v2178 = vpop.f32.mrb[0].mxu0
      %2179 = vmatprep.mubr.f32.mxu0 0.0
      %2180 = vmatmul.mubr.f32.gmra.mrb[0].mxu0 %v1620
      %v2181 = vpop.f32.mrb[0].mxu0
      %v2182 = vadd.f32 %v1377, %v2181
      %v2183 = vpop.f32.mrb[0].mxu0
      %2184 = vmatprep.mubr.f32.mxu0 0.0
      %2185 = vmatmul.mubr.f32.gmra.mrb[0].mxu0 %v1623
      %v2186 = vpop.f32.mrb[0].mxu0
      %v2187 = vadd.f32 %v1377, %v2186
      %v2188 = vpop.f32.mrb[0].mxu0
      %2189 = vmatprep.mubr.f32.mxu0 0.0
      %2190 = vmatmul.mubr.f32.gmra.mrb[0].mxu0 %v1626
      %v2191 = vpop.f32.mrb[0].mxu0
      %v2192 = vadd.f32 %v1377, %v2191
      %v2193 = vpop.f32.mrb[0].mxu0
      %2194 = vmatprep.mubr.f32.mxu0 0.0
      %2195 = vmatmul.mubr.f32.gmra.mrb[0].mxu0 %v1629
      %v2196 = vpop.f32.mrb[0].mxu0
      %v2197 = vadd.f32 %v1377, %v2196
      %v2198 = vpop.f32.mrb[0].mxu0
      %2199 = vmatprep.mubr.f32.mxu0 0.0
      %2200 = vmatmul.mubr.f32.gmra.mrb[0].mxu0 %v1632
      %v2201 = vpop.f32.mrb[0].mxu0
      %v2202 = vadd.f32 %v1377, %v2201
      %v2203 = vpop.f32.mrb[0].mxu0
      %2204 = vmatprep.mubr.f32.mxu0 0.0
      %2205 = vmatmul.mubr.f32.gmra.mrb[0].mxu0 %v1635
      %v2206 = vpop.f32.mrb[0].mxu0
      %v2207 = vadd.f32 %v1377, %v2206
      %v2208 = vpop.f32.mrb[0].mxu0
      %2209 = vmatprep.mubr.f32.mxu0 0.0
      %2210 = vmatmul.mubr.f32.gmra.mrb[0].mxu0 %v1638
      %v2211 = vpop.f32.mrb[0].mxu0
      %v2212 = vadd.f32 %v1377, %v2211
      %v2213 = vpop.f32.mrb[0].mxu0
      %2214 = vmatprep.mubr.f32.mxu0 0.0
      %2215 = vmatmul.mubr.f32.gmra.mrb[0].mxu0 %v1641
      %v2216 = vpop.f32.mrb[0].mxu0
      %v2217 = vadd.f32 %v1377, %v2216
      %v2218 = vpop.f32.mrb[0].mxu0
      %2219 = vmatprep.mubr.f32.mxu0 0.0
      %2220 = vmatmul.mubr.f32.gmra.mrb[0].mxu0 %v1644
      %v2221 = vpop.f32.mrb[0].mxu0
      %v2222 = vadd.f32 %v1377, %v2221
      %v2223 = vpop.f32.mrb[0].mxu0
      %2224 = vmatprep.mubr.f32.mxu0 0.0
      %2225 = vmatmul.mubr.f32.gmra.mrb[0].mxu0 %v1647
      %v2226 = vpop.f32.mrb[0].mxu0
      %v2227 = vadd.f32 %v1377, %v2226
      %v2228 = vpop.f32.mrb[0].mxu0
      %2229 = vmatprep.mubr.f32.mxu0 0.0
      %2230 = vmatmul.mubr.f32.gmra.mrb[0].mxu0 %v1650
      %v2231 = vpop.f32.mrb[0].mxu0
      %v2232 = vadd.f32 %v1377, %v2231
      %v2233 = vpop.f32.mrb[0].mxu0
      %2234 = vmatprep.mubr.f32.mxu0 0.0
      %2235 = vmatmul.mubr.f32.gmra.mrb[0].mxu0 %v1653
      %v2236 = vpop.f32.mrb[0].mxu0
      %v2237 = vadd.f32 %v1377, %v2236
      %v2238 = vpop.f32.mrb[0].mxu0
      %2239 = vmatprep.mubr.f32.mxu0 0.0
      %2240 = vmatmul.mubr.f32.gmra.mrb[0].mxu0 %v1656
      %v2241 = vpop.f32.mrb[0].mxu0
      %v2242 = vadd.f32 %v1377, %v2241
      %v2243 = vpop.f32.mrb[0].mxu0
      %2244 = vmatprep.mubr.f32.mxu0 0.0
      %2245 = vmatmul.mubr.f32.gmra.mrb[0].mxu0 %v1659
      %v2246 = vpop.f32.mrb[0].mxu0
      %v2247 = vadd.f32 %v1377, %v2246
      %v2248 = vpop.f32.mrb[0].mxu0
      %2249 = vmatprep.mubr.f32.mxu0 0.0
      %2250 = vmatmul.mubr.f32.gmra.mrb[0].mxu0 %v1662
      %v2251 = vpop.f32.mrb[0].mxu0
      %v2252 = vadd.f32 %v1377, %v2251
      %v2253 = vpop.f32.mrb[0].mxu0
      %2254 = vmatprep.mubr.f32.mxu0 0.0
      %2255 = vmatmul.mubr.f32.gmra.mrb[0].mxu0 %v1665
      %v2256 = vpop.f32.mrb[0].mxu0
      %v2257 = vadd.f32 %v1377, %v2256
      %v2258 = vpop.f32.mrb[0].mxu0
      %2259 = vmatprep.mubr.f32.mxu0 0.0
      %2260 = vmatmul.mubr.f32.gmra.mrb[0].mxu0 %v1668
      %v2261 = vpop.f32.mrb[0].mxu0
      %v2262 = vadd.f32 %v1377, %v2261
      %v2263 = vpop.f32.mrb[0].mxu0
      %2264 = vmatprep.mubr.f32.mxu0 0.0
      %2265 = vmatmul.mubr.f32.gmra.mrb[0].mxu0 %v1671
      %v2266 = vpop.f32.mrb[0].mxu0
      %v2267 = vadd.f32 %v1377, %v2266
      %v2268 = vpop.f32.mrb[0].mxu0
      %2269 = vmatprep.mubr.f32.mxu0 0.0
      %2270 = vmatmul.mubr.f32.gmra.mrb[0].mxu0 %v1674
      %v2271 = vpop.f32.mrb[0].mxu0
      %v2272 = vadd.f32 %v1377, %v2271
      %v2273 = vpop.f32.mrb[0].mxu0
      %2274 = vmatprep.mubr.f32.mxu0 0.0
      %2275 = vmatmul.mubr.f32.gmra.mrb[0].mxu0 %v1677
      %v2276 = vpop.f32.mrb[0].mxu0
      %v2277 = vadd.f32 %v1377, %v2276
      %v2278 = vpop.f32.mrb[0].mxu0
      %2279 = vmatprep.mubr.f32.mxu0 0.0
      %2280 = vmatmul.mubr.f32.gmra.mrb[0].mxu0 %v1680
      %v2281 = vpop.f32.mrb[0].mxu0
      %v2282 = vadd.f32 %v1377, %v2281
      %v2283 = vpop.f32.mrb[0].mxu0
      %2284 = vmatprep.mubr.f32.mxu0 0.0
      %2285 = vmatmul.mubr.f32.gmra.mrb[0].mxu0 %v1683
      %v2286 = vpop.f32.mrb[0].mxu0
      %v2287 = vadd.f32 %v1377, %v2286
      %v2288 = vpop.f32.mrb[0].mxu0
      %2289 = vmatprep.mubr.f32.mxu0 0.0
      %2290 = vmatmul.mubr.f32.gmra.mrb[0].mxu0 %v1686
      %v2291 = vpop.f32.mrb[0].mxu0
      %v2292 = vadd.f32 %v1377, %v2291
      %v2293 = vpop.f32.mrb[0].mxu0
      %2294 = vmatprep.mubr.f32.mxu0 0.0
      %2295 = vmatmul.mubr.f32.gmra.mrb[0].mxu0 %v1689
      %v2296 = vpop.f32.mrb[0].mxu0
      %v2297 = vadd.f32 %v1377, %v2296
      %v2298 = vpop.f32.mrb[0].mxu0
      %2299 = vmatprep.mubr.f32.mxu0 0.0
      %2300 = vmatmul.mubr.f32.gmra.mrb[0].mxu0 %v1692
      %v2301 = vpop.f32.mrb[0].mxu0
      %v2302 = vadd.f32 %v1377, %v2301
      %v2303 = vpop.f32.mrb[0].mxu0
      %2304 = vmatprep.mubr.f32.mxu0 0.0
      %2305 = vmatmul.mubr.f32.gmra.mrb[0].mxu0 %v1695
      %v2306 = vpop.f32.mrb[0].mxu0
      %v2307 = vadd.f32 %v1377, %v2306
      %v2308 = vpop.f32.mrb[0].mxu0
      %2309 = vmatprep.mubr.f32.mxu0 0.0
      %2310 = vmatmul.mubr.f32.gmra.mrb[0].mxu0 %v1698
      %v2311 = vpop.f32.mrb[0].mxu0
      %v2312 = vadd.f32 %v1377, %v2311
      %v2313 = vpop.f32.mrb[0].mxu0
      %2314 = vmatprep.mubr.f32.mxu0 0.0
      %2315 = vmatmul.mubr.f32.gmra.mrb[0].mxu0 %v1701
      %v2316 = vpop.f32.mrb[0].mxu0
      %v2317 = vadd.f32 %v1377, %v2316
      %v2318 = vpop.f32.mrb[0].mxu0
      %2319 = vmatprep.mubr.f32.mxu0 0.0
      %2320 = vmatmul.mubr.f32.gmra.mrb[0].mxu0 %v1704
      %v2321 = vpop.f32.mrb[0].mxu0
      %v2322 = vadd.f32 %v1377, %v2321
      %v2323 = vpop.f32.mrb[0].mxu0
      %2324 = vmatprep.mubr.f32.mxu0 0.0
      %2325 = vmatmul.mubr.f32.gmra.mrb[0].mxu0 %v1707
      %v2326 = vpop.f32.mrb[0].mxu0
      %v2327 = vadd.f32 %v1377, %v2326
      %v2328 = vpop.f32.mrb[0].mxu0
      %2329 = vmatprep.mubr.f32.mxu0 0.0
      %2330 = vmatmul.mubr.f32.gmra.mrb[0].mxu0 %v1710
      %v2331 = vpop.f32.mrb[0].mxu0
      %v2332 = vadd.f32 %v1377, %v2331
      %v2333 = vpop.f32.mrb[0].mxu0
      %2334 = vmatprep.mubr.f32.mxu0 0.0
      %2335 = vmatmul.mubr.f32.gmra.mrb[0].mxu0 %v1713
      %v2336 = vpop.f32.mrb[0].mxu0
      %v2337 = vadd.f32 %v1377, %v2336
      %v2338 = vpop.f32.mrb[0].mxu0
      %2339 = vdwg.mxu0
      %v2340 = vtanh.pop %v1782
      %v2341 = vtanh.pop %v1787
      %v2342 = vtanh.pop %v1792
      %v2343 = vtanh.pop %v1797
      %v2344 = vtanh.pop %v1802
      %v2345 = vtanh.pop %v1807
      %v2346 = vtanh.pop %v1812
      %v2347 = vtanh.pop %v1817
      %v2348 = vtanh.pop %v1822
      %v2349 = vtanh.pop %v1827
      %v2350 = vtanh.pop %v1832
      %v2351 = vtanh.pop %v1837
      %v2352 = vtanh.pop %v1842
      %v2353 = vtanh.pop %v1847
      %v2354 = vtanh.pop %v1852
      %v2355 = vtanh.pop %v1857
      %v2356 = vtanh.pop %v1862
      %v2357 = vtanh.pop %v1867
      %v2358 = vtanh.pop %v1872
      %v2359 = vtanh.pop %v1877
      %v2360 = vtanh.pop %v1882
      %v2361 = vtanh.pop %v1887
      %v2362 = vtanh.pop %v1892
      %v2363 = vtanh.pop %v1897
      %v2364 = vtanh.pop %v1902
      %v2365 = vtanh.pop %v1907
      %v2366 = vtanh.pop %v1912
      %v2367 = vtanh.pop %v1917
      %v2368 = vtanh.pop %v1922
      %v2369 = vtanh.pop %v1927
      %v2370 = vtanh.pop %v1932
      %v2371 = vtanh.pop %v1937
      %v2372 = vtanh.pop %v1942
      %v2373 = vtanh.pop %v1947
      %v2374 = vtanh.pop %v1952
      %v2375 = vtanh.pop %v1957
      %v2376 = vtanh.pop %v1962
      %v2377 = vtanh.pop %v1967
      %v2378 = vtanh.pop %v1972
      %v2379 = vtanh.pop %v1977
      %v2380 = vtanh.pop %v1982
      %v2381 = vtanh.pop %v1987
      %v2382 = vtanh.pop %v1992
      %v2383 = vtanh.pop %v1997
      %v2384 = vtanh.pop %v2002
      %v2385 = vtanh.pop %v2007
      %v2386 = vtanh.pop %v2012
      %v2387 = vtanh.pop %v2017
      %v2388 = vtanh.pop %v2022
      %v2389 = vtanh.pop %v2027
      %v2390 = vtanh.pop %v2032
      %v2391 = vtanh.pop %v2037
      %v2392 = vtanh.pop %v2042
      %v2393 = vtanh.pop %v2047
      %v2394 = vtanh.pop %v2052
      %v2395 = vtanh.pop %v2057
      %v2396 = vtanh.pop %v2062
      %v2397 = vtanh.pop %v2067
      %v2398 = vtanh.pop %v2072
      %v2399 = vtanh.pop %v2077
      %v2400 = vtanh.pop %v2082
      %v2401 = vtanh.pop %v2087
      %v2402 = vtanh.pop %v2092
      %v2403 = vtanh.pop %v2097
      %v2404 = vtanh.pop %v2102
      %v2405 = vtanh.pop %v2107
      %v2406 = vtanh.pop %v2112
      %v2407 = vtanh.pop %v2117
      %v2408 = vtanh.pop %v2122
      %v2409 = vtanh.pop %v2127
      %v2410 = vtanh.pop %v2132
      %v2411 = vtanh.pop %v2137
      %v2412 = vtanh.pop %v2142
      %v2413 = vtanh.pop %v2147
      %v2414 = vtanh.pop %v2152
      %v2415 = vtanh.pop %v2157
      %v2416 = vtanh.pop %v2162
      %v2417 = vtanh.pop %v2167
      %v2418 = vtanh.pop %v2172
      %v2419 = vtanh.pop %v2177
      %v2420 = vtanh.pop %v2182
      %v2421 = vtanh.pop %v2187
      %v2422 = vtanh.pop %v2192
      %v2423 = vtanh.pop %v2197
      %v2424 = vtanh.pop %v2202
      %v2425 = vtanh.pop %v2207
      %v2426 = vtanh.pop %v2212
      %v2427 = vtanh.pop %v2217
      %v2428 = vtanh.pop %v2222
      %v2429 = vtanh.pop %v2227
      %v2430 = vtanh.pop %v2232
      %v2431 = vtanh.pop %v2237
      %v2432 = vtanh.pop %v2242
      %v2433 = vtanh.pop %v2247
      %v2434 = vtanh.pop %v2252
      %v2435 = vtanh.pop %v2257
      %v2436 = vtanh.pop %v2262
      %v2437 = vtanh.pop %v2267
      %v2438 = vtanh.pop %v2272
      %v2439 = vtanh.pop %v2277
      %v2440 = vtanh.pop %v2282
      %v2441 = vtanh.pop %v2287
      %v2442 = vtanh.pop %v2292
      %v2443 = vtanh.pop %v2297
      %v2444 = vtanh.pop %v2302
      %v2445 = vtanh.pop %v2307
      %v2446 = vtanh.pop %v2312
      %v2447 = vtanh.pop %v2317
      %v2448 = vtanh.pop %v2322
      %v2449 = vtanh.pop %v2327
      %v2450 = vtanh.pop %v2332
      %v2451 = vtanh.pop %v2337
      %vm2452 = vcmask 48128
      %2453 = vst.msk [vmem:[#allocation2] sm:$0xff] %vm2452, %v2340
      %2454 = vst.msk [vmem:[#allocation2 + $0x8] sm:$0xff] %vm2452, %v2341
      %2455 = vst.msk [vmem:[#allocation2 + $0x10] sm:$0xff] %vm2452, %v2342
      %2456 = vst.msk [vmem:[#allocation2 + $0x18] sm:$0xff] %vm2452, %v2343
      %2457 = vst.msk [vmem:[#allocation2 + $0x20] sm:$0xff] %vm2452, %v2344
      %2458 = vst.msk [vmem:[#allocation2 + $0x28] sm:$0xff] %vm2452, %v2345
      %2459 = vst.msk [vmem:[#allocation2 + $0x30] sm:$0xff] %vm2452, %v2346
      %2460 = vst.msk [vmem:[#allocation2 + $0x38] sm:$0xff] %vm2452, %v2347
      %2461 = vst.msk [vmem:[#allocation2 + $0x40] sm:$0xff] %vm2452, %v2348
      %2462 = vst.msk [vmem:[#allocation2 + $0x48] sm:$0xff] %vm2452, %v2349
      %2463 = vst.msk [vmem:[#allocation2 + $0x50] sm:$0xff] %vm2452, %v2350
      %2464 = vst.msk [vmem:[#allocation2 + $0x58] sm:$0xff] %vm2452, %v2351
      %2465 = vst.msk [vmem:[#allocation2 + $0x60] sm:$0xff] %vm2452, %v2352
      %2466 = vst.msk [vmem:[#allocation2 + $0x68] sm:$0xff] %vm2452, %v2353
      %2467 = vst.msk [vmem:[#allocation2 + $0x70] sm:$0xff] %vm2452, %v2354
      %2468 = vst.msk [vmem:[#allocation2 + $0x78] sm:$0xff] %vm2452, %v2355
      %2469 = vst.msk [vmem:[#allocation2 + $0x80] sm:$0xff] %vm2452, %v2356
      %2470 = vst.msk [vmem:[#allocation2 + $0x88] sm:$0xff] %vm2452, %v2357
      %2471 = vst.msk [vmem:[#allocation2 + $0x90] sm:$0xff] %vm2452, %v2358
      %2472 = vst.msk [vmem:[#allocation2 + $0x98] sm:$0xff] %vm2452, %v2359
      %2473 = vst.msk [vmem:[#allocation2 + $0xa0] sm:$0xff] %vm2452, %v2360
      %2474 = vst.msk [vmem:[#allocation2 + $0xa8] sm:$0xff] %vm2452, %v2361
      %2475 = vst.msk [vmem:[#allocation2 + $0xb0] sm:$0xff] %vm2452, %v2362
      %2476 = vst.msk [vmem:[#allocation2 + $0xb8] sm:$0xff] %vm2452, %v2363
      %2477 = vst.msk [vmem:[#allocation2 + $0xc0] sm:$0xff] %vm2452, %v2364
      %2478 = vst.msk [vmem:[#allocation2 + $0xc8] sm:$0xff] %vm2452, %v2365
      %2479 = vst.msk [vmem:[#allocation2 + $0xd0] sm:$0xff] %vm2452, %v2366
      %2480 = vst.msk [vmem:[#allocation2 + $0xd8] sm:$0xff] %vm2452, %v2367
      %2481 = vst.msk [vmem:[#allocation2 + $0xe0] sm:$0xff] %vm2452, %v2368
      %2482 = vst.msk [vmem:[#allocation2 + $0xe8] sm:$0xff] %vm2452, %v2369
      %2483 = vst.msk [vmem:[#allocation2 + $0xf0] sm:$0xff] %vm2452, %v2370
      %2484 = vst.msk [vmem:[#allocation2 + $0xf8] sm:$0xff] %vm2452, %v2371
      %2485 = vst.msk [vmem:[#allocation2 + $0x100] sm:$0xff] %vm2452, %v2372
      %2486 = vst.msk [vmem:[#allocation2 + $0x108] sm:$0xff] %vm2452, %v2373
      %2487 = vst.msk [vmem:[#allocation2 + $0x110] sm:$0xff] %vm2452, %v2374
      %2488 = vst.msk [vmem:[#allocation2 + $0x118] sm:$0xff] %vm2452, %v2375
      %2489 = vst.msk [vmem:[#allocation2 + $0x120] sm:$0xff] %vm2452, %v2376
      %2490 = vst.msk [vmem:[#allocation2 + $0x128] sm:$0xff] %vm2452, %v2377
      %2491 = vst.msk [vmem:[#allocation2 + $0x130] sm:$0xff] %vm2452, %v2378
      %2492 = vst.msk [vmem:[#allocation2 + $0x138] sm:$0xff] %vm2452, %v2379
      %2493 = vst.msk [vmem:[#allocation2 + $0x140] sm:$0xff] %vm2452, %v2380
      %2494 = vst.msk [vmem:[#allocation2 + $0x148] sm:$0xff] %vm2452, %v2381
      %2495 = vst.msk [vmem:[#allocation2 + $0x150] sm:$0xff] %vm2452, %v2382
      %2496 = vst.msk [vmem:[#allocation2 + $0x158] sm:$0xff] %vm2452, %v2383
      %2497 = vst.msk [vmem:[#allocation2 + $0x160] sm:$0xff] %vm2452, %v2384
      %2498 = vst.msk [vmem:[#allocation2 + $0x168] sm:$0xff] %vm2452, %v2385
      %2499 = vst.msk [vmem:[#allocation2 + $0x170] sm:$0xff] %vm2452, %v2386
      %2500 = vst.msk [vmem:[#allocation2 + $0x178] sm:$0xff] %vm2452, %v2387
      %2501 = vst.msk [vmem:[#allocation2 + $0x180] sm:$0xff] %vm2452, %v2388
      %2502 = vst.msk [vmem:[#allocation2 + $0x188] sm:$0xff] %vm2452, %v2389
      %2503 = vst.msk [vmem:[#allocation2 + $0x190] sm:$0xff] %vm2452, %v2390
      %2504 = vst.msk [vmem:[#allocation2 + $0x198] sm:$0xff] %vm2452, %v2391
      %2505 = vst.msk [vmem:[#allocation2 + $0x1a0] sm:$0xff] %vm2452, %v2392
      %2506 = vst.msk [vmem:[#allocation2 + $0x1a8] sm:$0xff] %vm2452, %v2393
      %2507 = vst.msk [vmem:[#allocation2 + $0x1b0] sm:$0xff] %vm2452, %v2394
      %2508 = vst.msk [vmem:[#allocation2 + $0x1b8] sm:$0xff] %vm2452, %v2395
      %2509 = vst.msk [vmem:[#allocation2 + $0x1c0] sm:$0xff] %vm2452, %v2396
      %2510 = vst.msk [vmem:[#allocation2 + $0x1c8] sm:$0xff] %vm2452, %v2397
      %2511 = vst.msk [vmem:[#allocation2 + $0x1d0] sm:$0xff] %vm2452, %v2398
      %2512 = vst.msk [vmem:[#allocation2 + $0x1d8] sm:$0xff] %vm2452, %v2399
      %2513 = vst.msk [vmem:[#allocation2 + $0x1e0] sm:$0xff] %vm2452, %v2400
      %2514 = vst.msk [vmem:[#allocation2 + $0x1e8] sm:$0xff] %vm2452, %v2401
      %2515 = vst.msk [vmem:[#allocation2 + $0x1f0] sm:$0xff] %vm2452, %v2402
      %2516 = vst.msk [vmem:[#allocation2 + $0x1f8] sm:$0xff] %vm2452, %v2403
      %2517 = vst.msk [vmem:[#allocation2 + $0x200] sm:$0xff] %vm2452, %v2404
      %2518 = vst.msk [vmem:[#allocation2 + $0x208] sm:$0xff] %vm2452, %v2405
      %2519 = vst.msk [vmem:[#allocation2 + $0x210] sm:$0xff] %vm2452, %v2406
      %2520 = vst.msk [vmem:[#allocation2 + $0x218] sm:$0xff] %vm2452, %v2407
      %2521 = vst.msk [vmem:[#allocation2 + $0x220] sm:$0xff] %vm2452, %v2408
      %2522 = vst.msk [vmem:[#allocation2 + $0x228] sm:$0xff] %vm2452, %v2409
      %2523 = vst.msk [vmem:[#allocation2 + $0x230] sm:$0xff] %vm2452, %v2410
      %2524 = vst.msk [vmem:[#allocation2 + $0x238] sm:$0xff] %vm2452, %v2411
      %2525 = vst.msk [vmem:[#allocation2 + $0x240] sm:$0xff] %vm2452, %v2412
      %2526 = vst.msk [vmem:[#allocation2 + $0x248] sm:$0xff] %vm2452, %v2413
      %2527 = vst.msk [vmem:[#allocation2 + $0x250] sm:$0xff] %vm2452, %v2414
      %2528 = vst.msk [vmem:[#allocation2 + $0x258] sm:$0xff] %vm2452, %v2415
      %2529 = vst.msk [vmem:[#allocation2 + $0x260] sm:$0xff] %vm2452, %v2416
      %2530 = vst.msk [vmem:[#allocation2 + $0x268] sm:$0xff] %vm2452, %v2417
      %2531 = vst.msk [vmem:[#allocation2 + $0x270] sm:$0xff] %vm2452, %v2418
      %2532 = vst.msk [vmem:[#allocation2 + $0x278] sm:$0xff] %vm2452, %v2419
      %2533 = vst.msk [vmem:[#allocation2 + $0x280] sm:$0xff] %vm2452, %v2420
      %2534 = vst.msk [vmem:[#allocation2 + $0x288] sm:$0xff] %vm2452, %v2421
      %2535 = vst.msk [vmem:[#allocation2 + $0x290] sm:$0xff] %vm2452, %v2422
      %2536 = vst.msk [vmem:[#allocation2 + $0x298] sm:$0xff] %vm2452, %v2423
      %2537 = vst.msk [vmem:[#allocation2 + $0x2a0] sm:$0xff] %vm2452, %v2424
      %2538 = vst.msk [vmem:[#allocation2 + $0x2a8] sm:$0xff] %vm2452, %v2425
      %2539 = vst.msk [vmem:[#allocation2 + $0x2b0] sm:$0xff] %vm2452, %v2426
      %2540 = vst.msk [vmem:[#allocation2 + $0x2b8] sm:$0xff] %vm2452, %v2427
      %2541 = vst.msk [vmem:[#allocation2 + $0x2c0] sm:$0xff] %vm2452, %v2428
      %2542 = vst.msk [vmem:[#allocation2 + $0x2c8] sm:$0xff] %vm2452, %v2429
      %2543 = vst.msk [vmem:[#allocation2 + $0x2d0] sm:$0xff] %vm2452, %v2430
      %2544 = vst.msk [vmem:[#allocation2 + $0x2d8] sm:$0xff] %vm2452, %v2431
      %2545 = vst.msk [vmem:[#allocation2 + $0x2e0] sm:$0xff] %vm2452, %v2432
      %2546 = vst.msk [vmem:[#allocation2 + $0x2e8] sm:$0xff] %vm2452, %v2433
      %2547 = vst.msk [vmem:[#allocation2 + $0x2f0] sm:$0xff] %vm2452, %v2434
      %2548 = vst.msk [vmem:[#allocation2 + $0x2f8] sm:$0xff] %vm2452, %v2435
      %2549 = vst.msk [vmem:[#allocation2 + $0x300] sm:$0xff] %vm2452, %v2436
      %2550 = vst.msk [vmem:[#allocation2 + $0x308] sm:$0xff] %vm2452, %v2437
      %2551 = vst.msk [vmem:[#allocation2 + $0x310] sm:$0xff] %vm2452, %v2438
      %2552 = vst.msk [vmem:[#allocation2 + $0x318] sm:$0xff] %vm2452, %v2439
      %2553 = vst.msk [vmem:[#allocation2 + $0x320] sm:$0xff] %vm2452, %v2440
      %2554 = vst.msk [vmem:[#allocation2 + $0x328] sm:$0xff] %vm2452, %v2441
      %2555 = vst.msk [vmem:[#allocation2 + $0x330] sm:$0xff] %vm2452, %v2442
      %2556 = vst.msk [vmem:[#allocation2 + $0x338] sm:$0xff] %vm2452, %v2443
      %2557 = vst.msk [vmem:[#allocation2 + $0x340] sm:$0xff] %vm2452, %v2444
      %2558 = vst.msk [vmem:[#allocation2 + $0x348] sm:$0xff] %vm2452, %v2445
      %2559 = vst.msk [vmem:[#allocation2 + $0x350] sm:$0xff] %vm2452, %v2446
      %2560 = vst.msk [vmem:[#allocation2 + $0x358] sm:$0xff] %vm2452, %v2447
      %2561 = vst.msk [vmem:[#allocation2 + $0x360] sm:$0xff] %vm2452, %v2448
      %2562 = vst.msk [vmem:[#allocation2 + $0x368] sm:$0xff] %vm2452, %v2449
      %2563 = vst.msk [vmem:[#allocation2 + $0x370] sm:$0xff] %vm2452, %v2450
      %2564 = vst.msk [vmem:[#allocation2 + $0x378] sm:$0xff] %vm2452, %v2451
      %2565 = vst.msk [vmem:[#allocation3] sm:$0xff] %vm2452, 0.0
      %2566 = vst.msk [vmem:[#allocation3 + $0x8] sm:$0xff] %vm2452, 0.0
      %2567 = vst.msk [vmem:[#allocation3 + $0x10] sm:$0xff] %vm2452, 0.0
      %2568 = vst.msk [vmem:[#allocation3 + $0x18] sm:$0xff] %vm2452, 0.0
      %2569 = vst.msk [vmem:[#allocation3 + $0x20] sm:$0xff] %vm2452, 0.0
      %2570 = vst.msk [vmem:[#allocation3 + $0x28] sm:$0xff] %vm2452, 0.0
      %2571 = vst.msk [vmem:[#allocation3 + $0x30] sm:$0xff] %vm2452, 0.0
      %2572 = vst.msk [vmem:[#allocation3 + $0x38] sm:$0xff] %vm2452, 0.0
      %2573 = vst.msk [vmem:[#allocation3 + $0x40] sm:$0xff] %vm2452, 0.0
      %2574 = vst.msk [vmem:[#allocation3 + $0x48] sm:$0xff] %vm2452, 0.0
      %2575 = vst.msk [vmem:[#allocation3 + $0x50] sm:$0xff] %vm2452, 0.0
      %2576 = vst.msk [vmem:[#allocation3 + $0x58] sm:$0xff] %vm2452, 0.0
      %2577 = vst.msk [vmem:[#allocation3 + $0x60] sm:$0xff] %vm2452, 0.0
      %2578 = vst.msk [vmem:[#allocation3 + $0x68] sm:$0xff] %vm2452, 0.0
      %2579 = vst.msk [vmem:[#allocation3 + $0x70] sm:$0xff] %vm2452, 0.0
      %2580 = vst.msk [vmem:[#allocation3 + $0x78] sm:$0xff] %vm2452, 0.0
      %2581 = vst.msk [vmem:[#allocation3 + $0x80] sm:$0xff] %vm2452, 0.0
      %2582 = vst.msk [vmem:[#allocation3 + $0x88] sm:$0xff] %vm2452, 0.0
      %2583 = vst.msk [vmem:[#allocation3 + $0x90] sm:$0xff] %vm2452, 0.0
      %2584 = vst.msk [vmem:[#allocation3 + $0x98] sm:$0xff] %vm2452, 0.0
      %2585 = vst.msk [vmem:[#allocation3 + $0xa0] sm:$0xff] %vm2452, 0.0
      %2586 = vst.msk [vmem:[#allocation3 + $0xa8] sm:$0xff] %vm2452, 0.0
      %2587 = vst.msk [vmem:[#allocation3 + $0xb0] sm:$0xff] %vm2452, 0.0
      %2588 = vst.msk [vmem:[#allocation3 + $0xb8] sm:$0xff] %vm2452, 0.0
      %2589 = vst.msk [vmem:[#allocation3 + $0xc0] sm:$0xff] %vm2452, 0.0
      %2590 = vst.msk [vmem:[#allocation3 + $0xc8] sm:$0xff] %vm2452, 0.0
      %2591 = vst.msk [vmem:[#allocation3 + $0xd0] sm:$0xff] %vm2452, 0.0
      %2592 = vst.msk [vmem:[#allocation3 + $0xd8] sm:$0xff] %vm2452, 0.0
      %2593 = vst.msk [vmem:[#allocation3 + $0xe0] sm:$0xff] %vm2452, 0.0
      %2594 = vst.msk [vmem:[#allocation3 + $0xe8] sm:$0xff] %vm2452, 0.0
      %v2595 = vld [vmem:[#allocation2] ss:$2 sm:$0xff]
      %s2596 = scalar_lea.vmem [#allocation2], 16
      %v2597 = vld [vmem:[%s2596] ss:$2 sm:$0x3f]
      %s2598 = scalar_lea.vmem [#allocation2], 1
      %v2599 = vld [vmem:[%s2598] ss:$2 sm:$0xff]
      %s2600 = scalar_lea.vmem [#allocation2], 17
      %v2601 = vld [vmem:[%s2600] ss:$2 sm:$0x3f]
      %s2602 = scalar_lea.vmem [#allocation2], 32
      %v2603 = vld [vmem:[%s2602] ss:$2 sm:$0xff]
      %s2604 = scalar_lea.vmem [#allocation2], 48
      %v2605 = vld [vmem:[%s2604] ss:$2 sm:$0x3f]
      %s2606 = scalar_lea.vmem [#allocation2], 33
      %v2607 = vld [vmem:[%s2606] ss:$2 sm:$0xff]
      %s2608 = scalar_lea.vmem [#allocation2], 49
      %v2609 = vld [vmem:[%s2608] ss:$2 sm:$0x3f]
      %v2610 = vmax.f32 %v2595, %v2599
      %v2611 = vmax.f32 %v2597, %v2601
      %v2612 = vmax.f32 %v2603, %v2607
      %v2613 = vmax.f32 %v2605, %v2609
      %v2614 = vmax.f32 %v2610, %v2612
      %v2615 = vmax.f32 %v2611, %v2613
      %2616 = vst.msk [vmem:[#allocation3] sm:$0xff] %vm2452, %v2614
      %vm2617 = vcmask 46080
      %2618 = vst.msk [vmem:[#allocation3 + $0x8] sm:$0x3f] %vm2617, %v2615
      %s2619 = scalar_lea.vmem [#allocation2], 64
      %v2620 = vld [vmem:[%s2619] ss:$2 sm:$0xff]
      %s2621 = scalar_lea.vmem [#allocation2], 80
      %v2622 = vld [vmem:[%s2621] ss:$2 sm:$0x3f]
      %s2623 = scalar_lea.vmem [#allocation2], 65
      %v2624 = vld [vmem:[%s2623] ss:$2 sm:$0xff]
      %s2625 = scalar_lea.vmem [#allocation2], 81
      %v2626 = vld [vmem:[%s2625] ss:$2 sm:$0x3f]
      %s2627 = scalar_lea.vmem [#allocation2], 96
      %v2628 = vld [vmem:[%s2627] ss:$2 sm:$0xff]
      %s2629 = scalar_lea.vmem [#allocation2], 112
      %v2630 = vld [vmem:[%s2629] ss:$2 sm:$0x3f]
      %s2631 = scalar_lea.vmem [#allocation2], 97
      %v2632 = vld [vmem:[%s2631] ss:$2 sm:$0xff]
      %s2633 = scalar_lea.vmem [#allocation2], 113
      %v2634 = vld [vmem:[%s2633] ss:$2 sm:$0x3f]
      %v2635 = vmax.f32 %v2620, %v2624
      %v2636 = vmax.f32 %v2622, %v2626
      %v2637 = vmax.f32 %v2628, %v2632
      %v2638 = vmax.f32 %v2630, %v2634
      %v2639 = vmax.f32 %v2635, %v2637
      %v2640 = vmax.f32 %v2636, %v2638
      %2641 = vst.msk [vmem:[#allocation3 + $0x10] sm:$0xff] %vm2452, %v2639
      %2642 = vst.msk [vmem:[#allocation3 + $0x18] sm:$0x3f] %vm2617, %v2640
      %s2643 = scalar_lea.vmem [#allocation2], 128
      %v2644 = vld [vmem:[%s2643] ss:$2 sm:$0xff]
      %s2645 = scalar_lea.vmem [#allocation2], 144
      %v2646 = vld [vmem:[%s2645] ss:$2 sm:$0x3f]
      %s2647 = scalar_lea.vmem [#allocation2], 129
      %v2648 = vld [vmem:[%s2647] ss:$2 sm:$0xff]
      %s2649 = scalar_lea.vmem [#allocation2], 145
      %v2650 = vld [vmem:[%s2649] ss:$2 sm:$0x3f]
      %s2651 = scalar_lea.vmem [#allocation2], 160
      %v2652 = vld [vmem:[%s2651] ss:$2 sm:$0xff]
      %s2653 = scalar_lea.vmem [#allocation2], 176
      %v2654 = vld [vmem:[%s2653] ss:$2 sm:$0x3f]
      %s2655 = scalar_lea.vmem [#allocation2], 161
      %v2656 = vld [vmem:[%s2655] ss:$2 sm:$0xff]
      %s2657 = scalar_lea.vmem [#allocation2], 177
      %v2658 = vld [vmem:[%s2657] ss:$2 sm:$0x3f]
      %v2659 = vmax.f32 %v2644, %v2648
      %v2660 = vmax.f32 %v2646, %v2650
      %v2661 = vmax.f32 %v2652, %v2656
      %v2662 = vmax.f32 %v2654, %v2658
      %v2663 = vmax.f32 %v2659, %v2661
      %v2664 = vmax.f32 %v2660, %v2662
      %2665 = vst.msk [vmem:[#allocation3 + $0x20] sm:$0xff] %vm2452, %v2663
      %2666 = vst.msk [vmem:[#allocation3 + $0x28] sm:$0x3f] %vm2617, %v2664
      %s2667 = scalar_lea.vmem [#allocation2], 192
      %v2668 = vld [vmem:[%s2667] ss:$2 sm:$0xff]
      %s2669 = scalar_lea.vmem [#allocation2], 208
      %v2670 = vld [vmem:[%s2669] ss:$2 sm:$0x3f]
      %s2671 = scalar_lea.vmem [#allocation2], 193
      %v2672 = vld [vmem:[%s2671] ss:$2 sm:$0xff]
      %s2673 = scalar_lea.vmem [#allocation2], 209
      %v2674 = vld [vmem:[%s2673] ss:$2 sm:$0x3f]
      %s2675 = scalar_lea.vmem [#allocation2], 224
      %v2676 = vld [vmem:[%s2675] ss:$2 sm:$0xff]
      %s2677 = scalar_lea.vmem [#allocation2], 240
      %v2678 = vld [vmem:[%s2677] ss:$2 sm:$0x3f]
      %s2679 = scalar_lea.vmem [#allocation2], 225
      %v2680 = vld [vmem:[%s2679] ss:$2 sm:$0xff]
      %s2681 = scalar_lea.vmem [#allocation2], 241
      %v2682 = vld [vmem:[%s2681] ss:$2 sm:$0x3f]
      %v2683 = vmax.f32 %v2668, %v2672
      %v2684 = vmax.f32 %v2670, %v2674
      %v2685 = vmax.f32 %v2676, %v2680
      %v2686 = vmax.f32 %v2678, %v2682
      %v2687 = vmax.f32 %v2683, %v2685
      %v2688 = vmax.f32 %v2684, %v2686
      %2689 = vst.msk [vmem:[#allocation3 + $0x30] sm:$0xff] %vm2452, %v2687
      %2690 = vst.msk [vmem:[#allocation3 + $0x38] sm:$0x3f] %vm2617, %v2688
      %s2691 = scalar_lea.vmem [#allocation2], 256
      %v2692 = vld [vmem:[%s2691] ss:$2 sm:$0xff]
      %s2693 = scalar_lea.vmem [#allocation2], 272
      %v2694 = vld [vmem:[%s2693] ss:$2 sm:$0x3f]
      %s2695 = scalar_lea.vmem [#allocation2], 257
      %v2696 = vld [vmem:[%s2695] ss:$2 sm:$0xff]
      %s2697 = scalar_lea.vmem [#allocation2], 273
      %v2698 = vld [vmem:[%s2697] ss:$2 sm:$0x3f]
      %s2699 = scalar_lea.vmem [#allocation2], 288
      %v2700 = vld [vmem:[%s2699] ss:$2 sm:$0xff]
      %s2701 = scalar_lea.vmem [#allocation2], 304
      %v2702 = vld [vmem:[%s2701] ss:$2 sm:$0x3f]
      %s2703 = scalar_lea.vmem [#allocation2], 289
      %v2704 = vld [vmem:[%s2703] ss:$2 sm:$0xff]
      %s2705 = scalar_lea.vmem [#allocation2], 305
      %v2706 = vld [vmem:[%s2705] ss:$2 sm:$0x3f]
      %v2707 = vmax.f32 %v2692, %v2696
      %v2708 = vmax.f32 %v2694, %v2698
      %v2709 = vmax.f32 %v2700, %v2704
      %v2710 = vmax.f32 %v2702, %v2706
      %v2711 = vmax.f32 %v2707, %v2709
      %v2712 = vmax.f32 %v2708, %v2710
      %2713 = vst.msk [vmem:[#allocation3 + $0x40] sm:$0xff] %vm2452, %v2711
      %2714 = vst.msk [vmem:[#allocation3 + $0x48] sm:$0x3f] %vm2617, %v2712
      %s2715 = scalar_lea.vmem [#allocation2], 320
      %v2716 = vld [vmem:[%s2715] ss:$2 sm:$0xff]
      %s2717 = scalar_lea.vmem [#allocation2], 336
      %v2718 = vld [vmem:[%s2717] ss:$2 sm:$0x3f]
      %s2719 = scalar_lea.vmem [#allocation2], 321
      %v2720 = vld [vmem:[%s2719] ss:$2 sm:$0xff]
      %s2721 = scalar_lea.vmem [#allocation2], 337
      %v2722 = vld [vmem:[%s2721] ss:$2 sm:$0x3f]
      %s2723 = scalar_lea.vmem [#allocation2], 352
      %v2724 = vld [vmem:[%s2723] ss:$2 sm:$0xff]
      %s2725 = scalar_lea.vmem [#allocation2], 368
      %v2726 = vld [vmem:[%s2725] ss:$2 sm:$0x3f]
      %s2727 = scalar_lea.vmem [#allocation2], 353
      %v2728 = vld [vmem:[%s2727] ss:$2 sm:$0xff]
      %s2729 = scalar_lea.vmem [#allocation2], 369
      %v2730 = vld [vmem:[%s2729] ss:$2 sm:$0x3f]
      %v2731 = vmax.f32 %v2716, %v2720
      %v2732 = vmax.f32 %v2718, %v2722
      %v2733 = vmax.f32 %v2724, %v2728
      %v2734 = vmax.f32 %v2726, %v2730
      %v2735 = vmax.f32 %v2731, %v2733
      %v2736 = vmax.f32 %v2732, %v2734
      %2737 = vst.msk [vmem:[#allocation3 + $0x50] sm:$0xff] %vm2452, %v2735
      %2738 = vst.msk [vmem:[#allocation3 + $0x58] sm:$0x3f] %vm2617, %v2736
      %s2739 = scalar_lea.vmem [#allocation2], 384
      %v2740 = vld [vmem:[%s2739] ss:$2 sm:$0xff]
      %s2741 = scalar_lea.vmem [#allocation2], 400
      %v2742 = vld [vmem:[%s2741] ss:$2 sm:$0x3f]
      %s2743 = scalar_lea.vmem [#allocation2], 385
      %v2744 = vld [vmem:[%s2743] ss:$2 sm:$0xff]
      %s2745 = scalar_lea.vmem [#allocation2], 401
      %v2746 = vld [vmem:[%s2745] ss:$2 sm:$0x3f]
      %s2747 = scalar_lea.vmem [#allocation2], 416
      %v2748 = vld [vmem:[%s2747] ss:$2 sm:$0xff]
      %s2749 = scalar_lea.vmem [#allocation2], 432
      %v2750 = vld [vmem:[%s2749] ss:$2 sm:$0x3f]
      %s2751 = scalar_lea.vmem [#allocation2], 417
      %v2752 = vld [vmem:[%s2751] ss:$2 sm:$0xff]
      %s2753 = scalar_lea.vmem [#allocation2], 433
      %v2754 = vld [vmem:[%s2753] ss:$2 sm:$0x3f]
      %v2755 = vmax.f32 %v2740, %v2744
      %v2756 = vmax.f32 %v2742, %v2746
      %v2757 = vmax.f32 %v2748, %v2752
      %v2758 = vmax.f32 %v2750, %v2754
      %v2759 = vmax.f32 %v2755, %v2757
      %v2760 = vmax.f32 %v2756, %v2758
      %2761 = vst.msk [vmem:[#allocation3 + $0x60] sm:$0xff] %vm2452, %v2759
      %2762 = vst.msk [vmem:[#allocation3 + $0x68] sm:$0x3f] %vm2617, %v2760
      %s2763 = scalar_lea.vmem [#allocation2], 448
      %v2764 = vld [vmem:[%s2763] ss:$2 sm:$0xff]
      %s2765 = scalar_lea.vmem [#allocation2], 464
      %v2766 = vld [vmem:[%s2765] ss:$2 sm:$0x3f]
      %s2767 = scalar_lea.vmem [#allocation2], 449
      %v2768 = vld [vmem:[%s2767] ss:$2 sm:$0xff]
      %s2769 = scalar_lea.vmem [#allocation2], 465
      %v2770 = vld [vmem:[%s2769] ss:$2 sm:$0x3f]
      %s2771 = scalar_lea.vmem [#allocation2], 480
      %v2772 = vld [vmem:[%s2771] ss:$2 sm:$0xff]
      %s2773 = scalar_lea.vmem [#allocation2], 496
      %v2774 = vld [vmem:[%s2773] ss:$2 sm:$0x3f]
      %s2775 = scalar_lea.vmem [#allocation2], 481
      %v2776 = vld [vmem:[%s2775] ss:$2 sm:$0xff]
      %s2777 = scalar_lea.vmem [#allocation2], 497
      %v2778 = vld [vmem:[%s2777] ss:$2 sm:$0x3f]
      %v2779 = vmax.f32 %v2764, %v2768
      %v2780 = vmax.f32 %v2766, %v2770
      %v2781 = vmax.f32 %v2772, %v2776
      %v2782 = vmax.f32 %v2774, %v2778
      %v2783 = vmax.f32 %v2779, %v2781
      %v2784 = vmax.f32 %v2780, %v2782
      %2785 = vst.msk [vmem:[#allocation3 + $0x70] sm:$0xff] %vm2452, %v2783
      %2786 = vst.msk [vmem:[#allocation3 + $0x78] sm:$0x3f] %vm2617, %v2784
      %s2787 = scalar_lea.vmem [#allocation2], 512
      %v2788 = vld [vmem:[%s2787] ss:$2 sm:$0xff]
      %s2789 = scalar_lea.vmem [#allocation2], 528
      %v2790 = vld [vmem:[%s2789] ss:$2 sm:$0x3f]
      %s2791 = scalar_lea.vmem [#allocation2], 513
      %v2792 = vld [vmem:[%s2791] ss:$2 sm:$0xff]
      %s2793 = scalar_lea.vmem [#allocation2], 529
      %v2794 = vld [vmem:[%s2793] ss:$2 sm:$0x3f]
      %s2795 = scalar_lea.vmem [#allocation2], 544
      %v2796 = vld [vmem:[%s2795] ss:$2 sm:$0xff]
      %s2797 = scalar_lea.vmem [#allocation2], 560
      %v2798 = vld [vmem:[%s2797] ss:$2 sm:$0x3f]
      %s2799 = scalar_lea.vmem [#allocation2], 545
      %v2800 = vld [vmem:[%s2799] ss:$2 sm:$0xff]
      %s2801 = scalar_lea.vmem [#allocation2], 561
      %v2802 = vld [vmem:[%s2801] ss:$2 sm:$0x3f]
      %v2803 = vmax.f32 %v2788, %v2792
      %v2804 = vmax.f32 %v2790, %v2794
      %v2805 = vmax.f32 %v2796, %v2800
      %v2806 = vmax.f32 %v2798, %v2802
      %v2807 = vmax.f32 %v2803, %v2805
      %v2808 = vmax.f32 %v2804, %v2806
      %2809 = vst.msk [vmem:[#allocation3 + $0x80] sm:$0xff] %vm2452, %v2807
      %2810 = vst.msk [vmem:[#allocation3 + $0x88] sm:$0x3f] %vm2617, %v2808
      %s2811 = scalar_lea.vmem [#allocation2], 576
      %v2812 = vld [vmem:[%s2811] ss:$2 sm:$0xff]
      %s2813 = scalar_lea.vmem [#allocation2], 592
      %v2814 = vld [vmem:[%s2813] ss:$2 sm:$0x3f]
      %s2815 = scalar_lea.vmem [#allocation2], 577
      %v2816 = vld [vmem:[%s2815] ss:$2 sm:$0xff]
      %s2817 = scalar_lea.vmem [#allocation2], 593
      %v2818 = vld [vmem:[%s2817] ss:$2 sm:$0x3f]
      %s2819 = scalar_lea.vmem [#allocation2], 608
      %v2820 = vld [vmem:[%s2819] ss:$2 sm:$0xff]
      %s2821 = scalar_lea.vmem [#allocation2], 624
      %v2822 = vld [vmem:[%s2821] ss:$2 sm:$0x3f]
      %s2823 = scalar_lea.vmem [#allocation2], 609
      %v2824 = vld [vmem:[%s2823] ss:$2 sm:$0xff]
      %s2825 = scalar_lea.vmem [#allocation2], 625
      %v2826 = vld [vmem:[%s2825] ss:$2 sm:$0x3f]
      %v2827 = vmax.f32 %v2812, %v2816
      %v2828 = vmax.f32 %v2814, %v2818
      %v2829 = vmax.f32 %v2820, %v2824
      %v2830 = vmax.f32 %v2822, %v2826
      %v2831 = vmax.f32 %v2827, %v2829
      %v2832 = vmax.f32 %v2828, %v2830
      %2833 = vst.msk [vmem:[#allocation3 + $0x90] sm:$0xff] %vm2452, %v2831
      %2834 = vst.msk [vmem:[#allocation3 + $0x98] sm:$0x3f] %vm2617, %v2832
      %s2835 = scalar_lea.vmem [#allocation2], 640
      %v2836 = vld [vmem:[%s2835] ss:$2 sm:$0xff]
      %s2837 = scalar_lea.vmem [#allocation2], 656
      %v2838 = vld [vmem:[%s2837] ss:$2 sm:$0x3f]
      %s2839 = scalar_lea.vmem [#allocation2], 641
      %v2840 = vld [vmem:[%s2839] ss:$2 sm:$0xff]
      %s2841 = scalar_lea.vmem [#allocation2], 657
      %v2842 = vld [vmem:[%s2841] ss:$2 sm:$0x3f]
      %s2843 = scalar_lea.vmem [#allocation2], 672
      %v2844 = vld [vmem:[%s2843] ss:$2 sm:$0xff]
      %s2845 = scalar_lea.vmem [#allocation2], 688
      %v2846 = vld [vmem:[%s2845] ss:$2 sm:$0x3f]
      %s2847 = scalar_lea.vmem [#allocation2], 673
      %v2848 = vld [vmem:[%s2847] ss:$2 sm:$0xff]
      %s2849 = scalar_lea.vmem [#allocation2], 689
      %v2850 = vld [vmem:[%s2849] ss:$2 sm:$0x3f]
      %v2851 = vmax.f32 %v2836, %v2840
      %v2852 = vmax.f32 %v2838, %v2842
      %v2853 = vmax.f32 %v2844, %v2848
      %v2854 = vmax.f32 %v2846, %v2850
      %v2855 = vmax.f32 %v2851, %v2853
      %v2856 = vmax.f32 %v2852, %v2854
      %2857 = vst.msk [vmem:[#allocation3 + $0xa0] sm:$0xff] %vm2452, %v2855
      %2858 = vst.msk [vmem:[#allocation3 + $0xa8] sm:$0x3f] %vm2617, %v2856
      %s2859 = scalar_lea.vmem [#allocation2], 704
      %v2860 = vld [vmem:[%s2859] ss:$2 sm:$0xff]
      %s2861 = scalar_lea.vmem [#allocation2], 720
      %v2862 = vld [vmem:[%s2861] ss:$2 sm:$0x3f]
      %s2863 = scalar_lea.vmem [#allocation2], 705
      %v2864 = vld [vmem:[%s2863] ss:$2 sm:$0xff]
      %s2865 = scalar_lea.vmem [#allocation2], 721
      %v2866 = vld [vmem:[%s2865] ss:$2 sm:$0x3f]
      %s2867 = scalar_lea.vmem [#allocation2], 736
      %v2868 = vld [vmem:[%s2867] ss:$2 sm:$0xff]
      %s2869 = scalar_lea.vmem [#allocation2], 752
      %v2870 = vld [vmem:[%s2869] ss:$2 sm:$0x3f]
      %s2871 = scalar_lea.vmem [#allocation2], 737
      %v2872 = vld [vmem:[%s2871] ss:$2 sm:$0xff]
      %s2873 = scalar_lea.vmem [#allocation2], 753
      %v2874 = vld [vmem:[%s2873] ss:$2 sm:$0x3f]
      %v2875 = vmax.f32 %v2860, %v2864
      %v2876 = vmax.f32 %v2862, %v2866
      %v2877 = vmax.f32 %v2868, %v2872
      %v2878 = vmax.f32 %v2870, %v2874
      %v2879 = vmax.f32 %v2875, %v2877
      %v2880 = vmax.f32 %v2876, %v2878
      %2881 = vst.msk [vmem:[#allocation3 + $0xb0] sm:$0xff] %vm2452, %v2879
      %2882 = vst.msk [vmem:[#allocation3 + $0xb8] sm:$0x3f] %vm2617, %v2880
      %s2883 = scalar_lea.vmem [#allocation2], 768
      %v2884 = vld [vmem:[%s2883] ss:$2 sm:$0xff]
      %s2885 = scalar_lea.vmem [#allocation2], 784
      %v2886 = vld [vmem:[%s2885] ss:$2 sm:$0x3f]
      %s2887 = scalar_lea.vmem [#allocation2], 769
      %v2888 = vld [vmem:[%s2887] ss:$2 sm:$0xff]
      %s2889 = scalar_lea.vmem [#allocation2], 785
      %v2890 = vld [vmem:[%s2889] ss:$2 sm:$0x3f]
      %s2891 = scalar_lea.vmem [#allocation2], 800
      %v2892 = vld [vmem:[%s2891] ss:$2 sm:$0xff]
      %s2893 = scalar_lea.vmem [#allocation2], 816
      %v2894 = vld [vmem:[%s2893] ss:$2 sm:$0x3f]
      %s2895 = scalar_lea.vmem [#allocation2], 801
      %v2896 = vld [vmem:[%s2895] ss:$2 sm:$0xff]
      %s2897 = scalar_lea.vmem [#allocation2], 817
      %v2898 = vld [vmem:[%s2897] ss:$2 sm:$0x3f]
      %v2899 = vmax.f32 %v2884, %v2888
      %v2900 = vmax.f32 %v2886, %v2890
      %v2901 = vmax.f32 %v2892, %v2896
      %v2902 = vmax.f32 %v2894, %v2898
      %v2903 = vmax.f32 %v2899, %v2901
      %v2904 = vmax.f32 %v2900, %v2902
      %2905 = vst.msk [vmem:[#allocation3 + $0xc0] sm:$0xff] %vm2452, %v2903
      %2906 = vst.msk [vmem:[#allocation3 + $0xc8] sm:$0x3f] %vm2617, %v2904
      %s2907 = scalar_lea.vmem [#allocation2], 832
      %v2908 = vld [vmem:[%s2907] ss:$2 sm:$0xff]
      %s2909 = scalar_lea.vmem [#allocation2], 848
      %v2910 = vld [vmem:[%s2909] ss:$2 sm:$0x3f]
      %s2911 = scalar_lea.vmem [#allocation2], 833
      %v2912 = vld [vmem:[%s2911] ss:$2 sm:$0xff]
      %s2913 = scalar_lea.vmem [#allocation2], 849
      %v2914 = vld [vmem:[%s2913] ss:$2 sm:$0x3f]
      %s2915 = scalar_lea.vmem [#allocation2], 864
      %v2916 = vld [vmem:[%s2915] ss:$2 sm:$0xff]
      %s2917 = scalar_lea.vmem [#allocation2], 880
      %v2918 = vld [vmem:[%s2917] ss:$2 sm:$0x3f]
      %s2919 = scalar_lea.vmem [#allocation2], 865
      %v2920 = vld [vmem:[%s2919] ss:$2 sm:$0xff]
      %s2921 = scalar_lea.vmem [#allocation2], 881
      %v2922 = vld [vmem:[%s2921] ss:$2 sm:$0x3f]
      %v2923 = vmax.f32 %v2908, %v2912
      %v2924 = vmax.f32 %v2910, %v2914
      %v2925 = vmax.f32 %v2916, %v2920
      %v2926 = vmax.f32 %v2918, %v2922
      %v2927 = vmax.f32 %v2923, %v2925
      %v2928 = vmax.f32 %v2924, %v2926
      %2929 = vst.msk [vmem:[#allocation3 + $0xd0] sm:$0xff] %vm2452, %v2927
      %2930 = vst.msk [vmem:[#allocation3 + $0xd8] sm:$0x3f] %vm2617, %v2928
      %v2931 = vld [vmem:[#allocation3] sm:$0xff]
      %v2932 = vld [vmem:[#allocation3 + $0x8] sm:$0xff]
      %v2933 = vld [vmem:[#allocation3 + $0x10] sm:$0xff]
      %v2934 = vld [vmem:[#allocation3 + $0x18] sm:$0xff]
      %v2935 = vld [vmem:[#allocation3 + $0x20] sm:$0xff]
      %v2936 = vld [vmem:[#allocation3 + $0x28] sm:$0xff]
      %v2937 = vld [vmem:[#allocation3 + $0x30] sm:$0xff]
      %v2938 = vld [vmem:[#allocation3 + $0x38] sm:$0xff]
      %v2939 = vld [vmem:[#allocation3 + $0x40] sm:$0xff]
      %v2940 = vld [vmem:[#allocation3 + $0x48] sm:$0xff]
      %v2941 = vld [vmem:[#allocation3 + $0x50] sm:$0xff]
      %v2942 = vld [vmem:[#allocation3 + $0x58] sm:$0xff]
      %v2943 = vld [vmem:[#allocation3 + $0x60] sm:$0xff]
      %v2944 = vld [vmem:[#allocation3 + $0x68] sm:$0xff]
      %v2945 = vld [vmem:[#allocation3 + $0x70] sm:$0xff]
      %v2946 = vld [vmem:[#allocation3 + $0x78] sm:$0xff]
      %v2947 = vld [vmem:[#allocation3 + $0x80] sm:$0xff]
      %v2948 = vld [vmem:[#allocation3 + $0x88] sm:$0xff]
      %v2949 = vld [vmem:[#allocation3 + $0x90] sm:$0xff]
      %v2950 = vld [vmem:[#allocation3 + $0x98] sm:$0xff]
      %v2951 = vld [vmem:[#allocation3 + $0x1] sm:$0xff]
      %v2952 = vld [vmem:[#allocation3 + $0x9] sm:$0xff]
      %v2953 = vld [vmem:[#allocation3 + $0x11] sm:$0xff]
      %v2954 = vld [vmem:[#allocation3 + $0x19] sm:$0xff]
      %v2955 = vld [vmem:[#allocation3 + $0x21] sm:$0xff]
      %v2956 = vld [vmem:[#allocation3 + $0x29] sm:$0xff]
      %v2957 = vld [vmem:[#allocation3 + $0x31] sm:$0xff]
      %v2958 = vld [vmem:[#allocation3 + $0x39] sm:$0xff]
      %v2959 = vld [vmem:[#allocation3 + $0x41] sm:$0xff]
      %v2960 = vld [vmem:[#allocation3 + $0x49] sm:$0xff]
      %v2961 = vld [vmem:[#allocation3 + $0x51] sm:$0xff]
      %v2962 = vld [vmem:[#allocation3 + $0x59] sm:$0xff]
      %v2963 = vld [vmem:[#allocation3 + $0x61] sm:$0xff]
      %v2964 = vld [vmem:[#allocation3 + $0x69] sm:$0xff]
      %v2965 = vld [vmem:[#allocation3 + $0x71] sm:$0xff]
      %v2966 = vld [vmem:[#allocation3 + $0x79] sm:$0xff]
      %v2967 = vld [vmem:[#allocation3 + $0x81] sm:$0xff]
      %v2968 = vld [vmem:[#allocation3 + $0x89] sm:$0xff]
      %v2969 = vld [vmem:[#allocation3 + $0x91] sm:$0xff]
      %v2970 = vld [vmem:[#allocation3 + $0x99] sm:$0xff]
      %v2971 = vld [vmem:[#allocation3 + $0x2] sm:$0xff]
      %v2972 = vld [vmem:[#allocation3 + $0xa] sm:$0xff]
      %v2973 = vld [vmem:[#allocation3 + $0x12] sm:$0xff]
      %v2974 = vld [vmem:[#allocation3 + $0x1a] sm:$0xff]
      %v2975 = vld [vmem:[#allocation3 + $0x22] sm:$0xff]
      %v2976 = vld [vmem:[#allocation3 + $0x2a] sm:$0xff]
      %v2977 = vld [vmem:[#allocation3 + $0x32] sm:$0xff]
      %v2978 = vld [vmem:[#allocation3 + $0x3a] sm:$0xff]
      %v2979 = vld [vmem:[#allocation3 + $0x42] sm:$0xff]
      %v2980 = vld [vmem:[#allocation3 + $0x4a] sm:$0xff]
      %v2981 = vld [vmem:[#allocation3 + $0x52] sm:$0xff]
      %v2982 = vld [vmem:[#allocation3 + $0x5a] sm:$0xff]
      %v2983 = vld [vmem:[#allocation3 + $0x62] sm:$0xff]
      %v2984 = vld [vmem:[#allocation3 + $0x6a] sm:$0xff]
      %v2985 = vld [vmem:[#allocation3 + $0x72] sm:$0xff]
      %v2986 = vld [vmem:[#allocation3 + $0x7a] sm:$0xff]
      %v2987 = vld [vmem:[#allocation3 + $0x82] sm:$0xff]
      %v2988 = vld [vmem:[#allocation3 + $0x8a] sm:$0xff]
      %v2989 = vld [vmem:[#allocation3 + $0x92] sm:$0xff]
      %v2990 = vld [vmem:[#allocation3 + $0x9a] sm:$0xff]
      %v2991 = vld [vmem:[#allocation3 + $0x3] sm:$0xff]
      %v2992 = vld [vmem:[#allocation3 + $0xb] sm:$0xff]
      %v2993 = vld [vmem:[#allocation3 + $0x13] sm:$0xff]
      %v2994 = vld [vmem:[#allocation3 + $0x1b] sm:$0xff]
      %v2995 = vld [vmem:[#allocation3 + $0x23] sm:$0xff]
      %v2996 = vld [vmem:[#allocation3 + $0x2b] sm:$0xff]
      %v2997 = vld [vmem:[#allocation3 + $0x33] sm:$0xff]
      %v2998 = vld [vmem:[#allocation3 + $0x3b] sm:$0xff]
      %v2999 = vld [vmem:[#allocation3 + $0x43] sm:$0xff]
      %v3000 = vld [vmem:[#allocation3 + $0x4b] sm:$0xff]
      %v3001 = vld [vmem:[#allocation3 + $0x53] sm:$0xff]
      %v3002 = vld [vmem:[#allocation3 + $0x5b] sm:$0xff]
      %v3003 = vld [vmem:[#allocation3 + $0x63] sm:$0xff]
      %v3004 = vld [vmem:[#allocation3 + $0x6b] sm:$0xff]
      %v3005 = vld [vmem:[#allocation3 + $0x73] sm:$0xff]
      %v3006 = vld [vmem:[#allocation3 + $0x7b] sm:$0xff]
      %v3007 = vld [vmem:[#allocation3 + $0x83] sm:$0xff]
      %v3008 = vld [vmem:[#allocation3 + $0x8b] sm:$0xff]
      %v3009 = vld [vmem:[#allocation3 + $0x93] sm:$0xff]
      %v3010 = vld [vmem:[#allocation3 + $0x9b] sm:$0xff]
      %v3011 = vld [vmem:[#allocation3 + $0x4] sm:$0xff]
      %v3012 = vld [vmem:[#allocation3 + $0xc] sm:$0xff]
      %v3013 = vld [vmem:[#allocation3 + $0x14] sm:$0xff]
      %v3014 = vld [vmem:[#allocation3 + $0x1c] sm:$0xff]
      %v3015 = vld [vmem:[#allocation3 + $0x24] sm:$0xff]
      %v3016 = vld [vmem:[#allocation3 + $0x2c] sm:$0xff]
      %v3017 = vld [vmem:[#allocation3 + $0x34] sm:$0xff]
      %v3018 = vld [vmem:[#allocation3 + $0x3c] sm:$0xff]
      %v3019 = vld [vmem:[#allocation3 + $0x44] sm:$0xff]
      %v3020 = vld [vmem:[#allocation3 + $0x4c] sm:$0xff]
      %v3021 = vld [vmem:[#allocation3 + $0x54] sm:$0xff]
      %v3022 = vld [vmem:[#allocation3 + $0x5c] sm:$0xff]
      %v3023 = vld [vmem:[#allocation3 + $0x64] sm:$0xff]
      %v3024 = vld [vmem:[#allocation3 + $0x6c] sm:$0xff]
      %v3025 = vld [vmem:[#allocation3 + $0x74] sm:$0xff]
      %v3026 = vld [vmem:[#allocation3 + $0x7c] sm:$0xff]
      %v3027 = vld [vmem:[#allocation3 + $0x84] sm:$0xff]
      %v3028 = vld [vmem:[#allocation3 + $0x8c] sm:$0xff]
      %v3029 = vld [vmem:[#allocation3 + $0x94] sm:$0xff]
      %v3030 = vld [vmem:[#allocation3 + $0x9c] sm:$0xff]
      %v3031 = vld [vmem:[#allocation3 + $0xa0] sm:$0xff]
      %v3032 = vld [vmem:[#allocation3 + $0xa8] sm:$0xff]
      %v3033 = vld [vmem:[#allocation3 + $0xa1] sm:$0xff]
      %v3034 = vld [vmem:[#allocation3 + $0xa9] sm:$0xff]
      %v3035 = vld [vmem:[#allocation3 + $0xa2] sm:$0xff]
      %v3036 = vld [vmem:[#allocation3 + $0xaa] sm:$0xff]
      %v3037 = vld [vmem:[#allocation3 + $0xa3] sm:$0xff]
      %v3038 = vld [vmem:[#allocation3 + $0xab] sm:$0xff]
      %v3039 = vld [vmem:[#allocation3 + $0xa4] sm:$0xff]
      %v3040 = vld [vmem:[#allocation3 + $0xac] sm:$0xff]
      %v3041 = vld [vmem:[#allocation3 + $0xb0] sm:$0xff]
      %v3042 = vld [vmem:[#allocation3 + $0xb8] sm:$0xff]
      %v3043 = vld [vmem:[#allocation3 + $0xb1] sm:$0xff]
      %v3044 = vld [vmem:[#allocation3 + $0xb9] sm:$0xff]
      %v3045 = vld [vmem:[#allocation3 + $0xb2] sm:$0xff]
      %v3046 = vld [vmem:[#allocation3 + $0xba] sm:$0xff]
      %v3047 = vld [vmem:[#allocation3 + $0xb3] sm:$0xff]
      %v3048 = vld [vmem:[#allocation3 + $0xbb] sm:$0xff]
      %v3049 = vld [vmem:[#allocation3 + $0xb4] sm:$0xff]
      %v3050 = vld [vmem:[#allocation3 + $0xbc] sm:$0xff]
      %v3051 = vld [vmem:[#allocation3 + $0xc0] sm:$0xff]
      %v3052 = vld [vmem:[#allocation3 + $0xc8] sm:$0xff]
      %v3053 = vld [vmem:[#allocation3 + $0xc1] sm:$0xff]
      %v3054 = vld [vmem:[#allocation3 + $0xc9] sm:$0xff]
      %v3055 = vld [vmem:[#allocation3 + $0xc2] sm:$0xff]
      %v3056 = vld [vmem:[#allocation3 + $0xca] sm:$0xff]
      %v3057 = vld [vmem:[#allocation3 + $0xc3] sm:$0xff]
      %v3058 = vld [vmem:[#allocation3 + $0xcb] sm:$0xff]
      %v3059 = vld [vmem:[#allocation3 + $0xc4] sm:$0xff]
      %v3060 = vld [vmem:[#allocation3 + $0xcc] sm:$0xff]
      %v3061 = vld [vmem:[#allocation3 + $0xd0] sm:$0xff]
      %v3062 = vld [vmem:[#allocation3 + $0xd8] sm:$0xff]
      %v3063 = vld [vmem:[#allocation3 + $0xd1] sm:$0xff]
      %v3064 = vld [vmem:[#allocation3 + $0xd9] sm:$0xff]
      %v3065 = vld [vmem:[#allocation3 + $0xd2] sm:$0xff]
      %v3066 = vld [vmem:[#allocation3 + $0xda] sm:$0xff]
      %v3067 = vld [vmem:[#allocation3 + $0xd3] sm:$0xff]
      %v3068 = vld [vmem:[#allocation3 + $0xdb] sm:$0xff]
      %v3069 = vld [vmem:[#allocation3 + $0xd4] sm:$0xff]
      %v3070 = vld [vmem:[#allocation3 + $0xdc] sm:$0xff]
      %3091 = vrot.lane.b32.xlu0 %v2951, 6
      %v3092 = vpop.permute.xlu0 %3091
      %3093 = vrot.lane.b32.xlu0 %v2952, 6
      %v3094 = vpop.permute.xlu0 %3093
      %3095 = vrot.lane.b32.xlu0 %v2953, 6
      %v3096 = vpop.permute.xlu0 %3095
      %3097 = vrot.lane.b32.xlu0 %v2954, 6
      %v3098 = vpop.permute.xlu0 %3097
      %3099 = vrot.lane.b32.xlu0 %v2955, 6
      %v3100 = vpop.permute.xlu0 %3099
      %3101 = vrot.lane.b32.xlu0 %v2956, 6
      %v3102 = vpop.permute.xlu0 %3101
      %3103 = vrot.lane.b32.xlu0 %v2957, 6
      %v3104 = vpop.permute.xlu0 %3103
      %3105 = vrot.lane.b32.xlu0 %v2958, 6
      %v3106 = vpop.permute.xlu0 %3105
      %3107 = vrot.lane.b32.xlu0 %v2959, 6
      %v3108 = vpop.permute.xlu0 %3107
      %3109 = vrot.lane.b32.xlu0 %v2960, 6
      %v3110 = vpop.permute.xlu0 %3109
      %3111 = vrot.lane.b32.xlu0 %v2961, 6
      %v3112 = vpop.permute.xlu0 %3111
      %3113 = vrot.lane.b32.xlu0 %v2962, 6
      %v3114 = vpop.permute.xlu0 %3113
      %3115 = vrot.lane.b32.xlu0 %v2963, 6
      %v3116 = vpop.permute.xlu0 %3115
      %3117 = vrot.lane.b32.xlu0 %v2964, 6
      %v3118 = vpop.permute.xlu0 %3117
      %3119 = vrot.lane.b32.xlu0 %v2965, 6
      %v3120 = vpop.permute.xlu0 %3119
      %3121 = vrot.lane.b32.xlu0 %v2966, 6
      %v3122 = vpop.permute.xlu0 %3121
      %3123 = vrot.lane.b32.xlu0 %v2967, 6
      %v3124 = vpop.permute.xlu0 %3123
      %3125 = vrot.lane.b32.xlu0 %v2968, 6
      %v3126 = vpop.permute.xlu0 %3125
      %3127 = vrot.lane.b32.xlu0 %v2969, 6
      %v3128 = vpop.permute.xlu0 %3127
      %3129 = vrot.lane.b32.xlu0 %v2970, 6
      %v3130 = vpop.permute.xlu0 %3129
      %3171 = vrot.lane.b32.xlu0 %v2971, 12
      %v3172 = vpop.permute.xlu0 %3171
      %3173 = vrot.lane.b32.xlu0 %v2972, 12
      %v3174 = vpop.permute.xlu0 %3173
      %3175 = vrot.lane.b32.xlu0 %v2973, 12
      %v3176 = vpop.permute.xlu0 %3175
      %3177 = vrot.lane.b32.xlu0 %v2974, 12
      %v3178 = vpop.permute.xlu0 %3177
      %3179 = vrot.lane.b32.xlu0 %v2975, 12
      %v3180 = vpop.permute.xlu0 %3179
      %3181 = vrot.lane.b32.xlu0 %v2976, 12
      %v3182 = vpop.permute.xlu0 %3181
      %3183 = vrot.lane.b32.xlu0 %v2977, 12
      %v3184 = vpop.permute.xlu0 %3183
      %3185 = vrot.lane.b32.xlu0 %v2978, 12
      %v3186 = vpop.permute.xlu0 %3185
      %3187 = vrot.lane.b32.xlu0 %v2979, 12
      %v3188 = vpop.permute.xlu0 %3187
      %3189 = vrot.lane.b32.xlu0 %v2980, 12
      %v3190 = vpop.permute.xlu0 %3189
      %3191 = vrot.lane.b32.xlu0 %v2981, 12
      %v3192 = vpop.permute.xlu0 %3191
      %3193 = vrot.lane.b32.xlu0 %v2982, 12
      %v3194 = vpop.permute.xlu0 %3193
      %3195 = vrot.lane.b32.xlu0 %v2983, 12
      %v3196 = vpop.permute.xlu0 %3195
      %3197 = vrot.lane.b32.xlu0 %v2984, 12
      %v3198 = vpop.permute.xlu0 %3197
      %3199 = vrot.lane.b32.xlu0 %v2985, 12
      %v3200 = vpop.permute.xlu0 %3199
      %3201 = vrot.lane.b32.xlu0 %v2986, 12
      %v3202 = vpop.permute.xlu0 %3201
      %3203 = vrot.lane.b32.xlu0 %v2987, 12
      %v3204 = vpop.permute.xlu0 %3203
      %3205 = vrot.lane.b32.xlu0 %v2988, 12
      %v3206 = vpop.permute.xlu0 %3205
      %3207 = vrot.lane.b32.xlu0 %v2989, 12
      %v3208 = vpop.permute.xlu0 %3207
      %3209 = vrot.lane.b32.xlu0 %v2990, 12
      %v3210 = vpop.permute.xlu0 %3209
      %3251 = vrot.lane.b32.xlu0 %v2991, 18
      %v3252 = vpop.permute.xlu0 %3251
      %3253 = vrot.lane.b32.xlu0 %v2992, 18
      %v3254 = vpop.permute.xlu0 %3253
      %3255 = vrot.lane.b32.xlu0 %v2993, 18
      %v3256 = vpop.permute.xlu0 %3255
      %3257 = vrot.lane.b32.xlu0 %v2994, 18
      %v3258 = vpop.permute.xlu0 %3257
      %3259 = vrot.lane.b32.xlu0 %v2995, 18
      %v3260 = vpop.permute.xlu0 %3259
      %3261 = vrot.lane.b32.xlu0 %v2996, 18
      %v3262 = vpop.permute.xlu0 %3261
      %3263 = vrot.lane.b32.xlu0 %v2997, 18
      %v3264 = vpop.permute.xlu0 %3263
      %3265 = vrot.lane.b32.xlu0 %v2998, 18
      %v3266 = vpop.permute.xlu0 %3265
      %3267 = vrot.lane.b32.xlu0 %v2999, 18
      %v3268 = vpop.permute.xlu0 %3267
      %3269 = vrot.lane.b32.xlu0 %v3000, 18
      %v3270 = vpop.permute.xlu0 %3269
      %3271 = vrot.lane.b32.xlu0 %v3001, 18
      %v3272 = vpop.permute.xlu0 %3271
      %3273 = vrot.lane.b32.xlu0 %v3002, 18
      %v3274 = vpop.permute.xlu0 %3273
      %3275 = vrot.lane.b32.xlu0 %v3003, 18
      %v3276 = vpop.permute.xlu0 %3275
      %3277 = vrot.lane.b32.xlu0 %v3004, 18
      %v3278 = vpop.permute.xlu0 %3277
      %3279 = vrot.lane.b32.xlu0 %v3005, 18
      %v3280 = vpop.permute.xlu0 %3279
      %3281 = vrot.lane.b32.xlu0 %v3006, 18
      %v3282 = vpop.permute.xlu0 %3281
      %3283 = vrot.lane.b32.xlu0 %v3007, 18
      %v3284 = vpop.permute.xlu0 %3283
      %3285 = vrot.lane.b32.xlu0 %v3008, 18
      %v3286 = vpop.permute.xlu0 %3285
      %3287 = vrot.lane.b32.xlu0 %v3009, 18
      %v3288 = vpop.permute.xlu0 %3287
      %3289 = vrot.lane.b32.xlu0 %v3010, 18
      %v3290 = vpop.permute.xlu0 %3289
      %3331 = vrot.lane.b32.xlu0 %v3011, 24
      %v3332 = vpop.permute.xlu0 %3331
      %3333 = vrot.lane.b32.xlu0 %v3012, 24
      %v3334 = vpop.permute.xlu0 %3333
      %3335 = vrot.lane.b32.xlu0 %v3013, 24
      %v3336 = vpop.permute.xlu0 %3335
      %3337 = vrot.lane.b32.xlu0 %v3014, 24
      %v3338 = vpop.permute.xlu0 %3337
      %3339 = vrot.lane.b32.xlu0 %v3015, 24
      %v3340 = vpop.permute.xlu0 %3339
      %3341 = vrot.lane.b32.xlu0 %v3016, 24
      %v3342 = vpop.permute.xlu0 %3341
      %3343 = vrot.lane.b32.xlu0 %v3017, 24
      %v3344 = vpop.permute.xlu0 %3343
      %3345 = vrot.lane.b32.xlu0 %v3018, 24
      %v3346 = vpop.permute.xlu0 %3345
      %3347 = vrot.lane.b32.xlu0 %v3019, 24
      %v3348 = vpop.permute.xlu0 %3347
      %3349 = vrot.lane.b32.xlu0 %v3020, 24
      %v3350 = vpop.permute.xlu0 %3349
      %3351 = vrot.lane.b32.xlu0 %v3021, 24
      %v3352 = vpop.permute.xlu0 %3351
      %3353 = vrot.lane.b32.xlu0 %v3022, 24
      %v3354 = vpop.permute.xlu0 %3353
      %3355 = vrot.lane.b32.xlu0 %v3023, 24
      %v3356 = vpop.permute.xlu0 %3355
      %3357 = vrot.lane.b32.xlu0 %v3024, 24
      %v3358 = vpop.permute.xlu0 %3357
      %3359 = vrot.lane.b32.xlu0 %v3025, 24
      %v3360 = vpop.permute.xlu0 %3359
      %3361 = vrot.lane.b32.xlu0 %v3026, 24
      %v3362 = vpop.permute.xlu0 %3361
      %3363 = vrot.lane.b32.xlu0 %v3027, 24
      %v3364 = vpop.permute.xlu0 %3363
      %3365 = vrot.lane.b32.xlu0 %v3028, 24
      %v3366 = vpop.permute.xlu0 %3365
      %3367 = vrot.lane.b32.xlu0 %v3029, 24
      %v3368 = vpop.permute.xlu0 %3367
      %3369 = vrot.lane.b32.xlu0 %v3030, 24
      %v3370 = vpop.permute.xlu0 %3369
      %3411 = vrot.lane.b32.xlu0 %v2933, 30
      %v3412 = vpop.permute.xlu0 %3411
      %3413 = vrot.lane.b32.xlu0 %v2934, 30
      %v3414 = vpop.permute.xlu0 %3413
      %3415 = vrot.lane.b32.xlu0 %v2935, 30
      %v3416 = vpop.permute.xlu0 %3415
      %3417 = vrot.lane.b32.xlu0 %v2936, 30
      %v3418 = vpop.permute.xlu0 %3417
      %3419 = vrot.lane.b32.xlu0 %v2937, 30
      %v3420 = vpop.permute.xlu0 %3419
      %3421 = vrot.lane.b32.xlu0 %v2938, 30
      %v3422 = vpop.permute.xlu0 %3421
      %3423 = vrot.lane.b32.xlu0 %v2939, 30
      %v3424 = vpop.permute.xlu0 %3423
      %3425 = vrot.lane.b32.xlu0 %v2940, 30
      %v3426 = vpop.permute.xlu0 %3425
      %3427 = vrot.lane.b32.xlu0 %v2941, 30
      %v3428 = vpop.permute.xlu0 %3427
      %3429 = vrot.lane.b32.xlu0 %v2942, 30
      %v3430 = vpop.permute.xlu0 %3429
      %3431 = vrot.lane.b32.xlu0 %v2943, 30
      %v3432 = vpop.permute.xlu0 %3431
      %3433 = vrot.lane.b32.xlu0 %v2944, 30
      %v3434 = vpop.permute.xlu0 %3433
      %3435 = vrot.lane.b32.xlu0 %v2945, 30
      %v3436 = vpop.permute.xlu0 %3435
      %3437 = vrot.lane.b32.xlu0 %v2946, 30
      %v3438 = vpop.permute.xlu0 %3437
      %3439 = vrot.lane.b32.xlu0 %v2947, 30
      %v3440 = vpop.permute.xlu0 %3439
      %3441 = vrot.lane.b32.xlu0 %v2948, 30
      %v3442 = vpop.permute.xlu0 %3441
      %3443 = vrot.lane.b32.xlu0 %v2949, 30
      %v3444 = vpop.permute.xlu0 %3443
      %3445 = vrot.lane.b32.xlu0 %v2950, 30
      %v3446 = vpop.permute.xlu0 %3445
      %3447 = vrot.lane.b32.xlu0 %v3031, 30
      %v3448 = vpop.permute.xlu0 %3447
      %3449 = vrot.lane.b32.xlu0 %v3032, 30
      %v3450 = vpop.permute.xlu0 %3449
      %3473 = vrot.lane.b32.xlu0 %v2953, 36
      %v3474 = vpop.permute.xlu0 %3473
      %3475 = vrot.lane.b32.xlu0 %v2954, 36
      %v3476 = vpop.permute.xlu0 %3475
      %3477 = vrot.lane.b32.xlu0 %v2955, 36
      %v3478 = vpop.permute.xlu0 %3477
      %3479 = vrot.lane.b32.xlu0 %v2956, 36
      %v3480 = vpop.permute.xlu0 %3479
      %3481 = vrot.lane.b32.xlu0 %v2957, 36
      %v3482 = vpop.permute.xlu0 %3481
      %3483 = vrot.lane.b32.xlu0 %v2958, 36
      %v3484 = vpop.permute.xlu0 %3483
      %3485 = vrot.lane.b32.xlu0 %v2959, 36
      %v3486 = vpop.permute.xlu0 %3485
      %3487 = vrot.lane.b32.xlu0 %v2960, 36
      %v3488 = vpop.permute.xlu0 %3487
      %3489 = vrot.lane.b32.xlu0 %v2961, 36
      %v3490 = vpop.permute.xlu0 %3489
      %3491 = vrot.lane.b32.xlu0 %v2962, 36
      %v3492 = vpop.permute.xlu0 %3491
      %3493 = vrot.lane.b32.xlu0 %v2963, 36
      %v3494 = vpop.permute.xlu0 %3493
      %3495 = vrot.lane.b32.xlu0 %v2964, 36
      %v3496 = vpop.permute.xlu0 %3495
      %3497 = vrot.lane.b32.xlu0 %v2965, 36
      %v3498 = vpop.permute.xlu0 %3497
      %3499 = vrot.lane.b32.xlu0 %v2966, 36
      %v3500 = vpop.permute.xlu0 %3499
      %3501 = vrot.lane.b32.xlu0 %v2967, 36
      %v3502 = vpop.permute.xlu0 %3501
      %3503 = vrot.lane.b32.xlu0 %v2968, 36
      %v3504 = vpop.permute.xlu0 %3503
      %3505 = vrot.lane.b32.xlu0 %v2969, 36
      %v3506 = vpop.permute.xlu0 %3505
      %3507 = vrot.lane.b32.xlu0 %v2970, 36
      %v3508 = vpop.permute.xlu0 %3507
      %3509 = vrot.lane.b32.xlu0 %v3033, 36
      %v3510 = vpop.permute.xlu0 %3509
      %3511 = vrot.lane.b32.xlu0 %v3034, 36
      %v3512 = vpop.permute.xlu0 %3511
      %3535 = vrot.lane.b32.xlu0 %v2973, 42
      %v3536 = vpop.permute.xlu0 %3535
      %3537 = vrot.lane.b32.xlu0 %v2974, 42
      %v3538 = vpop.permute.xlu0 %3537
      %3539 = vrot.lane.b32.xlu0 %v2975, 42
      %v3540 = vpop.permute.xlu0 %3539
      %3541 = vrot.lane.b32.xlu0 %v2976, 42
      %v3542 = vpop.permute.xlu0 %3541
      %3543 = vrot.lane.b32.xlu0 %v2977, 42
      %v3544 = vpop.permute.xlu0 %3543
      %3545 = vrot.lane.b32.xlu0 %v2978, 42
      %v3546 = vpop.permute.xlu0 %3545
      %3547 = vrot.lane.b32.xlu0 %v2979, 42
      %v3548 = vpop.permute.xlu0 %3547
      %3549 = vrot.lane.b32.xlu0 %v2980, 42
      %v3550 = vpop.permute.xlu0 %3549
      %3551 = vrot.lane.b32.xlu0 %v2981, 42
      %v3552 = vpop.permute.xlu0 %3551
      %3553 = vrot.lane.b32.xlu0 %v2982, 42
      %v3554 = vpop.permute.xlu0 %3553
      %3555 = vrot.lane.b32.xlu0 %v2983, 42
      %v3556 = vpop.permute.xlu0 %3555
      %3557 = vrot.lane.b32.xlu0 %v2984, 42
      %v3558 = vpop.permute.xlu0 %3557
      %3559 = vrot.lane.b32.xlu0 %v2985, 42
      %v3560 = vpop.permute.xlu0 %3559
      %3561 = vrot.lane.b32.xlu0 %v2986, 42
      %v3562 = vpop.permute.xlu0 %3561
      %3563 = vrot.lane.b32.xlu0 %v2987, 42
      %v3564 = vpop.permute.xlu0 %3563
      %3565 = vrot.lane.b32.xlu0 %v2988, 42
      %v3566 = vpop.permute.xlu0 %3565
      %3567 = vrot.lane.b32.xlu0 %v2989, 42
      %v3568 = vpop.permute.xlu0 %3567
      %3569 = vrot.lane.b32.xlu0 %v2990, 42
      %v3570 = vpop.permute.xlu0 %3569
      %3571 = vrot.lane.b32.xlu0 %v3035, 42
      %v3572 = vpop.permute.xlu0 %3571
      %3573 = vrot.lane.b32.xlu0 %v3036, 42
      %v3574 = vpop.permute.xlu0 %3573
      %3597 = vrot.lane.b32.xlu0 %v2993, 48
      %v3598 = vpop.permute.xlu0 %3597
      %3599 = vrot.lane.b32.xlu0 %v2994, 48
      %v3600 = vpop.permute.xlu0 %3599
      %3601 = vrot.lane.b32.xlu0 %v2995, 48
      %v3602 = vpop.permute.xlu0 %3601
      %3603 = vrot.lane.b32.xlu0 %v2996, 48
      %v3604 = vpop.permute.xlu0 %3603
      %3605 = vrot.lane.b32.xlu0 %v2997, 48
      %v3606 = vpop.permute.xlu0 %3605
      %3607 = vrot.lane.b32.xlu0 %v2998, 48
      %v3608 = vpop.permute.xlu0 %3607
      %3609 = vrot.lane.b32.xlu0 %v2999, 48
      %v3610 = vpop.permute.xlu0 %3609
      %3611 = vrot.lane.b32.xlu0 %v3000, 48
      %v3612 = vpop.permute.xlu0 %3611
      %3613 = vrot.lane.b32.xlu0 %v3001, 48
      %v3614 = vpop.permute.xlu0 %3613
      %3615 = vrot.lane.b32.xlu0 %v3002, 48
      %v3616 = vpop.permute.xlu0 %3615
      %3617 = vrot.lane.b32.xlu0 %v3003, 48
      %v3618 = vpop.permute.xlu0 %3617
      %3619 = vrot.lane.b32.xlu0 %v3004, 48
      %v3620 = vpop.permute.xlu0 %3619
      %3621 = vrot.lane.b32.xlu0 %v3005, 48
      %v3622 = vpop.permute.xlu0 %3621
      %3623 = vrot.lane.b32.xlu0 %v3006, 48
      %v3624 = vpop.permute.xlu0 %3623
      %3625 = vrot.lane.b32.xlu0 %v3007, 48
      %v3626 = vpop.permute.xlu0 %3625
      %3627 = vrot.lane.b32.xlu0 %v3008, 48
      %v3628 = vpop.permute.xlu0 %3627
      %3629 = vrot.lane.b32.xlu0 %v3009, 48
      %v3630 = vpop.permute.xlu0 %3629
      %3631 = vrot.lane.b32.xlu0 %v3010, 48
      %v3632 = vpop.permute.xlu0 %3631
      %3633 = vrot.lane.b32.xlu0 %v3037, 48
      %v3634 = vpop.permute.xlu0 %3633
      %3635 = vrot.lane.b32.xlu0 %v3038, 48
      %v3636 = vpop.permute.xlu0 %3635
      %3659 = vrot.lane.b32.xlu0 %v3013, 54
      %v3660 = vpop.permute.xlu0 %3659
      %3661 = vrot.lane.b32.xlu0 %v3014, 54
      %v3662 = vpop.permute.xlu0 %3661
      %3663 = vrot.lane.b32.xlu0 %v3015, 54
      %v3664 = vpop.permute.xlu0 %3663
      %3665 = vrot.lane.b32.xlu0 %v3016, 54
      %v3666 = vpop.permute.xlu0 %3665
      %3667 = vrot.lane.b32.xlu0 %v3017, 54
      %v3668 = vpop.permute.xlu0 %3667
      %3669 = vrot.lane.b32.xlu0 %v3018, 54
      %v3670 = vpop.permute.xlu0 %3669
      %3671 = vrot.lane.b32.xlu0 %v3019, 54
      %v3672 = vpop.permute.xlu0 %3671
      %3673 = vrot.lane.b32.xlu0 %v3020, 54
      %v3674 = vpop.permute.xlu0 %3673
      %3675 = vrot.lane.b32.xlu0 %v3021, 54
      %v3676 = vpop.permute.xlu0 %3675
      %3677 = vrot.lane.b32.xlu0 %v3022, 54
      %v3678 = vpop.permute.xlu0 %3677
      %3679 = vrot.lane.b32.xlu0 %v3023, 54
      %v3680 = vpop.permute.xlu0 %3679
      %3681 = vrot.lane.b32.xlu0 %v3024, 54
      %v3682 = vpop.permute.xlu0 %3681
      %3683 = vrot.lane.b32.xlu0 %v3025, 54
      %v3684 = vpop.permute.xlu0 %3683
      %3685 = vrot.lane.b32.xlu0 %v3026, 54
      %v3686 = vpop.permute.xlu0 %3685
      %3687 = vrot.lane.b32.xlu0 %v3027, 54
      %v3688 = vpop.permute.xlu0 %3687
      %3689 = vrot.lane.b32.xlu0 %v3028, 54
      %v3690 = vpop.permute.xlu0 %3689
      %3691 = vrot.lane.b32.xlu0 %v3029, 54
      %v3692 = vpop.permute.xlu0 %3691
      %3693 = vrot.lane.b32.xlu0 %v3030, 54
      %v3694 = vpop.permute.xlu0 %3693
      %3695 = vrot.lane.b32.xlu0 %v3039, 54
      %v3696 = vpop.permute.xlu0 %3695
      %3697 = vrot.lane.b32.xlu0 %v3040, 54
      %v3698 = vpop.permute.xlu0 %3697
      %3721 = vrot.lane.b32.xlu0 %v2935, 60
      %v3722 = vpop.permute.xlu0 %3721
      %3723 = vrot.lane.b32.xlu0 %v2936, 60
      %v3724 = vpop.permute.xlu0 %3723
      %3725 = vrot.lane.b32.xlu0 %v2937, 60
      %v3726 = vpop.permute.xlu0 %3725
      %3727 = vrot.lane.b32.xlu0 %v2938, 60
      %v3728 = vpop.permute.xlu0 %3727
      %3729 = vrot.lane.b32.xlu0 %v2939, 60
      %v3730 = vpop.permute.xlu0 %3729
      %3731 = vrot.lane.b32.xlu0 %v2940, 60
      %v3732 = vpop.permute.xlu0 %3731
      %3733 = vrot.lane.b32.xlu0 %v2941, 60
      %v3734 = vpop.permute.xlu0 %3733
      %3735 = vrot.lane.b32.xlu0 %v2942, 60
      %v3736 = vpop.permute.xlu0 %3735
      %3737 = vrot.lane.b32.xlu0 %v2943, 60
      %v3738 = vpop.permute.xlu0 %3737
      %3739 = vrot.lane.b32.xlu0 %v2944, 60
      %v3740 = vpop.permute.xlu0 %3739
      %3741 = vrot.lane.b32.xlu0 %v2945, 60
      %v3742 = vpop.permute.xlu0 %3741
      %3743 = vrot.lane.b32.xlu0 %v2946, 60
      %v3744 = vpop.permute.xlu0 %3743
      %3745 = vrot.lane.b32.xlu0 %v2947, 60
      %v3746 = vpop.permute.xlu0 %3745
      %3747 = vrot.lane.b32.xlu0 %v2948, 60
      %v3748 = vpop.permute.xlu0 %3747
      %3749 = vrot.lane.b32.xlu0 %v2949, 60
      %v3750 = vpop.permute.xlu0 %3749
      %3751 = vrot.lane.b32.xlu0 %v2950, 60
      %v3752 = vpop.permute.xlu0 %3751
      %3753 = vrot.lane.b32.xlu0 %v3031, 60
      %v3754 = vpop.permute.xlu0 %3753
      %3755 = vrot.lane.b32.xlu0 %v3032, 60
      %v3756 = vpop.permute.xlu0 %3755
      %3757 = vrot.lane.b32.xlu0 %v3041, 60
      %v3758 = vpop.permute.xlu0 %3757
      %3759 = vrot.lane.b32.xlu0 %v3042, 60
      %v3760 = vpop.permute.xlu0 %3759
      %3783 = vrot.lane.b32.xlu0 %v2955, 66
      %v3784 = vpop.permute.xlu0 %3783
      %3785 = vrot.lane.b32.xlu0 %v2956, 66
      %v3786 = vpop.permute.xlu0 %3785
      %3787 = vrot.lane.b32.xlu0 %v2957, 66
      %v3788 = vpop.permute.xlu0 %3787
      %3789 = vrot.lane.b32.xlu0 %v2958, 66
      %v3790 = vpop.permute.xlu0 %3789
      %3791 = vrot.lane.b32.xlu0 %v2959, 66
      %v3792 = vpop.permute.xlu0 %3791
      %3793 = vrot.lane.b32.xlu0 %v2960, 66
      %v3794 = vpop.permute.xlu0 %3793
      %3795 = vrot.lane.b32.xlu0 %v2961, 66
      %v3796 = vpop.permute.xlu0 %3795
      %3797 = vrot.lane.b32.xlu0 %v2962, 66
      %v3798 = vpop.permute.xlu0 %3797
      %3799 = vrot.lane.b32.xlu0 %v2963, 66
      %v3800 = vpop.permute.xlu0 %3799
      %3801 = vrot.lane.b32.xlu0 %v2964, 66
      %v3802 = vpop.permute.xlu0 %3801
      %3803 = vrot.lane.b32.xlu0 %v2965, 66
      %v3804 = vpop.permute.xlu0 %3803
      %3805 = vrot.lane.b32.xlu0 %v2966, 66
      %v3806 = vpop.permute.xlu0 %3805
      %3807 = vrot.lane.b32.xlu0 %v2967, 66
      %v3808 = vpop.permute.xlu0 %3807
      %3809 = vrot.lane.b32.xlu0 %v2968, 66
      %v3810 = vpop.permute.xlu0 %3809
      %3811 = vrot.lane.b32.xlu0 %v2969, 66
      %v3812 = vpop.permute.xlu0 %3811
      %3813 = vrot.lane.b32.xlu0 %v2970, 66
      %v3814 = vpop.permute.xlu0 %3813
      %3815 = vrot.lane.b32.xlu0 %v3033, 66
      %v3816 = vpop.permute.xlu0 %3815
      %3817 = vrot.lane.b32.xlu0 %v3034, 66
      %v3818 = vpop.permute.xlu0 %3817
      %3819 = vrot.lane.b32.xlu0 %v3043, 66
      %v3820 = vpop.permute.xlu0 %3819
      %3821 = vrot.lane.b32.xlu0 %v3044, 66
      %v3822 = vpop.permute.xlu0 %3821
      %3845 = vrot.lane.b32.xlu0 %v2975, 72
      %v3846 = vpop.permute.xlu0 %3845
      %3847 = vrot.lane.b32.xlu0 %v2976, 72
      %v3848 = vpop.permute.xlu0 %3847
      %3849 = vrot.lane.b32.xlu0 %v2977, 72
      %v3850 = vpop.permute.xlu0 %3849
      %3851 = vrot.lane.b32.xlu0 %v2978, 72
      %v3852 = vpop.permute.xlu0 %3851
      %3853 = vrot.lane.b32.xlu0 %v2979, 72
      %v3854 = vpop.permute.xlu0 %3853
      %3855 = vrot.lane.b32.xlu0 %v2980, 72
      %v3856 = vpop.permute.xlu0 %3855
      %3857 = vrot.lane.b32.xlu0 %v2981, 72
      %v3858 = vpop.permute.xlu0 %3857
      %3859 = vrot.lane.b32.xlu0 %v2982, 72
      %v3860 = vpop.permute.xlu0 %3859
      %3861 = vrot.lane.b32.xlu0 %v2983, 72
      %v3862 = vpop.permute.xlu0 %3861
      %3863 = vrot.lane.b32.xlu0 %v2984, 72
      %v3864 = vpop.permute.xlu0 %3863
      %3865 = vrot.lane.b32.xlu0 %v2985, 72
      %v3866 = vpop.permute.xlu0 %3865
      %3867 = vrot.lane.b32.xlu0 %v2986, 72
      %v3868 = vpop.permute.xlu0 %3867
      %3869 = vrot.lane.b32.xlu0 %v2987, 72
      %v3870 = vpop.permute.xlu0 %3869
      %3871 = vrot.lane.b32.xlu0 %v2988, 72
      %v3872 = vpop.permute.xlu0 %3871
      %3873 = vrot.lane.b32.xlu0 %v2989, 72
      %v3874 = vpop.permute.xlu0 %3873
      %3875 = vrot.lane.b32.xlu0 %v2990, 72
      %v3876 = vpop.permute.xlu0 %3875
      %3877 = vrot.lane.b32.xlu0 %v3035, 72
      %v3878 = vpop.permute.xlu0 %3877
      %3879 = vrot.lane.b32.xlu0 %v3036, 72
      %v3880 = vpop.permute.xlu0 %3879
      %3881 = vrot.lane.b32.xlu0 %v3045, 72
      %v3882 = vpop.permute.xlu0 %3881
      %3883 = vrot.lane.b32.xlu0 %v3046, 72
      %v3884 = vpop.permute.xlu0 %3883
      %3907 = vrot.lane.b32.xlu0 %v2995, 78
      %v3908 = vpop.permute.xlu0 %3907
      %3909 = vrot.lane.b32.xlu0 %v2996, 78
      %v3910 = vpop.permute.xlu0 %3909
      %3911 = vrot.lane.b32.xlu0 %v2997, 78
      %v3912 = vpop.permute.xlu0 %3911
      %3913 = vrot.lane.b32.xlu0 %v2998, 78
      %v3914 = vpop.permute.xlu0 %3913
      %3915 = vrot.lane.b32.xlu0 %v2999, 78
      %v3916 = vpop.permute.xlu0 %3915
      %3917 = vrot.lane.b32.xlu0 %v3000, 78
      %v3918 = vpop.permute.xlu0 %3917
      %3919 = vrot.lane.b32.xlu0 %v3001, 78
      %v3920 = vpop.permute.xlu0 %3919
      %3921 = vrot.lane.b32.xlu0 %v3002, 78
      %v3922 = vpop.permute.xlu0 %3921
      %3923 = vrot.lane.b32.xlu0 %v3003, 78
      %v3924 = vpop.permute.xlu0 %3923
      %3925 = vrot.lane.b32.xlu0 %v3004, 78
      %v3926 = vpop.permute.xlu0 %3925
      %3927 = vrot.lane.b32.xlu0 %v3005, 78
      %v3928 = vpop.permute.xlu0 %3927
      %3929 = vrot.lane.b32.xlu0 %v3006, 78
      %v3930 = vpop.permute.xlu0 %3929
      %3931 = vrot.lane.b32.xlu0 %v3007, 78
      %v3932 = vpop.permute.xlu0 %3931
      %3933 = vrot.lane.b32.xlu0 %v3008, 78
      %v3934 = vpop.permute.xlu0 %3933
      %3935 = vrot.lane.b32.xlu0 %v3009, 78
      %v3936 = vpop.permute.xlu0 %3935
      %3937 = vrot.lane.b32.xlu0 %v3010, 78
      %v3938 = vpop.permute.xlu0 %3937
      %3939 = vrot.lane.b32.xlu0 %v3037, 78
      %v3940 = vpop.permute.xlu0 %3939
      %3941 = vrot.lane.b32.xlu0 %v3038, 78
      %v3942 = vpop.permute.xlu0 %3941
      %3943 = vrot.lane.b32.xlu0 %v3047, 78
      %v3944 = vpop.permute.xlu0 %3943
      %3945 = vrot.lane.b32.xlu0 %v3048, 78
      %v3946 = vpop.permute.xlu0 %3945
      %3969 = vrot.lane.b32.xlu0 %v3015, 84
      %v3970 = vpop.permute.xlu0 %3969
      %3971 = vrot.lane.b32.xlu0 %v3016, 84
      %v3972 = vpop.permute.xlu0 %3971
      %3973 = vrot.lane.b32.xlu0 %v3017, 84
      %v3974 = vpop.permute.xlu0 %3973
      %3975 = vrot.lane.b32.xlu0 %v3018, 84
      %v3976 = vpop.permute.xlu0 %3975
      %3977 = vrot.lane.b32.xlu0 %v3019, 84
      %v3978 = vpop.permute.xlu0 %3977
      %3979 = vrot.lane.b32.xlu0 %v3020, 84
      %v3980 = vpop.permute.xlu0 %3979
      %3981 = vrot.lane.b32.xlu0 %v3021, 84
      %v3982 = vpop.permute.xlu0 %3981
      %3983 = vrot.lane.b32.xlu0 %v3022, 84
      %v3984 = vpop.permute.xlu0 %3983
      %3985 = vrot.lane.b32.xlu0 %v3023, 84
      %v3986 = vpop.permute.xlu0 %3985
      %3987 = vrot.lane.b32.xlu0 %v3024, 84
      %v3988 = vpop.permute.xlu0 %3987
      %3989 = vrot.lane.b32.xlu0 %v3025, 84
      %v3990 = vpop.permute.xlu0 %3989
      %3991 = vrot.lane.b32.xlu0 %v3026, 84
      %v3992 = vpop.permute.xlu0 %3991
      %3993 = vrot.lane.b32.xlu0 %v3027, 84
      %v3994 = vpop.permute.xlu0 %3993
      %3995 = vrot.lane.b32.xlu0 %v3028, 84
      %v3996 = vpop.permute.xlu0 %3995
      %3997 = vrot.lane.b32.xlu0 %v3029, 84
      %v3998 = vpop.permute.xlu0 %3997
      %3999 = vrot.lane.b32.xlu0 %v3030, 84
      %v4000 = vpop.permute.xlu0 %3999
      %4001 = vrot.lane.b32.xlu0 %v3039, 84
      %v4002 = vpop.permute.xlu0 %4001
      %4003 = vrot.lane.b32.xlu0 %v3040, 84
      %v4004 = vpop.permute.xlu0 %4003
      %4005 = vrot.lane.b32.xlu0 %v3049, 84
      %v4006 = vpop.permute.xlu0 %4005
      %4007 = vrot.lane.b32.xlu0 %v3050, 84
      %v4008 = vpop.permute.xlu0 %4007
      %4031 = vrot.lane.b32.xlu0 %v2937, 90
      %v4032 = vpop.permute.xlu0 %4031
      %4033 = vrot.lane.b32.xlu0 %v2938, 90
      %v4034 = vpop.permute.xlu0 %4033
      %4035 = vrot.lane.b32.xlu0 %v2939, 90
      %v4036 = vpop.permute.xlu0 %4035
      %4037 = vrot.lane.b32.xlu0 %v2940, 90
      %v4038 = vpop.permute.xlu0 %4037
      %4039 = vrot.lane.b32.xlu0 %v2941, 90
      %v4040 = vpop.permute.xlu0 %4039
      %4041 = vrot.lane.b32.xlu0 %v2942, 90
      %v4042 = vpop.permute.xlu0 %4041
      %4043 = vrot.lane.b32.xlu0 %v2943, 90
      %v4044 = vpop.permute.xlu0 %4043
      %4045 = vrot.lane.b32.xlu0 %v2944, 90
      %v4046 = vpop.permute.xlu0 %4045
      %4047 = vrot.lane.b32.xlu0 %v2945, 90
      %v4048 = vpop.permute.xlu0 %4047
      %4049 = vrot.lane.b32.xlu0 %v2946, 90
      %v4050 = vpop.permute.xlu0 %4049
      %4051 = vrot.lane.b32.xlu0 %v2947, 90
      %v4052 = vpop.permute.xlu0 %4051
      %4053 = vrot.lane.b32.xlu0 %v2948, 90
      %v4054 = vpop.permute.xlu0 %4053
      %4055 = vrot.lane.b32.xlu0 %v2949, 90
      %v4056 = vpop.permute.xlu0 %4055
      %4057 = vrot.lane.b32.xlu0 %v2950, 90
      %v4058 = vpop.permute.xlu0 %4057
      %4059 = vrot.lane.b32.xlu0 %v3031, 90
      %v4060 = vpop.permute.xlu0 %4059
      %4061 = vrot.lane.b32.xlu0 %v3032, 90
      %v4062 = vpop.permute.xlu0 %4061
      %4063 = vrot.lane.b32.xlu0 %v3041, 90
      %v4064 = vpop.permute.xlu0 %4063
      %4065 = vrot.lane.b32.xlu0 %v3042, 90
      %v4066 = vpop.permute.xlu0 %4065
      %4067 = vrot.lane.b32.xlu0 %v3051, 90
      %v4068 = vpop.permute.xlu0 %4067
      %4069 = vrot.lane.b32.xlu0 %v3052, 90
      %v4070 = vpop.permute.xlu0 %4069
      %v4091 = vsel %vm2452, %v2931, %v3092
      %v4092 = vsel %vm2452, %v2932, %v3094
      %v4093 = vsel %vm2452, %v2933, %v3096
      %v4094 = vsel %vm2452, %v2934, %v3098
      %v4095 = vsel %vm2452, %v2935, %v3100
      %v4096 = vsel %vm2452, %v2936, %v3102
      %v4097 = vsel %vm2452, %v2937, %v3104
      %v4098 = vsel %vm2452, %v2938, %v3106
      %v4099 = vsel %vm2452, %v2939, %v3108
      %v4100 = vsel %vm2452, %v2940, %v3110
      %v4101 = vsel %vm2452, %v2941, %v3112
      %v4102 = vsel %vm2452, %v2942, %v3114
      %v4103 = vsel %vm2452, %v2943, %v3116
      %v4104 = vsel %vm2452, %v2944, %v3118
      %v4105 = vsel %vm2452, %v2945, %v3120
      %v4106 = vsel %vm2452, %v2946, %v3122
      %v4107 = vsel %vm2452, %v2947, %v3124
      %v4108 = vsel %vm2452, %v2948, %v3126
      %v4109 = vsel %vm2452, %v2949, %v3128
      %v4110 = vsel %vm2452, %v2950, %v3130
      %vm4111 = vcmask 97280
      %v4112 = vsel %vm4111, %v4091, %v3172
      %v4113 = vsel %vm4111, %v4092, %v3174
      %v4114 = vsel %vm4111, %v4093, %v3176
      %v4115 = vsel %vm4111, %v4094, %v3178
      %v4116 = vsel %vm4111, %v4095, %v3180
      %v4117 = vsel %vm4111, %v4096, %v3182
      %v4118 = vsel %vm4111, %v4097, %v3184
      %v4119 = vsel %vm4111, %v4098, %v3186
      %v4120 = vsel %vm4111, %v4099, %v3188
      %v4121 = vsel %vm4111, %v4100, %v3190
      %v4122 = vsel %vm4111, %v4101, %v3192
      %v4123 = vsel %vm4111, %v4102, %v3194
      %v4124 = vsel %vm4111, %v4103, %v3196
      %v4125 = vsel %vm4111, %v4104, %v3198
      %v4126 = vsel %vm4111, %v4105, %v3200
      %v4127 = vsel %vm4111, %v4106, %v3202
      %v4128 = vsel %vm4111, %v4107, %v3204
      %v4129 = vsel %vm4111, %v4108, %v3206
      %v4130 = vsel %vm4111, %v4109, %v3208
      %v4131 = vsel %vm4111, %v4110, %v3210
      %vm4132 = vcmask 146432
      %v4133 = vsel %vm4132, %v4112, %v3252
      %v4134 = vsel %vm4132, %v4113, %v3254
      %v4135 = vsel %vm4132, %v4114, %v3256
      %v4136 = vsel %vm4132, %v4115, %v3258
      %v4137 = vsel %vm4132, %v4116, %v3260
      %v4138 = vsel %vm4132, %v4117, %v3262
      %v4139 = vsel %vm4132, %v4118, %v3264
      %v4140 = vsel %vm4132, %v4119, %v3266
      %v4141 = vsel %vm4132, %v4120, %v3268
      %v4142 = vsel %vm4132, %v4121, %v3270
      %v4143 = vsel %vm4132, %v4122, %v3272
      %v4144 = vsel %vm4132, %v4123, %v3274
      %v4145 = vsel %vm4132, %v4124, %v3276
      %v4146 = vsel %vm4132, %v4125, %v3278
      %v4147 = vsel %vm4132, %v4126, %v3280
      %v4148 = vsel %vm4132, %v4127, %v3282
      %v4149 = vsel %vm4132, %v4128, %v3284
      %v4150 = vsel %vm4132, %v4129, %v3286
      %v4151 = vsel %vm4132, %v4130, %v3288
      %v4152 = vsel %vm4132, %v4131, %v3290
      %vm4153 = vcmask 195584
      %v4154 = vsel %vm4153, %v4133, %v3332
      %v4155 = vsel %vm4153, %v4134, %v3334
      %v4156 = vsel %vm4153, %v4135, %v3336
      %v4157 = vsel %vm4153, %v4136, %v3338
      %v4158 = vsel %vm4153, %v4137, %v3340
      %v4159 = vsel %vm4153, %v4138, %v3342
      %v4160 = vsel %vm4153, %v4139, %v3344
      %v4161 = vsel %vm4153, %v4140, %v3346
      %v4162 = vsel %vm4153, %v4141, %v3348
      %v4163 = vsel %vm4153, %v4142, %v3350
      %v4164 = vsel %vm4153, %v4143, %v3352
      %v4165 = vsel %vm4153, %v4144, %v3354
      %v4166 = vsel %vm4153, %v4145, %v3356
      %v4167 = vsel %vm4153, %v4146, %v3358
      %v4168 = vsel %vm4153, %v4147, %v3360
      %v4169 = vsel %vm4153, %v4148, %v3362
      %v4170 = vsel %vm4153, %v4149, %v3364
      %v4171 = vsel %vm4153, %v4150, %v3366
      %v4172 = vsel %vm4153, %v4151, %v3368
      %v4173 = vsel %vm4153, %v4152, %v3370
      %vm4174 = vcmask 244736
      %v4175 = vsel %vm4174, %v4154, %v3412
      %v4176 = vsel %vm4174, %v4155, %v3414
      %v4177 = vsel %vm4174, %v4156, %v3416
      %v4178 = vsel %vm4174, %v4157, %v3418
      %v4179 = vsel %vm4174, %v4158, %v3420
      %v4180 = vsel %vm4174, %v4159, %v3422
      %v4181 = vsel %vm4174, %v4160, %v3424
      %v4182 = vsel %vm4174, %v4161, %v3426
      %v4183 = vsel %vm4174, %v4162, %v3428
      %v4184 = vsel %vm4174, %v4163, %v3430
      %v4185 = vsel %vm4174, %v4164, %v3432
      %v4186 = vsel %vm4174, %v4165, %v3434
      %v4187 = vsel %vm4174, %v4166, %v3436
      %v4188 = vsel %vm4174, %v4167, %v3438
      %v4189 = vsel %vm4174, %v4168, %v3440
      %v4190 = vsel %vm4174, %v4169, %v3442
      %v4191 = vsel %vm4174, %v4170, %v3444
      %v4192 = vsel %vm4174, %v4171, %v3446
      %v4193 = vsel %vm4174, %v4172, %v3448
      %v4194 = vsel %vm4174, %v4173, %v3450
      %vm4195 = vcmask 293888
      %v4196 = vsel %vm4195, %v4175, %v3474
      %v4197 = vsel %vm4195, %v4176, %v3476
      %v4198 = vsel %vm4195, %v4177, %v3478
      %v4199 = vsel %vm4195, %v4178, %v3480
      %v4200 = vsel %vm4195, %v4179, %v3482
      %v4201 = vsel %vm4195, %v4180, %v3484
      %v4202 = vsel %vm4195, %v4181, %v3486
      %v4203 = vsel %vm4195, %v4182, %v3488
      %v4204 = vsel %vm4195, %v4183, %v3490
      %v4205 = vsel %vm4195, %v4184, %v3492
      %v4206 = vsel %vm4195, %v4185, %v3494
      %v4207 = vsel %vm4195, %v4186, %v3496
      %v4208 = vsel %vm4195, %v4187, %v3498
      %v4209 = vsel %vm4195, %v4188, %v3500
      %v4210 = vsel %vm4195, %v4189, %v3502
      %v4211 = vsel %vm4195, %v4190, %v3504
      %v4212 = vsel %vm4195, %v4191, %v3506
      %v4213 = vsel %vm4195, %v4192, %v3508
      %v4214 = vsel %vm4195, %v4193, %v3510
      %v4215 = vsel %vm4195, %v4194, %v3512
      %vm4216 = vcmask 343040
      %v4217 = vsel %vm4216, %v4196, %v3536
      %v4218 = vsel %vm4216, %v4197, %v3538
      %v4219 = vsel %vm4216, %v4198, %v3540
      %v4220 = vsel %vm4216, %v4199, %v3542
      %v4221 = vsel %vm4216, %v4200, %v3544
      %v4222 = vsel %vm4216, %v4201, %v3546
      %v4223 = vsel %vm4216, %v4202, %v3548
      %v4224 = vsel %vm4216, %v4203, %v3550
      %v4225 = vsel %vm4216, %v4204, %v3552
      %v4226 = vsel %vm4216, %v4205, %v3554
      %v4227 = vsel %vm4216, %v4206, %v3556
      %v4228 = vsel %vm4216, %v4207, %v3558
      %v4229 = vsel %vm4216, %v4208, %v3560
      %v4230 = vsel %vm4216, %v4209, %v3562
      %v4231 = vsel %vm4216, %v4210, %v3564
      %v4232 = vsel %vm4216, %v4211, %v3566
      %v4233 = vsel %vm4216, %v4212, %v3568
      %v4234 = vsel %vm4216, %v4213, %v3570
      %v4235 = vsel %vm4216, %v4214, %v3572
      %v4236 = vsel %vm4216, %v4215, %v3574
      %vm4237 = vcmask 392192
      %v4238 = vsel %vm4237, %v4217, %v3598
      %v4239 = vsel %vm4237, %v4218, %v3600
      %v4240 = vsel %vm4237, %v4219, %v3602
      %v4241 = vsel %vm4237, %v4220, %v3604
      %v4242 = vsel %vm4237, %v4221, %v3606
      %v4243 = vsel %vm4237, %v4222, %v3608
      %v4244 = vsel %vm4237, %v4223, %v3610
      %v4245 = vsel %vm4237, %v4224, %v3612
      %v4246 = vsel %vm4237, %v4225, %v3614
      %v4247 = vsel %vm4237, %v4226, %v3616
      %v4248 = vsel %vm4237, %v4227, %v3618
      %v4249 = vsel %vm4237, %v4228, %v3620
      %v4250 = vsel %vm4237, %v4229, %v3622
      %v4251 = vsel %vm4237, %v4230, %v3624
      %v4252 = vsel %vm4237, %v4231, %v3626
      %v4253 = vsel %vm4237, %v4232, %v3628
      %v4254 = vsel %vm4237, %v4233, %v3630
      %v4255 = vsel %vm4237, %v4234, %v3632
      %v4256 = vsel %vm4237, %v4235, %v3634
      %v4257 = vsel %vm4237, %v4236, %v3636
      %vm4258 = vcmask 441344
      %v4259 = vsel %vm4258, %v4238, %v3660
      %v4260 = vsel %vm4258, %v4239, %v3662
      %v4261 = vsel %vm4258, %v4240, %v3664
      %v4262 = vsel %vm4258, %v4241, %v3666
      %v4263 = vsel %vm4258, %v4242, %v3668
      %v4264 = vsel %vm4258, %v4243, %v3670
      %v4265 = vsel %vm4258, %v4244, %v3672
      %v4266 = vsel %vm4258, %v4245, %v3674
      %v4267 = vsel %vm4258, %v4246, %v3676
      %v4268 = vsel %vm4258, %v4247, %v3678
      %v4269 = vsel %vm4258, %v4248, %v3680
      %v4270 = vsel %vm4258, %v4249, %v3682
      %v4271 = vsel %vm4258, %v4250, %v3684
      %v4272 = vsel %vm4258, %v4251, %v3686
      %v4273 = vsel %vm4258, %v4252, %v3688
      %v4274 = vsel %vm4258, %v4253, %v3690
      %v4275 = vsel %vm4258, %v4254, %v3692
      %v4276 = vsel %vm4258, %v4255, %v3694
      %v4277 = vsel %vm4258, %v4256, %v3696
      %v4278 = vsel %vm4258, %v4257, %v3698
      %v4279 = vsel %vm683, %v4259, %v3722
      %v4280 = vsel %vm683, %v4260, %v3724
      %v4281 = vsel %vm683, %v4261, %v3726
      %v4282 = vsel %vm683, %v4262, %v3728
      %v4283 = vsel %vm683, %v4263, %v3730
      %v4284 = vsel %vm683, %v4264, %v3732
      %v4285 = vsel %vm683, %v4265, %v3734
      %v4286 = vsel %vm683, %v4266, %v3736
      %v4287 = vsel %vm683, %v4267, %v3738
      %v4288 = vsel %vm683, %v4268, %v3740
      %v4289 = vsel %vm683, %v4269, %v3742
      %v4290 = vsel %vm683, %v4270, %v3744
      %v4291 = vsel %vm683, %v4271, %v3746
      %v4292 = vsel %vm683, %v4272, %v3748
      %v4293 = vsel %vm683, %v4273, %v3750
      %v4294 = vsel %vm683, %v4274, %v3752
      %v4295 = vsel %vm683, %v4275, %v3754
      %v4296 = vsel %vm683, %v4276, %v3756
      %v4297 = vsel %vm683, %v4277, %v3758
      %v4298 = vsel %vm683, %v4278, %v3760
      %vm4299 = vcmask 539648
      %v4300 = vsel %vm4299, %v4279, %v3784
      %v4301 = vsel %vm4299, %v4280, %v3786
      %v4302 = vsel %vm4299, %v4281, %v3788
      %v4303 = vsel %vm4299, %v4282, %v3790
      %v4304 = vsel %vm4299, %v4283, %v3792
      %v4305 = vsel %vm4299, %v4284, %v3794
      %v4306 = vsel %vm4299, %v4285, %v3796
      %v4307 = vsel %vm4299, %v4286, %v3798
      %v4308 = vsel %vm4299, %v4287, %v3800
      %v4309 = vsel %vm4299, %v4288, %v3802
      %v4310 = vsel %vm4299, %v4289, %v3804
      %v4311 = vsel %vm4299, %v4290, %v3806
      %v4312 = vsel %vm4299, %v4291, %v3808
      %v4313 = vsel %vm4299, %v4292, %v3810
      %v4314 = vsel %vm4299, %v4293, %v3812
      %v4315 = vsel %vm4299, %v4294, %v3814
      %v4316 = vsel %vm4299, %v4295, %v3816
      %v4317 = vsel %vm4299, %v4296, %v3818
      %v4318 = vsel %vm4299, %v4297, %v3820
      %v4319 = vsel %vm4299, %v4298, %v3822
      %vm4320 = vcmask 588800
      %v4321 = vsel %vm4320, %v4300, %v3846
      %v4322 = vsel %vm4320, %v4301, %v3848
      %v4323 = vsel %vm4320, %v4302, %v3850
      %v4324 = vsel %vm4320, %v4303, %v3852
      %v4325 = vsel %vm4320, %v4304, %v3854
      %v4326 = vsel %vm4320, %v4305, %v3856
      %v4327 = vsel %vm4320, %v4306, %v3858
      %v4328 = vsel %vm4320, %v4307, %v3860
      %v4329 = vsel %vm4320, %v4308, %v3862
      %v4330 = vsel %vm4320, %v4309, %v3864
      %v4331 = vsel %vm4320, %v4310, %v3866
      %v4332 = vsel %vm4320, %v4311, %v3868
      %v4333 = vsel %vm4320, %v4312, %v3870
      %v4334 = vsel %vm4320, %v4313, %v3872
      %v4335 = vsel %vm4320, %v4314, %v3874
      %v4336 = vsel %vm4320, %v4315, %v3876
      %v4337 = vsel %vm4320, %v4316, %v3878
      %v4338 = vsel %vm4320, %v4317, %v3880
      %v4339 = vsel %vm4320, %v4318, %v3882
      %v4340 = vsel %vm4320, %v4319, %v3884
      %vm4341 = vcmask 637952
      %v4342 = vsel %vm4341, %v4321, %v3908
      %v4343 = vsel %vm4341, %v4322, %v3910
      %v4344 = vsel %vm4341, %v4323, %v3912
      %v4345 = vsel %vm4341, %v4324, %v3914
      %v4346 = vsel %vm4341, %v4325, %v3916
      %v4347 = vsel %vm4341, %v4326, %v3918
      %v4348 = vsel %vm4341, %v4327, %v3920
      %v4349 = vsel %vm4341, %v4328, %v3922
      %v4350 = vsel %vm4341, %v4329, %v3924
      %v4351 = vsel %vm4341, %v4330, %v3926
      %v4352 = vsel %vm4341, %v4331, %v3928
      %v4353 = vsel %vm4341, %v4332, %v3930
      %v4354 = vsel %vm4341, %v4333, %v3932
      %v4355 = vsel %vm4341, %v4334, %v3934
      %v4356 = vsel %vm4341, %v4335, %v3936
      %v4357 = vsel %vm4341, %v4336, %v3938
      %v4358 = vsel %vm4341, %v4337, %v3940
      %v4359 = vsel %vm4341, %v4338, %v3942
      %v4360 = vsel %vm4341, %v4339, %v3944
      %v4361 = vsel %vm4341, %v4340, %v3946
      %vm4362 = vcmask 687104
      %v4363 = vsel %vm4362, %v4342, %v3970
      %v4364 = vsel %vm4362, %v4343, %v3972
      %v4365 = vsel %vm4362, %v4344, %v3974
      %v4366 = vsel %vm4362, %v4345, %v3976
      %v4367 = vsel %vm4362, %v4346, %v3978
      %v4368 = vsel %vm4362, %v4347, %v3980
      %v4369 = vsel %vm4362, %v4348, %v3982
      %v4370 = vsel %vm4362, %v4349, %v3984
      %v4371 = vsel %vm4362, %v4350, %v3986
      %v4372 = vsel %vm4362, %v4351, %v3988
      %v4373 = vsel %vm4362, %v4352, %v3990
      %v4374 = vsel %vm4362, %v4353, %v3992
      %v4375 = vsel %vm4362, %v4354, %v3994
      %v4376 = vsel %vm4362, %v4355, %v3996
      %v4377 = vsel %vm4362, %v4356, %v3998
      %v4378 = vsel %vm4362, %v4357, %v4000
      %v4379 = vsel %vm4362, %v4358, %v4002
      %v4380 = vsel %vm4362, %v4359, %v4004
      %v4381 = vsel %vm4362, %v4360, %v4006
      %v4382 = vsel %vm4362, %v4361, %v4008
      %vm4383 = vcmask 736256
      %v4384 = vsel %vm4383, %v4363, %v4032
      %v4385 = vsel %vm4383, %v4364, %v4034
      %v4386 = vsel %vm4383, %v4365, %v4036
      %v4387 = vsel %vm4383, %v4366, %v4038
      %v4388 = vsel %vm4383, %v4367, %v4040
      %v4389 = vsel %vm4383, %v4368, %v4042
      %v4390 = vsel %vm4383, %v4369, %v4044
      %v4391 = vsel %vm4383, %v4370, %v4046
      %v4392 = vsel %vm4383, %v4371, %v4048
      %v4393 = vsel %vm4383, %v4372, %v4050
      %v4394 = vsel %vm4383, %v4373, %v4052
      %v4395 = vsel %vm4383, %v4374, %v4054
      %v4396 = vsel %vm4383, %v4375, %v4056
      %v4397 = vsel %vm4383, %v4376, %v4058
      %v4398 = vsel %vm4383, %v4377, %v4060
      %v4399 = vsel %vm4383, %v4378, %v4062
      %v4400 = vsel %vm4383, %v4379, %v4064
      %v4401 = vsel %vm4383, %v4380, %v4066
      %v4402 = vsel %vm4383, %v4381, %v4068
      %v4403 = vsel %vm4383, %v4382, %v4070
      %4406 = vrot.lane.b32.xlu0 %v2977, 6
      %v4407 = vpop.permute.xlu0 %4406
      %4408 = vrot.lane.b32.xlu0 %v2978, 6
      %v4409 = vpop.permute.xlu0 %4408
      %4410 = vrot.lane.b32.xlu0 %v2979, 6
      %v4411 = vpop.permute.xlu0 %4410
      %4412 = vrot.lane.b32.xlu0 %v2980, 6
      %v4413 = vpop.permute.xlu0 %4412
      %4414 = vrot.lane.b32.xlu0 %v2981, 6
      %v4415 = vpop.permute.xlu0 %4414
      %4416 = vrot.lane.b32.xlu0 %v2982, 6
      %v4417 = vpop.permute.xlu0 %4416
      %4418 = vrot.lane.b32.xlu0 %v2983, 6
      %v4419 = vpop.permute.xlu0 %4418
      %4420 = vrot.lane.b32.xlu0 %v2984, 6
      %v4421 = vpop.permute.xlu0 %4420
      %4422 = vrot.lane.b32.xlu0 %v2985, 6
      %v4423 = vpop.permute.xlu0 %4422
      %4424 = vrot.lane.b32.xlu0 %v2986, 6
      %v4425 = vpop.permute.xlu0 %4424
      %4426 = vrot.lane.b32.xlu0 %v2987, 6
      %v4427 = vpop.permute.xlu0 %4426
      %4428 = vrot.lane.b32.xlu0 %v2988, 6
      %v4429 = vpop.permute.xlu0 %4428
      %4430 = vrot.lane.b32.xlu0 %v2989, 6
      %v4431 = vpop.permute.xlu0 %4430
      %4432 = vrot.lane.b32.xlu0 %v2990, 6
      %v4433 = vpop.permute.xlu0 %4432
      %4434 = vrot.lane.b32.xlu0 %v3035, 6
      %v4435 = vpop.permute.xlu0 %4434
      %4436 = vrot.lane.b32.xlu0 %v3036, 6
      %v4437 = vpop.permute.xlu0 %4436
      %4438 = vrot.lane.b32.xlu0 %v3045, 6
      %v4439 = vpop.permute.xlu0 %4438
      %4440 = vrot.lane.b32.xlu0 %v3046, 6
      %v4441 = vpop.permute.xlu0 %4440
      %4442 = vrot.lane.b32.xlu0 %v3055, 6
      %v4443 = vpop.permute.xlu0 %4442
      %4444 = vrot.lane.b32.xlu0 %v3056, 6
      %v4445 = vpop.permute.xlu0 %4444
      %4468 = vrot.lane.b32.xlu0 %v2997, 12
      %v4469 = vpop.permute.xlu0 %4468
      %4470 = vrot.lane.b32.xlu0 %v2998, 12
      %v4471 = vpop.permute.xlu0 %4470
      %4472 = vrot.lane.b32.xlu0 %v2999, 12
      %v4473 = vpop.permute.xlu0 %4472
      %4474 = vrot.lane.b32.xlu0 %v3000, 12
      %v4475 = vpop.permute.xlu0 %4474
      %4476 = vrot.lane.b32.xlu0 %v3001, 12
      %v4477 = vpop.permute.xlu0 %4476
      %4478 = vrot.lane.b32.xlu0 %v3002, 12
      %v4479 = vpop.permute.xlu0 %4478
      %4480 = vrot.lane.b32.xlu0 %v3003, 12
      %v4481 = vpop.permute.xlu0 %4480
      %4482 = vrot.lane.b32.xlu0 %v3004, 12
      %v4483 = vpop.permute.xlu0 %4482
      %4484 = vrot.lane.b32.xlu0 %v3005, 12
      %v4485 = vpop.permute.xlu0 %4484
      %4486 = vrot.lane.b32.xlu0 %v3006, 12
      %v4487 = vpop.permute.xlu0 %4486
      %4488 = vrot.lane.b32.xlu0 %v3007, 12
      %v4489 = vpop.permute.xlu0 %4488
      %4490 = vrot.lane.b32.xlu0 %v3008, 12
      %v4491 = vpop.permute.xlu0 %4490
      %4492 = vrot.lane.b32.xlu0 %v3009, 12
      %v4493 = vpop.permute.xlu0 %4492
      %4494 = vrot.lane.b32.xlu0 %v3010, 12
      %v4495 = vpop.permute.xlu0 %4494
      %4496 = vrot.lane.b32.xlu0 %v3037, 12
      %v4497 = vpop.permute.xlu0 %4496
      %4498 = vrot.lane.b32.xlu0 %v3038, 12
      %v4499 = vpop.permute.xlu0 %4498
      %4500 = vrot.lane.b32.xlu0 %v3047, 12
      %v4501 = vpop.permute.xlu0 %4500
      %4502 = vrot.lane.b32.xlu0 %v3048, 12
      %v4503 = vpop.permute.xlu0 %4502
      %4504 = vrot.lane.b32.xlu0 %v3057, 12
      %v4505 = vpop.permute.xlu0 %4504
      %4506 = vrot.lane.b32.xlu0 %v3058, 12
      %v4507 = vpop.permute.xlu0 %4506
      %4530 = vrot.lane.b32.xlu0 %v3017, 18
      %v4531 = vpop.permute.xlu0 %4530
      %4532 = vrot.lane.b32.xlu0 %v3018, 18
      %v4533 = vpop.permute.xlu0 %4532
      %4534 = vrot.lane.b32.xlu0 %v3019, 18
      %v4535 = vpop.permute.xlu0 %4534
      %4536 = vrot.lane.b32.xlu0 %v3020, 18
      %v4537 = vpop.permute.xlu0 %4536
      %4538 = vrot.lane.b32.xlu0 %v3021, 18
      %v4539 = vpop.permute.xlu0 %4538
      %4540 = vrot.lane.b32.xlu0 %v3022, 18
      %v4541 = vpop.permute.xlu0 %4540
      %4542 = vrot.lane.b32.xlu0 %v3023, 18
      %v4543 = vpop.permute.xlu0 %4542
      %4544 = vrot.lane.b32.xlu0 %v3024, 18
      %v4545 = vpop.permute.xlu0 %4544
      %4546 = vrot.lane.b32.xlu0 %v3025, 18
      %v4547 = vpop.permute.xlu0 %4546
      %4548 = vrot.lane.b32.xlu0 %v3026, 18
      %v4549 = vpop.permute.xlu0 %4548
      %4550 = vrot.lane.b32.xlu0 %v3027, 18
      %v4551 = vpop.permute.xlu0 %4550
      %4552 = vrot.lane.b32.xlu0 %v3028, 18
      %v4553 = vpop.permute.xlu0 %4552
      %4554 = vrot.lane.b32.xlu0 %v3029, 18
      %v4555 = vpop.permute.xlu0 %4554
      %4556 = vrot.lane.b32.xlu0 %v3030, 18
      %v4557 = vpop.permute.xlu0 %4556
      %4558 = vrot.lane.b32.xlu0 %v3039, 18
      %v4559 = vpop.permute.xlu0 %4558
      %4560 = vrot.lane.b32.xlu0 %v3040, 18
      %v4561 = vpop.permute.xlu0 %4560
      %4562 = vrot.lane.b32.xlu0 %v3049, 18
      %v4563 = vpop.permute.xlu0 %4562
      %4564 = vrot.lane.b32.xlu0 %v3050, 18
      %v4565 = vpop.permute.xlu0 %4564
      %4566 = vrot.lane.b32.xlu0 %v3059, 18
      %v4567 = vpop.permute.xlu0 %4566
      %4568 = vrot.lane.b32.xlu0 %v3060, 18
      %v4569 = vpop.permute.xlu0 %4568
      %4592 = vrot.lane.b32.xlu0 %v2939, 24
      %v4593 = vpop.permute.xlu0 %4592
      %4594 = vrot.lane.b32.xlu0 %v2940, 24
      %v4595 = vpop.permute.xlu0 %4594
      %4596 = vrot.lane.b32.xlu0 %v2941, 24
      %v4597 = vpop.permute.xlu0 %4596
      %4598 = vrot.lane.b32.xlu0 %v2942, 24
      %v4599 = vpop.permute.xlu0 %4598
      %4600 = vrot.lane.b32.xlu0 %v2943, 24
      %v4601 = vpop.permute.xlu0 %4600
      %4602 = vrot.lane.b32.xlu0 %v2944, 24
      %v4603 = vpop.permute.xlu0 %4602
      %4604 = vrot.lane.b32.xlu0 %v2945, 24
      %v4605 = vpop.permute.xlu0 %4604
      %4606 = vrot.lane.b32.xlu0 %v2946, 24
      %v4607 = vpop.permute.xlu0 %4606
      %4608 = vrot.lane.b32.xlu0 %v2947, 24
      %v4609 = vpop.permute.xlu0 %4608
      %4610 = vrot.lane.b32.xlu0 %v2948, 24
      %v4611 = vpop.permute.xlu0 %4610
      %4612 = vrot.lane.b32.xlu0 %v2949, 24
      %v4613 = vpop.permute.xlu0 %4612
      %4614 = vrot.lane.b32.xlu0 %v2950, 24
      %v4615 = vpop.permute.xlu0 %4614
      %4616 = vrot.lane.b32.xlu0 %v3031, 24
      %v4617 = vpop.permute.xlu0 %4616
      %4618 = vrot.lane.b32.xlu0 %v3032, 24
      %v4619 = vpop.permute.xlu0 %4618
      %4620 = vrot.lane.b32.xlu0 %v3041, 24
      %v4621 = vpop.permute.xlu0 %4620
      %4622 = vrot.lane.b32.xlu0 %v3042, 24
      %v4623 = vpop.permute.xlu0 %4622
      %4624 = vrot.lane.b32.xlu0 %v3051, 24
      %v4625 = vpop.permute.xlu0 %4624
      %4626 = vrot.lane.b32.xlu0 %v3052, 24
      %v4627 = vpop.permute.xlu0 %4626
      %4628 = vrot.lane.b32.xlu0 %v3061, 24
      %v4629 = vpop.permute.xlu0 %4628
      %4630 = vrot.lane.b32.xlu0 %v3062, 24
      %v4631 = vpop.permute.xlu0 %4630
      %4656 = vrot.lane.b32.xlu0 %v2959, 30
      %v4657 = vpop.permute.xlu0 %4656
      %4658 = vrot.lane.b32.xlu0 %v2960, 30
      %v4659 = vpop.permute.xlu0 %4658
      %4660 = vrot.lane.b32.xlu0 %v2961, 30
      %v4661 = vpop.permute.xlu0 %4660
      %4662 = vrot.lane.b32.xlu0 %v2962, 30
      %v4663 = vpop.permute.xlu0 %4662
      %4664 = vrot.lane.b32.xlu0 %v2963, 30
      %v4665 = vpop.permute.xlu0 %4664
      %4666 = vrot.lane.b32.xlu0 %v2964, 30
      %v4667 = vpop.permute.xlu0 %4666
      %4668 = vrot.lane.b32.xlu0 %v2965, 30
      %v4669 = vpop.permute.xlu0 %4668
      %4670 = vrot.lane.b32.xlu0 %v2966, 30
      %v4671 = vpop.permute.xlu0 %4670
      %4672 = vrot.lane.b32.xlu0 %v2967, 30
      %v4673 = vpop.permute.xlu0 %4672
      %4674 = vrot.lane.b32.xlu0 %v2968, 30
      %v4675 = vpop.permute.xlu0 %4674
      %4676 = vrot.lane.b32.xlu0 %v2969, 30
      %v4677 = vpop.permute.xlu0 %4676
      %4678 = vrot.lane.b32.xlu0 %v2970, 30
      %v4679 = vpop.permute.xlu0 %4678
      %4680 = vrot.lane.b32.xlu0 %v3033, 30
      %v4681 = vpop.permute.xlu0 %4680
      %4682 = vrot.lane.b32.xlu0 %v3034, 30
      %v4683 = vpop.permute.xlu0 %4682
      %4684 = vrot.lane.b32.xlu0 %v3043, 30
      %v4685 = vpop.permute.xlu0 %4684
      %4686 = vrot.lane.b32.xlu0 %v3044, 30
      %v4687 = vpop.permute.xlu0 %4686
      %4688 = vrot.lane.b32.xlu0 %v3053, 30
      %v4689 = vpop.permute.xlu0 %4688
      %4690 = vrot.lane.b32.xlu0 %v3054, 30
      %v4691 = vpop.permute.xlu0 %4690
      %4692 = vrot.lane.b32.xlu0 %v3063, 30
      %v4693 = vpop.permute.xlu0 %4692
      %4694 = vrot.lane.b32.xlu0 %v3064, 30
      %v4695 = vpop.permute.xlu0 %4694
      %4718 = vrot.lane.b32.xlu0 %v2979, 36
      %v4719 = vpop.permute.xlu0 %4718
      %4720 = vrot.lane.b32.xlu0 %v2980, 36
      %v4721 = vpop.permute.xlu0 %4720
      %4722 = vrot.lane.b32.xlu0 %v2981, 36
      %v4723 = vpop.permute.xlu0 %4722
      %4724 = vrot.lane.b32.xlu0 %v2982, 36
      %v4725 = vpop.permute.xlu0 %4724
      %4726 = vrot.lane.b32.xlu0 %v2983, 36
      %v4727 = vpop.permute.xlu0 %4726
      %4728 = vrot.lane.b32.xlu0 %v2984, 36
      %v4729 = vpop.permute.xlu0 %4728
      %4730 = vrot.lane.b32.xlu0 %v2985, 36
      %v4731 = vpop.permute.xlu0 %4730
      %4732 = vrot.lane.b32.xlu0 %v2986, 36
      %v4733 = vpop.permute.xlu0 %4732
      %4734 = vrot.lane.b32.xlu0 %v2987, 36
      %v4735 = vpop.permute.xlu0 %4734
      %4736 = vrot.lane.b32.xlu0 %v2988, 36
      %v4737 = vpop.permute.xlu0 %4736
      %4738 = vrot.lane.b32.xlu0 %v2989, 36
      %v4739 = vpop.permute.xlu0 %4738
      %4740 = vrot.lane.b32.xlu0 %v2990, 36
      %v4741 = vpop.permute.xlu0 %4740
      %4742 = vrot.lane.b32.xlu0 %v3035, 36
      %v4743 = vpop.permute.xlu0 %4742
      %4744 = vrot.lane.b32.xlu0 %v3036, 36
      %v4745 = vpop.permute.xlu0 %4744
      %4746 = vrot.lane.b32.xlu0 %v3045, 36
      %v4747 = vpop.permute.xlu0 %4746
      %4748 = vrot.lane.b32.xlu0 %v3046, 36
      %v4749 = vpop.permute.xlu0 %4748
      %4750 = vrot.lane.b32.xlu0 %v3055, 36
      %v4751 = vpop.permute.xlu0 %4750
      %4752 = vrot.lane.b32.xlu0 %v3056, 36
      %v4753 = vpop.permute.xlu0 %4752
      %4754 = vrot.lane.b32.xlu0 %v3065, 36
      %v4755 = vpop.permute.xlu0 %4754
      %4756 = vrot.lane.b32.xlu0 %v3066, 36
      %v4757 = vpop.permute.xlu0 %4756
      %4780 = vrot.lane.b32.xlu0 %v2999, 42
      %v4781 = vpop.permute.xlu0 %4780
      %4782 = vrot.lane.b32.xlu0 %v3000, 42
      %v4783 = vpop.permute.xlu0 %4782
      %4784 = vrot.lane.b32.xlu0 %v3001, 42
      %v4785 = vpop.permute.xlu0 %4784
      %4786 = vrot.lane.b32.xlu0 %v3002, 42
      %v4787 = vpop.permute.xlu0 %4786
      %4788 = vrot.lane.b32.xlu0 %v3003, 42
      %v4789 = vpop.permute.xlu0 %4788
      %4790 = vrot.lane.b32.xlu0 %v3004, 42
      %v4791 = vpop.permute.xlu0 %4790
      %4792 = vrot.lane.b32.xlu0 %v3005, 42
      %v4793 = vpop.permute.xlu0 %4792
      %4794 = vrot.lane.b32.xlu0 %v3006, 42
      %v4795 = vpop.permute.xlu0 %4794
      %4796 = vrot.lane.b32.xlu0 %v3007, 42
      %v4797 = vpop.permute.xlu0 %4796
      %4798 = vrot.lane.b32.xlu0 %v3008, 42
      %v4799 = vpop.permute.xlu0 %4798
      %4800 = vrot.lane.b32.xlu0 %v3009, 42
      %v4801 = vpop.permute.xlu0 %4800
      %4802 = vrot.lane.b32.xlu0 %v3010, 42
      %v4803 = vpop.permute.xlu0 %4802
      %4804 = vrot.lane.b32.xlu0 %v3037, 42
      %v4805 = vpop.permute.xlu0 %4804
      %4806 = vrot.lane.b32.xlu0 %v3038, 42
      %v4807 = vpop.permute.xlu0 %4806
      %4808 = vrot.lane.b32.xlu0 %v3047, 42
      %v4809 = vpop.permute.xlu0 %4808
      %4810 = vrot.lane.b32.xlu0 %v3048, 42
      %v4811 = vpop.permute.xlu0 %4810
      %4812 = vrot.lane.b32.xlu0 %v3057, 42
      %v4813 = vpop.permute.xlu0 %4812
      %4814 = vrot.lane.b32.xlu0 %v3058, 42
      %v4815 = vpop.permute.xlu0 %4814
      %4816 = vrot.lane.b32.xlu0 %v3067, 42
      %v4817 = vpop.permute.xlu0 %4816
      %4818 = vrot.lane.b32.xlu0 %v3068, 42
      %v4819 = vpop.permute.xlu0 %4818
      %4842 = vrot.lane.b32.xlu0 %v3019, 48
      %v4843 = vpop.permute.xlu0 %4842
      %4844 = vrot.lane.b32.xlu0 %v3020, 48
      %v4845 = vpop.permute.xlu0 %4844
      %4846 = vrot.lane.b32.xlu0 %v3021, 48
      %v4847 = vpop.permute.xlu0 %4846
      %4848 = vrot.lane.b32.xlu0 %v3022, 48
      %v4849 = vpop.permute.xlu0 %4848
      %4850 = vrot.lane.b32.xlu0 %v3023, 48
      %v4851 = vpop.permute.xlu0 %4850
      %4852 = vrot.lane.b32.xlu0 %v3024, 48
      %v4853 = vpop.permute.xlu0 %4852
      %4854 = vrot.lane.b32.xlu0 %v3025, 48
      %v4855 = vpop.permute.xlu0 %4854
      %4856 = vrot.lane.b32.xlu0 %v3026, 48
      %v4857 = vpop.permute.xlu0 %4856
      %4858 = vrot.lane.b32.xlu0 %v3027, 48
      %v4859 = vpop.permute.xlu0 %4858
      %4860 = vrot.lane.b32.xlu0 %v3028, 48
      %v4861 = vpop.permute.xlu0 %4860
      %4862 = vrot.lane.b32.xlu0 %v3029, 48
      %v4863 = vpop.permute.xlu0 %4862
      %4864 = vrot.lane.b32.xlu0 %v3030, 48
      %v4865 = vpop.permute.xlu0 %4864
      %4866 = vrot.lane.b32.xlu0 %v3039, 48
      %v4867 = vpop.permute.xlu0 %4866
      %4868 = vrot.lane.b32.xlu0 %v3040, 48
      %v4869 = vpop.permute.xlu0 %4868
      %4870 = vrot.lane.b32.xlu0 %v3049, 48
      %v4871 = vpop.permute.xlu0 %4870
      %4872 = vrot.lane.b32.xlu0 %v3050, 48
      %v4873 = vpop.permute.xlu0 %4872
      %4874 = vrot.lane.b32.xlu0 %v3059, 48
      %v4875 = vpop.permute.xlu0 %4874
      %4876 = vrot.lane.b32.xlu0 %v3060, 48
      %v4877 = vpop.permute.xlu0 %4876
      %4878 = vrot.lane.b32.xlu0 %v3069, 48
      %v4879 = vpop.permute.xlu0 %4878
      %4880 = vrot.lane.b32.xlu0 %v3070, 48
      %v4881 = vpop.permute.xlu0 %4880
      %v4902 = vsel %vm2452, %v2957, %v4407
      %v4903 = vsel %vm2452, %v2958, %v4409
      %v4904 = vsel %vm2452, %v2959, %v4411
      %v4905 = vsel %vm2452, %v2960, %v4413
      %v4906 = vsel %vm2452, %v2961, %v4415
      %v4907 = vsel %vm2452, %v2962, %v4417
      %v4908 = vsel %vm2452, %v2963, %v4419
      %v4909 = vsel %vm2452, %v2964, %v4421
      %v4910 = vsel %vm2452, %v2965, %v4423
      %v4911 = vsel %vm2452, %v2966, %v4425
      %v4912 = vsel %vm2452, %v2967, %v4427
      %v4913 = vsel %vm2452, %v2968, %v4429
      %v4914 = vsel %vm2452, %v2969, %v4431
      %v4915 = vsel %vm2452, %v2970, %v4433
      %v4916 = vsel %vm2452, %v3033, %v4435
      %v4917 = vsel %vm2452, %v3034, %v4437
      %v4918 = vsel %vm2452, %v3043, %v4439
      %v4919 = vsel %vm2452, %v3044, %v4441
      %v4920 = vsel %vm2452, %v3053, %v4443
      %v4921 = vsel %vm2452, %v3054, %v4445
      %v4922 = vsel %vm4111, %v4902, %v4469
      %v4923 = vsel %vm4111, %v4903, %v4471
      %v4924 = vsel %vm4111, %v4904, %v4473
      %v4925 = vsel %vm4111, %v4905, %v4475
      %v4926 = vsel %vm4111, %v4906, %v4477
      %v4927 = vsel %vm4111, %v4907, %v4479
      %v4928 = vsel %vm4111, %v4908, %v4481
      %v4929 = vsel %vm4111, %v4909, %v4483
      %v4930 = vsel %vm4111, %v4910, %v4485
      %v4931 = vsel %vm4111, %v4911, %v4487
      %v4932 = vsel %vm4111, %v4912, %v4489
      %v4933 = vsel %vm4111, %v4913, %v4491
      %v4934 = vsel %vm4111, %v4914, %v4493
      %v4935 = vsel %vm4111, %v4915, %v4495
      %v4936 = vsel %vm4111, %v4916, %v4497
      %v4937 = vsel %vm4111, %v4917, %v4499
      %v4938 = vsel %vm4111, %v4918, %v4501
      %v4939 = vsel %vm4111, %v4919, %v4503
      %v4940 = vsel %vm4111, %v4920, %v4505
      %v4941 = vsel %vm4111, %v4921, %v4507
      %v4942 = vsel %vm4132, %v4922, %v4531
      %v4943 = vsel %vm4132, %v4923, %v4533
      %v4944 = vsel %vm4132, %v4924, %v4535
      %v4945 = vsel %vm4132, %v4925, %v4537
      %v4946 = vsel %vm4132, %v4926, %v4539
      %v4947 = vsel %vm4132, %v4927, %v4541
      %v4948 = vsel %vm4132, %v4928, %v4543
      %v4949 = vsel %vm4132, %v4929, %v4545
      %v4950 = vsel %vm4132, %v4930, %v4547
      %v4951 = vsel %vm4132, %v4931, %v4549
      %v4952 = vsel %vm4132, %v4932, %v4551
      %v4953 = vsel %vm4132, %v4933, %v4553
      %v4954 = vsel %vm4132, %v4934, %v4555
      %v4955 = vsel %vm4132, %v4935, %v4557
      %v4956 = vsel %vm4132, %v4936, %v4559
      %v4957 = vsel %vm4132, %v4937, %v4561
      %v4958 = vsel %vm4132, %v4938, %v4563
      %v4959 = vsel %vm4132, %v4939, %v4565
      %v4960 = vsel %vm4132, %v4940, %v4567
      %v4961 = vsel %vm4132, %v4941, %v4569
      %v4962 = vsel %vm4153, %v4942, %v4593
      %v4963 = vsel %vm4153, %v4943, %v4595
      %v4964 = vsel %vm4153, %v4944, %v4597
      %v4965 = vsel %vm4153, %v4945, %v4599
      %v4966 = vsel %vm4153, %v4946, %v4601
      %v4967 = vsel %vm4153, %v4947, %v4603
      %v4968 = vsel %vm4153, %v4948, %v4605
      %v4969 = vsel %vm4153, %v4949, %v4607
      %v4970 = vsel %vm4153, %v4950, %v4609
      %v4971 = vsel %vm4153, %v4951, %v4611
      %v4972 = vsel %vm4153, %v4952, %v4613
      %v4973 = vsel %vm4153, %v4953, %v4615
      %v4974 = vsel %vm4153, %v4954, %v4617
      %v4975 = vsel %vm4153, %v4955, %v4619
      %v4976 = vsel %vm4153, %v4956, %v4621
      %v4977 = vsel %vm4153, %v4957, %v4623
      %v4978 = vsel %vm4153, %v4958, %v4625
      %v4979 = vsel %vm4153, %v4959, %v4627
      %v4980 = vsel %vm4153, %v4960, %v4629
      %v4981 = vsel %vm4153, %v4961, %v4631
      %v4982 = vsel %vm4174, %v4962, %v4657
      %v4983 = vsel %vm4174, %v4963, %v4659
      %v4984 = vsel %vm4174, %v4964, %v4661
      %v4985 = vsel %vm4174, %v4965, %v4663
      %v4986 = vsel %vm4174, %v4966, %v4665
      %v4987 = vsel %vm4174, %v4967, %v4667
      %v4988 = vsel %vm4174, %v4968, %v4669
      %v4989 = vsel %vm4174, %v4969, %v4671
      %v4990 = vsel %vm4174, %v4970, %v4673
      %v4991 = vsel %vm4174, %v4971, %v4675
      %v4992 = vsel %vm4174, %v4972, %v4677
      %v4993 = vsel %vm4174, %v4973, %v4679
      %v4994 = vsel %vm4174, %v4974, %v4681
      %v4995 = vsel %vm4174, %v4975, %v4683
      %v4996 = vsel %vm4174, %v4976, %v4685
      %v4997 = vsel %vm4174, %v4977, %v4687
      %v4998 = vsel %vm4174, %v4978, %v4689
      %v4999 = vsel %vm4174, %v4979, %v4691
      %v5000 = vsel %vm4174, %v4980, %v4693
      %v5001 = vsel %vm4174, %v4981, %v4695
      %v5002 = vsel %vm4195, %v4982, %v4719
      %v5003 = vsel %vm4195, %v4983, %v4721
      %v5004 = vsel %vm4195, %v4984, %v4723
      %v5005 = vsel %vm4195, %v4985, %v4725
      %v5006 = vsel %vm4195, %v4986, %v4727
      %v5007 = vsel %vm4195, %v4987, %v4729
      %v5008 = vsel %vm4195, %v4988, %v4731
      %v5009 = vsel %vm4195, %v4989, %v4733
      %v5010 = vsel %vm4195, %v4990, %v4735
      %v5011 = vsel %vm4195, %v4991, %v4737
      %v5012 = vsel %vm4195, %v4992, %v4739
      %v5013 = vsel %vm4195, %v4993, %v4741
      %v5014 = vsel %vm4195, %v4994, %v4743
      %v5015 = vsel %vm4195, %v4995, %v4745
      %v5016 = vsel %vm4195, %v4996, %v4747
      %v5017 = vsel %vm4195, %v4997, %v4749
      %v5018 = vsel %vm4195, %v4998, %v4751
      %v5019 = vsel %vm4195, %v4999, %v4753
      %v5020 = vsel %vm4195, %v5000, %v4755
      %v5021 = vsel %vm4195, %v5001, %v4757
      %v5022 = vsel %vm4216, %v5002, %v4781
      %v5023 = vsel %vm4216, %v5003, %v4783
      %v5024 = vsel %vm4216, %v5004, %v4785
      %v5025 = vsel %vm4216, %v5005, %v4787
      %v5026 = vsel %vm4216, %v5006, %v4789
      %v5027 = vsel %vm4216, %v5007, %v4791
      %v5028 = vsel %vm4216, %v5008, %v4793
      %v5029 = vsel %vm4216, %v5009, %v4795
      %v5030 = vsel %vm4216, %v5010, %v4797
      %v5031 = vsel %vm4216, %v5011, %v4799
      %v5032 = vsel %vm4216, %v5012, %v4801
      %v5033 = vsel %vm4216, %v5013, %v4803
      %v5034 = vsel %vm4216, %v5014, %v4805
      %v5035 = vsel %vm4216, %v5015, %v4807
      %v5036 = vsel %vm4216, %v5016, %v4809
      %v5037 = vsel %vm4216, %v5017, %v4811
      %v5038 = vsel %vm4216, %v5018, %v4813
      %v5039 = vsel %vm4216, %v5019, %v4815
      %v5040 = vsel %vm4216, %v5020, %v4817
      %v5041 = vsel %vm4216, %v5021, %v4819
      %v5042 = vsel %vm4237, %v5022, %v4843
      %v5043 = vsel %vm4237, %v5023, %v4845
      %v5044 = vsel %vm4237, %v5024, %v4847
      %v5045 = vsel %vm4237, %v5025, %v4849
      %v5046 = vsel %vm4237, %v5026, %v4851
      %v5047 = vsel %vm4237, %v5027, %v4853
      %v5048 = vsel %vm4237, %v5028, %v4855
      %v5049 = vsel %vm4237, %v5029, %v4857
      %v5050 = vsel %vm4237, %v5030, %v4859
      %v5051 = vsel %vm4237, %v5031, %v4861
      %v5052 = vsel %vm4237, %v5032, %v4863
      %v5053 = vsel %vm4237, %v5033, %v4865
      %v5054 = vsel %vm4237, %v5034, %v4867
      %v5055 = vsel %vm4237, %v5035, %v4869
      %v5056 = vsel %vm4237, %v5036, %v4871
      %v5057 = vsel %vm4237, %v5037, %v4873
      %v5058 = vsel %vm4237, %v5038, %v4875
      %v5059 = vsel %vm4237, %v5039, %v4877
      %v5060 = vsel %vm4237, %v5040, %v4879
      %v5061 = vsel %vm4237, %v5041, %v4881
      %5082 = vrot.lane.b32.xlu0 %v5042, 96
      %v5083 = vpop.permute.xlu0 %5082
      %5084 = vrot.lane.b32.xlu0 %v5043, 96
      %v5085 = vpop.permute.xlu0 %5084
      %5086 = vrot.lane.b32.xlu0 %v5044, 96
      %v5087 = vpop.permute.xlu0 %5086
      %5088 = vrot.lane.b32.xlu0 %v5045, 96
      %v5089 = vpop.permute.xlu0 %5088
      %5090 = vrot.lane.b32.xlu0 %v5046, 96
      %v5091 = vpop.permute.xlu0 %5090
      %5092 = vrot.lane.b32.xlu0 %v5047, 96
      %v5093 = vpop.permute.xlu0 %5092
      %5094 = vrot.lane.b32.xlu0 %v5048, 96
      %v5095 = vpop.permute.xlu0 %5094
      %5096 = vrot.lane.b32.xlu0 %v5049, 96
      %v5097 = vpop.permute.xlu0 %5096
      %5098 = vrot.lane.b32.xlu0 %v5050, 96
      %v5099 = vpop.permute.xlu0 %5098
      %5100 = vrot.lane.b32.xlu0 %v5051, 96
      %v5101 = vpop.permute.xlu0 %5100
      %5102 = vrot.lane.b32.xlu0 %v5052, 96
      %v5103 = vpop.permute.xlu0 %5102
      %5104 = vrot.lane.b32.xlu0 %v5053, 96
      %v5105 = vpop.permute.xlu0 %5104
      %5106 = vrot.lane.b32.xlu0 %v5054, 96
      %v5107 = vpop.permute.xlu0 %5106
      %5108 = vrot.lane.b32.xlu0 %v5055, 96
      %v5109 = vpop.permute.xlu0 %5108
      %5110 = vrot.lane.b32.xlu0 %v5056, 96
      %v5111 = vpop.permute.xlu0 %5110
      %5112 = vrot.lane.b32.xlu0 %v5057, 96
      %v5113 = vpop.permute.xlu0 %5112
      %5114 = vrot.lane.b32.xlu0 %v5058, 96
      %v5115 = vpop.permute.xlu0 %5114
      %5116 = vrot.lane.b32.xlu0 %v5059, 96
      %v5117 = vpop.permute.xlu0 %5116
      %5118 = vrot.lane.b32.xlu0 %v5060, 96
      %v5119 = vpop.permute.xlu0 %5118
      %5120 = vrot.lane.b32.xlu0 %v5061, 96
      %v5121 = vpop.permute.xlu0 %5120
      %v5142 = vsel %vm404, %v4384, %v5083
      %v5143 = vsel %vm404, %v4385, %v5085
      %v5144 = vsel %vm404, %v4386, %v5087
      %v5145 = vsel %vm404, %v4387, %v5089
      %v5146 = vsel %vm404, %v4388, %v5091
      %v5147 = vsel %vm404, %v4389, %v5093
      %v5148 = vsel %vm404, %v4390, %v5095
      %v5149 = vsel %vm404, %v4391, %v5097
      %v5150 = vsel %vm404, %v4392, %v5099
      %v5151 = vsel %vm404, %v4393, %v5101
      %v5152 = vsel %vm404, %v4394, %v5103
      %v5153 = vsel %vm404, %v4395, %v5105
      %v5154 = vsel %vm404, %v4396, %v5107
      %v5155 = vsel %vm404, %v4397, %v5109
      %v5156 = vsel %vm404, %v4398, %v5111
      %v5157 = vsel %vm404, %v4399, %v5113
      %v5158 = vsel %vm404, %v4400, %v5115
      %v5159 = vsel %vm404, %v4401, %v5117
      %v5160 = vsel %vm404, %v4402, %v5119
      %v5161 = vsel %vm404, %v4403, %v5121
      %v5162 = vld [vmem:[%s3] sm:$0xff]
      %v5163 = vld [vmem:[%s3 + $0x8] sm:$0xff]
      %v5164 = vld [vmem:[%s3 + $0x10] sm:$0xff]
      %v5165 = vld [vmem:[%s3 + $0x18] sm:$0xff]
      %v5166 = vld [vmem:[%s3 + $0x20] sm:$0xff]
      %v5167 = vld [vmem:[%s3 + $0x28] sm:$0xff]
      %v5168 = vld [vmem:[%s3 + $0x30] sm:$0xff]
      %v5169 = vld [vmem:[%s3 + $0x38] sm:$0xff]
      %v5170 = vld [vmem:[%s3 + $0x40] sm:$0xff]
      %v5171 = vld [vmem:[%s3 + $0x48] sm:$0xff]
      %v5172 = vld [vmem:[%s3 + $0x50] sm:$0xff]
      %v5173 = vld [vmem:[%s3 + $0x58] sm:$0xff]
      %v5174 = vld [vmem:[%s3 + $0x60] sm:$0xff]
      %v5175 = vld [vmem:[%s3 + $0x68] sm:$0xff]
      %v5176 = vld [vmem:[%s3 + $0x70] sm:$0xff]
      %v5177 = vld [vmem:[%s3 + $0x78] sm:$0xff]
      %v5178 = vld [vmem:[%s3 + $0x80] sm:$0xff]
      %v5179 = vld [vmem:[%s3 + $0x88] sm:$0xff]
      %v5180 = vld [vmem:[%s3 + $0x90] sm:$0x3f]
      %v5181 = vld [vmem:[%s4] sm:$0x1]
      %v5183 = vlaneseq
      %v5184 = vshrl.u32 %v5183, 7
      %v5185 = vsub.s32 0, %v5184
      %v5186 = vrot.slane %v5181, %v5185
      %vm5188 = vcmask 179200
      %v5189 = vsel %vm5188, %v5083, 0
      %v5191 = vsel %vm5188, %v5085, 0
      %v5193 = vsel %vm5188, %v5087, 0
      %v5195 = vsel %vm5188, %v5089, 0
      %v5197 = vsel %vm5188, %v5091, 0
      %v5199 = vsel %vm5188, %v5093, 0
      %v5201 = vsel %vm5188, %v5095, 0
      %v5203 = vsel %vm5188, %v5097, 0
      %v5205 = vsel %vm5188, %v5099, 0
      %v5207 = vsel %vm5188, %v5101, 0
      %v5209 = vsel %vm5188, %v5103, 0
      %v5211 = vsel %vm5188, %v5105, 0
      %v5213 = vsel %vm5188, %v5107, 0
      %v5215 = vsel %vm5188, %v5109, 0
      %v5217 = vsel %vm5188, %v5111, 0
      %v5219 = vsel %vm5188, %v5113, 0
      %v5221 = vsel %vm5188, %v5115, 0
      %v5223 = vsel %vm5188, %v5117, 0
      %v5225 = vsel %vm5188, %v5119, 0
      %v5227 = vsel %vm5188, %v5121, 0
      %v5230 = vsel %vm769, %v5180, 0
      %5232 = vmatprep.subr.mxu0 0.0
      %5233 = vmatpush1.msra.mxu0 %v5162
      %5234 = vmatprep.subr.mxu0 0.0
      %5235 = vmatpush1.msra.mxu0 %v5163
      %5236 = vmatprep.subr.mxu0 0.0
      %5237 = vmatpush1.msra.mxu0 %v5164
      %5238 = vmatprep.subr.mxu0 0.0
      %5239 = vmatpush1.msra.mxu0 %v5165
      %5240 = vmatprep.subr.mxu0 0.0
      %5241 = vmatpush1.msra.mxu0 %v5166
      %5242 = vmatprep.subr.mxu0 0.0
      %5243 = vmatpush1.msra.mxu0 %v5167
      %5244 = vmatprep.subr.mxu0 0.0
      %5245 = vmatpush1.msra.mxu0 %v5168
      %5246 = vmatprep.subr.mxu0 0.0
      %5247 = vmatpush1.msra.mxu0 %v5169
      %5248 = vmatprep.subr.mxu0 0.0
      %5249 = vmatpush1.msra.mxu0 %v5170
      %5250 = vmatprep.subr.mxu0 0.0
      %5251 = vmatpush1.msra.mxu0 %v5171
      %5252 = vmatprep.subr.mxu0 0.0
      %5253 = vmatpush1.msra.mxu0 %v5172
      %5254 = vmatprep.subr.mxu0 0.0
      %5255 = vmatpush1.msra.mxu0 %v5173
      %5256 = vmatprep.subr.mxu0 0.0
      %5257 = vmatpush1.msra.mxu0 %v5174
      %5258 = vmatprep.subr.mxu0 0.0
      %5259 = vmatpush1.msra.mxu0 %v5175
      %5260 = vmatprep.subr.mxu0 0.0
      %5261 = vmatpush1.msra.mxu0 %v5176
      %5262 = vmatprep.subr.mxu0 0.0
      %5263 = vmatpush1.msra.mxu0 %v5177
      %5264 = vmatprep.subr.mxu0 0.0
      %5265 = vmatpush1.msra.mxu0 %v5178
      %5266 = vmatprep.subr.mxu0 0.0
      %5267 = vmatpush1.msra.mxu0 %v5179
      %5268 = vmatprep.subr.mxu0 0.0
      %5269 = vmatpush1.msra.mxu0 %v5230
      %5270 = vmatprep.subr.mxu0 0.0
      %5271 = vmatpush1.msra.mxu0 0.0
      %5272 = vmatprep.subr.mxu0 0.0
      %5273 = vmatpush1.msra.mxu0 0.0
      %5274 = vmatprep.subr.mxu0 0.0
      %5275 = vmatpush1.msra.mxu0 0.0
      %5276 = vmatprep.subr.mxu0 0.0
      %5277 = vmatpush1.msra.mxu0 0.0
      %5278 = vmatprep.subr.mxu0 0.0
      %5279 = vmatpush1.msra.mxu0 0.0
      %5280 = vmatprep.subr.mxu0 0.0
      %5281 = vmatpush1.msra.mxu0 0.0
      %5282 = vmatprep.subr.mxu0 0.0
      %5283 = vmatpush1.msra.mxu0 0.0
      %5284 = vmatprep.subr.mxu0 0.0
      %5285 = vmatpush1.msra.mxu0 0.0
      %5286 = vmatprep.subr.mxu0 0.0
      %5287 = vmatpush1.msra.mxu0 0.0
      %5288 = vmatprep.subr.mxu0 0.0
      %5289 = vmatpush1.msra.mxu0 0.0
      %5290 = vmatprep.subr.mxu0 0.0
      %5291 = vmatpush1.msra.mxu0 0.0
      %5292 = vmatprep.subr.mxu0 0.0
      %5293 = vmatpush1.msra.mxu0 0.0
      %5294 = vmatprep.subr.mxu0 0.0
      %5295 = vmatpush1.msra.mxu0 0.0
      %5296 = vmatprep.mubr.f32.mxu0 %v5189
      %5297 = vmatmul.mubr.f32.gmra.mrb[0].mxu0 %v5142
      %v5298 = vpop.f32.mrb[0].mxu0
      %v5299 = vadd.f32 %v5186, %v5298
      %v5300 = vpop.f32.mrb[0].mxu0
      %5301 = vmatprep.mubr.f32.mxu0 %v5191
      %5302 = vmatmul.mubr.f32.gmra.mrb[0].mxu0 %v5143
      %v5303 = vpop.f32.mrb[0].mxu0
      %v5304 = vadd.f32 %v5186, %v5303
      %v5305 = vpop.f32.mrb[0].mxu0
      %5306 = vmatprep.mubr.f32.mxu0 %v5193
      %5307 = vmatmul.mubr.f32.gmra.mrb[0].mxu0 %v5144
      %v5308 = vpop.f32.mrb[0].mxu0
      %v5309 = vadd.f32 %v5186, %v5308
      %v5310 = vpop.f32.mrb[0].mxu0
      %5311 = vmatprep.mubr.f32.mxu0 %v5195
      %5312 = vmatmul.mubr.f32.gmra.mrb[0].mxu0 %v5145
      %v5313 = vpop.f32.mrb[0].mxu0
      %v5314 = vadd.f32 %v5186, %v5313
      %v5315 = vpop.f32.mrb[0].mxu0
      %5316 = vmatprep.mubr.f32.mxu0 %v5197
      %5317 = vmatmul.mubr.f32.gmra.mrb[0].mxu0 %v5146
      %v5318 = vpop.f32.mrb[0].mxu0
      %v5319 = vadd.f32 %v5186, %v5318
      %v5320 = vpop.f32.mrb[0].mxu0
      %5321 = vmatprep.mubr.f32.mxu0 %v5199
      %5322 = vmatmul.mubr.f32.gmra.mrb[0].mxu0 %v5147
      %v5323 = vpop.f32.mrb[0].mxu0
      %v5324 = vadd.f32 %v5186, %v5323
      %v5325 = vpop.f32.mrb[0].mxu0
      %5326 = vmatprep.mubr.f32.mxu0 %v5201
      %5327 = vmatmul.mubr.f32.gmra.mrb[0].mxu0 %v5148
      %v5328 = vpop.f32.mrb[0].mxu0
      %v5329 = vadd.f32 %v5186, %v5328
      %v5330 = vpop.f32.mrb[0].mxu0
      %5331 = vmatprep.mubr.f32.mxu0 %v5203
      %5332 = vmatmul.mubr.f32.gmra.mrb[0].mxu0 %v5149
      %v5333 = vpop.f32.mrb[0].mxu0
      %v5334 = vadd.f32 %v5186, %v5333
      %v5335 = vpop.f32.mrb[0].mxu0
      %5336 = vmatprep.mubr.f32.mxu0 %v5205
      %5337 = vmatmul.mubr.f32.gmra.mrb[0].mxu0 %v5150
      %v5338 = vpop.f32.mrb[0].mxu0
      %v5339 = vadd.f32 %v5186, %v5338
      %v5340 = vpop.f32.mrb[0].mxu0
      %5341 = vmatprep.mubr.f32.mxu0 %v5207
      %5342 = vmatmul.mubr.f32.gmra.mrb[0].mxu0 %v5151
      %v5343 = vpop.f32.mrb[0].mxu0
      %v5344 = vadd.f32 %v5186, %v5343
      %v5345 = vpop.f32.mrb[0].mxu0
      %5346 = vmatprep.mubr.f32.mxu0 %v5209
      %5347 = vmatmul.mubr.f32.gmra.mrb[0].mxu0 %v5152
      %v5348 = vpop.f32.mrb[0].mxu0
      %v5349 = vadd.f32 %v5186, %v5348
      %v5350 = vpop.f32.mrb[0].mxu0
      %5351 = vmatprep.mubr.f32.mxu0 %v5211
      %5352 = vmatmul.mubr.f32.gmra.mrb[0].mxu0 %v5153
      %v5353 = vpop.f32.mrb[0].mxu0
      %v5354 = vadd.f32 %v5186, %v5353
      %v5355 = vpop.f32.mrb[0].mxu0
      %5356 = vmatprep.mubr.f32.mxu0 %v5213
      %5357 = vmatmul.mubr.f32.gmra.mrb[0].mxu0 %v5154
      %v5358 = vpop.f32.mrb[0].mxu0
      %v5359 = vadd.f32 %v5186, %v5358
      %v5360 = vpop.f32.mrb[0].mxu0
      %5361 = vmatprep.mubr.f32.mxu0 %v5215
      %5362 = vmatmul.mubr.f32.gmra.mrb[0].mxu0 %v5155
      %v5363 = vpop.f32.mrb[0].mxu0
      %v5364 = vadd.f32 %v5186, %v5363
      %v5365 = vpop.f32.mrb[0].mxu0
      %5366 = vmatprep.mubr.f32.mxu0 %v5217
      %5367 = vmatmul.mubr.f32.gmra.mrb[0].mxu0 %v5156
      %v5368 = vpop.f32.mrb[0].mxu0
      %v5369 = vadd.f32 %v5186, %v5368
      %v5370 = vpop.f32.mrb[0].mxu0
      %5371 = vmatprep.mubr.f32.mxu0 %v5219
      %5372 = vmatmul.mubr.f32.gmra.mrb[0].mxu0 %v5157
      %v5373 = vpop.f32.mrb[0].mxu0
      %v5374 = vadd.f32 %v5186, %v5373
      %v5375 = vpop.f32.mrb[0].mxu0
      %5376 = vmatprep.mubr.f32.mxu0 %v5221
      %5377 = vmatmul.mubr.f32.gmra.mrb[0].mxu0 %v5158
      %v5378 = vpop.f32.mrb[0].mxu0
      %v5379 = vadd.f32 %v5186, %v5378
      %v5380 = vpop.f32.mrb[0].mxu0
      %5381 = vmatprep.mubr.f32.mxu0 %v5223
      %5382 = vmatmul.mubr.f32.gmra.mrb[0].mxu0 %v5159
      %v5383 = vpop.f32.mrb[0].mxu0
      %v5384 = vadd.f32 %v5186, %v5383
      %v5385 = vpop.f32.mrb[0].mxu0
      %5386 = vmatprep.mubr.f32.mxu0 %v5225
      %5387 = vmatmul.mubr.f32.gmra.mrb[0].mxu0 %v5160
      %v5388 = vpop.f32.mrb[0].mxu0
      %v5389 = vadd.f32 %v5186, %v5388
      %v5390 = vpop.f32.mrb[0].mxu0
      %5391 = vmatprep.mubr.f32.mxu0 %v5227
      %5392 = vmatmul.mubr.f32.gmra.mrb[0].mxu0 %v5161
      %v5393 = vpop.f32.mrb[0].mxu0
      %v5394 = vadd.f32 %v5186, %v5393
      %v5395 = vpop.f32.mrb[0].mxu0
      %5396 = vdwg.mxu0
      %v5397 = vtanh.pop %v5299
      %v5398 = vtanh.pop %v5304
      %v5399 = vtanh.pop %v5309
      %v5400 = vtanh.pop %v5314
      %v5401 = vtanh.pop %v5319
      %v5402 = vtanh.pop %v5324
      %v5403 = vtanh.pop %v5329
      %v5404 = vtanh.pop %v5334
      %v5405 = vtanh.pop %v5339
      %v5406 = vtanh.pop %v5344
      %v5407 = vtanh.pop %v5349
      %v5408 = vtanh.pop %v5354
      %v5409 = vtanh.pop %v5359
      %v5410 = vtanh.pop %v5364
      %v5411 = vtanh.pop %v5369
      %v5412 = vtanh.pop %v5374
      %v5413 = vtanh.pop %v5379
      %v5414 = vtanh.pop %v5384
      %v5415 = vtanh.pop %v5389
      %v5416 = vtanh.pop %v5394
      %vm5417 = vcmask 130048
      %5418 = vst.msk [vmem:[#allocation4] sm:$0xff] %vm5417, %v5397
      %5419 = vst.msk [vmem:[#allocation4 + $0x8] sm:$0xff] %vm5417, %v5398
      %5420 = vst.msk [vmem:[#allocation4 + $0x10] sm:$0xff] %vm5417, %v5399
      %5421 = vst.msk [vmem:[#allocation4 + $0x18] sm:$0xff] %vm5417, %v5400
      %5422 = vst.msk [vmem:[#allocation4 + $0x20] sm:$0xff] %vm5417, %v5401
      %5423 = vst.msk [vmem:[#allocation4 + $0x28] sm:$0xff] %vm5417, %v5402
      %5424 = vst.msk [vmem:[#allocation4 + $0x30] sm:$0xff] %vm5417, %v5403
      %5425 = vst.msk [vmem:[#allocation4 + $0x38] sm:$0xff] %vm5417, %v5404
      %5426 = vst.msk [vmem:[#allocation4 + $0x40] sm:$0xff] %vm5417, %v5405
      %5427 = vst.msk [vmem:[#allocation4 + $0x48] sm:$0xff] %vm5417, %v5406
      %5428 = vst.msk [vmem:[#allocation4 + $0x50] sm:$0xff] %vm5417, %v5407
      %5429 = vst.msk [vmem:[#allocation4 + $0x58] sm:$0xff] %vm5417, %v5408
      %5430 = vst.msk [vmem:[#allocation4 + $0x60] sm:$0xff] %vm5417, %v5409
      %5431 = vst.msk [vmem:[#allocation4 + $0x68] sm:$0xff] %vm5417, %v5410
      %5432 = vst.msk [vmem:[#allocation4 + $0x70] sm:$0xff] %vm5417, %v5411
      %5433 = vst.msk [vmem:[#allocation4 + $0x78] sm:$0xff] %vm5417, %v5412
      %5434 = vst.msk [vmem:[#allocation4 + $0x80] sm:$0xff] %vm5417, %v5413
      %5435 = vst.msk [vmem:[#allocation4 + $0x88] sm:$0xff] %vm5417, %v5414
      %5436 = vst.msk [vmem:[#allocation4 + $0x90] sm:$0xff] %vm5417, %v5415
      %5437 = vst.msk [vmem:[#allocation4 + $0x98] sm:$0xff] %vm5417, %v5416
      %v5438 = vld [vmem:[#allocation4] ss:$2 sm:$0x1f]
      %s5439 = scalar_lea.vmem [#allocation4], 1
      %v5440 = vld [vmem:[%s5439] ss:$2 sm:$0x1f]
      %s5441 = scalar_lea.vmem [#allocation4], 16
      %v5442 = vld [vmem:[%s5441] ss:$2 sm:$0x1f]
      %s5443 = scalar_lea.vmem [#allocation4], 17
      %v5444 = vld [vmem:[%s5443] ss:$2 sm:$0x1f]
      %v5445 = vmax.f32 %v5438, %v5440
      %v5446 = vmax.f32 %v5442, %v5444
      %v5447 = vmax.f32 %v5445, %v5446
      %vm5448 = vcmask 126976
      %5449 = vst.msk [vmem:[%s221] sm:$0x1f] %vm5448, %v5447
      %s5450 = scalar_lea.vmem [#allocation4], 32
      %v5451 = vld [vmem:[%s5450] ss:$2 sm:$0x1f]
      %s5452 = scalar_lea.vmem [#allocation4], 33
      %v5453 = vld [vmem:[%s5452] ss:$2 sm:$0x1f]
      %s5454 = scalar_lea.vmem [#allocation4], 48
      %v5455 = vld [vmem:[%s5454] ss:$2 sm:$0x1f]
      %s5456 = scalar_lea.vmem [#allocation4], 49
      %v5457 = vld [vmem:[%s5456] ss:$2 sm:$0x1f]
      %v5458 = vmax.f32 %v5451, %v5453
      %v5459 = vmax.f32 %v5455, %v5457
      %v5460 = vmax.f32 %v5458, %v5459
      %5461 = vst.msk [vmem:[%s221 + $0x5] sm:$0x1f] %vm5448, %v5460
      %s5462 = scalar_lea.vmem [#allocation4], 64
      %v5463 = vld [vmem:[%s5462] ss:$2 sm:$0x1f]
      %s5464 = scalar_lea.vmem [#allocation4], 65
      %v5465 = vld [vmem:[%s5464] ss:$2 sm:$0x1f]
      %s5466 = scalar_lea.vmem [#allocation4], 80
      %v5467 = vld [vmem:[%s5466] ss:$2 sm:$0x1f]
      %s5468 = scalar_lea.vmem [#allocation4], 81
      %v5469 = vld [vmem:[%s5468] ss:$2 sm:$0x1f]
      %v5470 = vmax.f32 %v5463, %v5465
      %v5471 = vmax.f32 %v5467, %v5469
      %v5472 = vmax.f32 %v5470, %v5471
      %5473 = vst.msk [vmem:[%s221 + $0xa] sm:$0x1f] %vm5448, %v5472
      %s5474 = scalar_lea.vmem [#allocation4], 96
      %v5475 = vld [vmem:[%s5474] ss:$2 sm:$0x1f]
      %s5476 = scalar_lea.vmem [#allocation4], 97
      %v5477 = vld [vmem:[%s5476] ss:$2 sm:$0x1f]
      %s5478 = scalar_lea.vmem [#allocation4], 112
      %v5479 = vld [vmem:[%s5478] ss:$2 sm:$0x1f]
      %s5480 = scalar_lea.vmem [#allocation4], 113
      %v5481 = vld [vmem:[%s5480] ss:$2 sm:$0x1f]
      %v5482 = vmax.f32 %v5475, %v5477
      %v5483 = vmax.f32 %v5479, %v5481
      %v5484 = vmax.f32 %v5482, %v5483
      %5485 = vst.msk [vmem:[%s221 + $0xf] sm:$0x1f] %vm5448, %v5484
      %s5486 = scalar_lea.vmem [#allocation4], 128
      %v5487 = vld [vmem:[%s5486] ss:$2 sm:$0x1f]
      %s5488 = scalar_lea.vmem [#allocation4], 129
      %v5489 = vld [vmem:[%s5488] ss:$2 sm:$0x1f]
      %s5490 = scalar_lea.vmem [#allocation4], 144
      %v5491 = vld [vmem:[%s5490] ss:$2 sm:$0x1f]
      %s5492 = scalar_lea.vmem [#allocation4], 145
      %v5493 = vld [vmem:[%s5492] ss:$2 sm:$0x1f]
      %v5494 = vmax.f32 %v5487, %v5489
      %v5495 = vmax.f32 %v5491, %v5493
      %v5496 = vmax.f32 %v5494, %v5495
      %5497 = vst.msk [vmem:[%s221 + $0x14] sm:$0x1f] %vm5448, %v5496
      %p5498 = scmp.lt.s32.totalorder %s16, 1
      %s5499 = scalar_select %p5498, %s16, 1
      %s5500 = smul.addr %s5499, 4
      %s5501 = smul.addr %s5500, 8
      %s5502 = scalar_lea.vmem %s5, %s5501
      // Predicated region
      $region41: #{lenet5_forward.2} parent=39 // pred_check
        %p5503 = pneg %p144
      $region42: #{lenet5_forward.2} parent=39 // pred_check_branch
        %5505 = sbr.rel (%p5503) target = $region44
      $region43: #{lenet5_forward.2} parent=39 // pred_region
        _
      $region44: #{lenet5_forward.2} parent=39 // pred_fallthru
        _
    $region40: #{lenet5_forward.2} parent=5 // pred_fallthru
      _
    %p5506 = scmp.le.s32.totalorder 2, %s11
    // Predicated region
    $region45: #{lenet5_forward.2} parent=5 // pred_check
      %p5507 = pneg %p5506
    $region46: #{lenet5_forward.2} parent=5 // pred_check_branch
      %5509 = sbr.rel (%p5507) target = $region48
    $region47: #{lenet5_forward.2} parent=5 // pred_region
      %s5510 = ssub.s32 %s11, 2
      // Predicated region
      $region49: #{lenet5_forward.2} parent=47 // pred_check
        %p5511 = pneg %p150
      $region50: #{lenet5_forward.2} parent=47 // pred_check_branch
        %5513 = sbr.rel (%p5511) target = $region52
      $region51: #{lenet5_forward.2} parent=47 // pred_region
        %p5514 = scmp.lt.s32.totalorder %s17, 1
        %s5515 = scalar_select %p5514, %s17, 1
        %s5516 = smul.addr %s5515, 4
        %s5517 = smul.addr %s5516, 8
        %s5518 = scalar_lea.vmem %s5, %s5517
      $region52: #{lenet5_forward.2} parent=47 // pred_fallthru
        _
    $region48: #{lenet5_forward.2} parent=5 // pred_fallthru
      _
  $region6: #{lenet5_forward.2} parent=0 // loop_footer
    %s15 = sadd.s32 1, %s11
  $region7: #{lenet5_forward.2} parent=0 // loop_footer_branch
    %10 = sbr.rel target = $region3
  $region8: #{lenet5_forward.2} parent=0 // loop_exit
    _

</llo_original>
